<compile_context>
chip_gen: v5e
topology: v5e:2x2
jax: 0.10.0
libtpu: 0.0.40
codegen_flags: <defaults>
</compile_context>

<pallas_src>
import math

import jax
import jax.numpy as jnp
from jax.experimental import pallas as pl
from jax.experimental.pallas import tpu as pltpu


_PALLAS_MIN_ELEMENTS = 64 * 1024   # below this, XLA's fused broadcast add wins

_GEN_PARAMS_CACHE = None


def _gen_params():
    """(target_tile_bytes, vmem_limit_bytes) picked per TPU generation."""
    global _GEN_PARAMS_CACHE
    if _GEN_PARAMS_CACHE is not None:
        return _GEN_PARAMS_CACHE
    try:
        vmem_cap = int(pltpu.get_tpu_info().vmem_capacity_bytes)
    except Exception:
        vmem_cap = None
    if vmem_cap is None:
        # Unknown generation: conservative numbers, legal everywhere
        # (2x(in+out) double-buffered 4 MiB tiles = 16 MiB < 32 MiB budget).
        params = (4 * 1024 * 1024, 32 * 1024 * 1024)
    elif vmem_cap <= 64 * 1024 * 1024:
        # v7x-class: 64 MiB physical VMEM.  6 MiB tiles, 48 MiB budget
        # (4 x 6 MiB double-buffered in+out stays well under it).
        params = (6 * 1024 * 1024, 48 * 1024 * 1024)
    else:
        # v5e / v6e: 128 MiB physical VMEM -> 8 MiB tiles, 64 MiB budget.
        params = (8 * 1024 * 1024, 64 * 1024 * 1024)
    _GEN_PARAMS_CACHE = params
    return params


def _add_bias_kernel(x_ref, b_ref, o_ref):
    # Single VPU broadcast add; the kernel is purely HBM-bandwidth bound, so
    # all the work is in layout / tiling, not compute.
    o_ref[...] = x_ref[...] + b_ref[...]


def _pick_tiles(M, N, itemsize, tile_bytes):
    """Pick (tm, tn) row/column tile sizes.

    * tn == N (full width) unless even 32 rows of full width blow the tile
      budget; then the lane axis is tiled in 128-multiples (bounds VMEM for
      very wide/short inputs and restores multi-step pipelining).
    * tm is a multiple of 32 (keeps bf16/int8 packed sublane groups whole) or
      the full row count (always a legal full-extent block).
    """
    max_elems = max(32 * 128, tile_bytes // max(1, itemsize))
    if N * 32 <= max_elems:
        tn = N
    else:
        tn = max(128, ((max_elems // 32) // 128) * 128)
    tm = max(32, (max_elems // tn) // 32 * 32)
    if tm >= M:
        tm = M
    return tm, tn


def _add_bias_2d(x2d, bias2d, *, bias_is_row):
    """x2d: (M, N); bias2d: (1, N) row bias or (M, 1) per-row column bias.

    `bias_is_row` is explicit because shape inference is ambiguous when M == 1
    (e.g. a 4D input with B*C == 1 gives a (1, 1) bias column)."""
    M, N = x2d.shape
    itemsize = x2d.dtype.itemsize
    tile_bytes, vmem_limit = _gen_params()
    tm, tn = _pick_tiles(M, N, itemsize, tile_bytes)
    grid = (pl.cdiv(M, tm), pl.cdiv(N, tn))

    if bias_is_row:
        # Bias row tiled along the lane axis only; VMEM-resident across row
        # tiles.
        b_spec = pl.BlockSpec((1, tn), lambda i, j: (0, j))
    else:
        # Per-row bias column, tiled in lockstep with the x row tiles.
        b_spec = pl.BlockSpec((tm, 1), lambda i, j: (i, 0))

    cost = pl.CostEstimate(
        flops=M * N,
        transcendentals=0,
        bytes_accessed=2 * M * N * itemsize + bias2d.size * itemsize,
    )

    return pl.pallas_call(
        _add_bias_kernel,
        out_shape=jax.ShapeDtypeStruct((M, N), x2d.dtype),
        grid=grid,
        in_specs=[pl.BlockSpec((tm, tn), lambda i, j: (i, j)), b_spec],
        out_specs=pl.BlockSpec((tm, tn), lambda i, j: (i, j)),
        compiler_params=pltpu.CompilerParams(
            # Both grid axes are independent -> megacore sharding on v7x,
            # harmless on single-TC v5e/v6e.
            dimension_semantics=("parallel", "parallel"),
            vmem_limit_bytes=vmem_limit,
        ),
        cost_estimate=cost,
    )(x2d, bias2d)


class AddBias:
    """JAX/Pallas port of the PyTorch AddBias module."""

    def __init__(self, bias):
        # nn.Parameter(bias.unsqueeze(1)) -> stored as (C, 1)
        self._bias = jnp.asarray(bias).reshape(-1, 1)
        # Memoized bias layout plumbing: tiny arrays, but each would otherwise
        # be a separate un-fused dispatch on every forward.
        self._cache = {}

    # ---- cached bias layouts (depend only on the parameter + static info) ---
    def _bias_cast(self, dtype):
        key = ("cast", jnp.dtype(dtype).name)
        if key not in self._cache:
            self._cache[key] = self._bias.astype(dtype)                # (C, 1)
        return self._cache[key]

    def _bias_row(self, dtype):
        key = ("row", jnp.dtype(dtype).name)
        if key not in self._cache:
            self._cache[key] = self._bias_cast(dtype).reshape(1, -1)   # (1, C)
        return self._cache[key]

    def _bias_row_widened(self, k, dtype):
        key = ("rowk", k, jnp.dtype(dtype).name)
        if key not in self._cache:
            self._cache[key] = jnp.tile(self._bias_row(dtype), (1, k))  # (1, k*C)
        return self._cache[key]

    def _bias_col(self, batch, dtype):
        key = ("col", batch, jnp.dtype(dtype).name)
        if key not in self._cache:
            c = self._bias.shape[0]
            self._cache[key] = jnp.tile(
                self._bias_cast(dtype).reshape(c), (batch,)
            ).reshape(batch * c, 1)                                     # (B*C, 1)
        return self._cache[key]

    def _bias_repeated_row(self, hw, dtype):
        key = ("rep", hw, jnp.dtype(dtype).name)
        if key not in self._cache:
            c = self._bias.shape[0]
            self._cache[key] = jnp.repeat(
                self._bias_cast(dtype).reshape(c), hw
            ).reshape(1, c * hw)                                        # (1, C*HW)
        return self._cache[key]

    # ---- forward ------------------------------------------------------------
    def __call__(self, x):
        if x.ndim == 2:
            return self._forward_2d(x)
        elif x.ndim == 4:
            return self._forward_4d(x)
        else:
            raise ValueError(f"unsupported ndim {x.ndim}")

    def _forward_2d(self, x):
        M, C = x.shape
        bias_row = self._bias_row(x.dtype)                              # (1, C)
        if x.size < _PALLAS_MIN_ELEMENTS:
            # Tiny controller-sized input: launch overhead dominates; let XLA
            # fuse the broadcast add.
            return x + bias_row
        if C % 128 == 0:
            return _add_bias_2d(x, bias_row, bias_is_row=True)
        # Narrow C: widen (M, C) -> (M//k, k*C) with a k-tiled bias row so
        # stores are full-lane instead of masked vst.msk partial stores.
        k = 128 // math.gcd(C, 128)
        bulk_rows = (M // k) * k
        if bulk_rows == 0:
            return x + bias_row
        bias_row_k = self._bias_row_widened(k, x.dtype)                 # (1, k*C)
        if bulk_rows == M:
            y = _add_bias_2d(x.reshape(M // k, k * C), bias_row_k,
                             bias_is_row=True)
            return y.reshape(M, C)
        # M % k != 0: keep the bulk lane-dense through Pallas; handle the
        # small remainder with a plain fused XLA add.
        bulk = _add_bias_2d(
            x[:bulk_rows].reshape(bulk_rows // k, k * C),
            bias_row_k, bias_is_row=True,
        ).reshape(bulk_rows, C)
        tail = x[bulk_rows:] + bias_row
        return jnp.concatenate([bulk, tail], axis=0)

    def _forward_4d(self, x):
        B, C, H, W = x.shape
        hw = H * W
        if x.size < _PALLAS_MIN_ELEMENTS:
            return x + self._bias_cast(x.dtype).reshape(1, C, 1, 1)
        if hw % 128 == 0:
            # NCHW: free contiguous reshape keeps the long spatial axis on the
            # lane dim; per-channel bias becomes a per-row column.
            y = _add_bias_2d(x.reshape(B * C, hw),
                             self._bias_col(B, x.dtype), bias_is_row=False)
            return y.reshape(B, C, H, W)
        if (C * hw) % 128 == 0:
            # H*W not lane-aligned (7x7, 14x14, 28x28, 60x60, ...) but C*H*W
            # is: reshape to (B, C*H*W) with a repeated-bias row so stores stay
            # unmasked and the DMA unpadded.
            y = _add_bias_2d(x.reshape(B, C * hw),
                             self._bias_repeated_row(hw, x.dtype),
                             bias_is_row=True)
            return y.reshape(B, C, H, W)
        # Neither split is lane-aligned: correct fallback (masked stores only
        # on the padded lane tail).
        y = _add_bias_2d(x.reshape(B * C, hw),
                         self._bias_col(B, x.dtype), bias_is_row=False)
        return y.reshape(B, C, H, W)


if __name__ == "__main__":
    key = jax.random.PRNGKey(0)
    k_bias, k_x4, k_x2, k_x4b, k_x2b, k_x4c = jax.random.split(key, 6)

    # ---- small controller-sized shapes (XLA bypass path) --------------------
    C = 4
    bias = jax.random.normal(k_bias, (C,), dtype=jnp.float32)
    mod = AddBias(bias)

    x4 = jax.random.normal(k_x4, (2, C, 16, 16), dtype=jnp.float32)
    y4 = jax.block_until_ready(mod(x4))
    assert y4.shape == x4.shape and y4.dtype == x4.dtype
    assert jnp.allclose(y4, x4 + bias.reshape(1, C, 1, 1), atol=1e-6), "4D small mismatch"

    x2 = jax.random.normal(k_x2, (8, C), dtype=jnp.float32)
    y2 = jax.block_until_ready(mod(x2))
    assert y2.shape == x2.shape and y2.dtype == x2.dtype
    assert jnp.allclose(y2, x2 + bias.reshape(1, C), atol=1e-6), "2D small mismatch"

    # ---- 4D, H*W lane-aligned -> (B*C, H*W) per-row-column Pallas path ------
    C4 = 16
    bias4 = jax.random.normal(k_bias, (C4,), dtype=jnp.float32)
    mod4 = AddBias(bias4)
    x4b = jax.random.normal(k_x4b, (16, C4, 64, 64), dtype=jnp.float32)   # 16 MiB
    y4b = jax.block_until_ready(mod4(x4b))
    assert y4b.shape == x4b.shape and y4b.dtype == x4b.dtype
    assert jnp.allclose(y4b, x4b + bias4.reshape(1, C4, 1, 1), atol=1e-6), "4D pallas mismatch"

    # bf16 through the same path (tm multiple of 32 keeps packed rows whole)
    x4bf = x4b.astype(jnp.bfloat16)
    y4bf = jax.block_until_ready(mod4(x4bf))
    ref_bf = x4bf + bias4.astype(jnp.bfloat16).reshape(1, C4, 1, 1)
    assert y4bf.dtype == jnp.bfloat16
    assert jnp.allclose(y4bf.astype(jnp.float32), ref_bf.astype(jnp.float32),
                        atol=1e-2), "4D bf16 pallas mismatch"

    # ---- 4D, H*W NOT lane-aligned but C*H*W is -> repeated-row + column tiles
    C5 = 256
    bias5 = jax.random.normal(k_bias, (C5,), dtype=jnp.float32)
    mod5 = AddBias(bias5)
    x4c = jax.random.normal(k_x4c, (2, C5, 60, 60), dtype=jnp.float32)    # 7.4 MB
    y4c = jax.block_until_ready(mod5(x4c))
    assert y4c.shape == x4c.shape and y4c.dtype == x4c.dtype
    assert jnp.allclose(y4c, x4c + bias5.reshape(1, C5, 1, 1), atol=1e-6), "4D rep-row mismatch"

    # ---- large 2D with narrow C -> widened (M//k, k*C) Pallas path ----------
    C2 = 4
    bias2 = jax.random.normal(k_bias, (C2,), dtype=jnp.float32)
    mod2 = AddBias(bias2)
    x2b = jax.random.normal(k_x2b, (32768, C2), dtype=jnp.float32)
    y2b = jax.block_until_ready(mod2(x2b))
    assert y2b.shape == x2b.shape and y2b.dtype == x2b.dtype
    assert jnp.allclose(y2b, x2b + bias2.reshape(1, C2), atol=1e-6), "2D pallas mismatch"

    print("KERNEL_OK")
</pallas_src>

<mosaic_0001>
module attributes {stable_mosaic.version = 11 : i64} {
  func.func @_add_bias_kernel(%arg0: i32, %arg1: i32, %arg2: memref<256x4096xf32, #tpu.memory_space<vmem>>, %arg3: memref<256x1xf32, #tpu.memory_space<vmem>>, %arg4: memref<256x4096xf32, #tpu.memory_space<vmem>>) attributes {dimension_semantics = [#tpu.dimension_semantics<parallel>, #tpu.dimension_semantics<parallel>], iteration_bounds = array<i64: 1, 1>, scalar_prefetch = 0 : i64, scratch_operands = 0 : i64, tpu.core_type = #tpu.core_type<tc>, window_params = [{transform_indices = @transform_0, window_bounds = array<i64: 256, 4096>}, {transform_indices = @transform_1, window_bounds = array<i64: 256, 1>}, {transform_indices = @transform_2, window_bounds = array<i64: 256, 4096>}]} {
    %c0 = arith.constant 0 : index
    %c0_0 = arith.constant 0 : index
    %0 = vector.load %arg2[%c0, %c0_0] : memref<256x4096xf32, #tpu.memory_space<vmem>>, vector<256x4096xf32>
    %c0_1 = arith.constant 0 : index
    %c0_2 = arith.constant 0 : index
    %1 = vector.load %arg3[%c0_1, %c0_2] : memref<256x1xf32, #tpu.memory_space<vmem>>, vector<256x1xf32>
    %2 = vector.broadcast %1 : vector<256x1xf32> to vector<256x4096xf32>
    %3 = arith.addf %0, %2 : vector<256x4096xf32>
    %c0_3 = arith.constant 0 : index
    %c0_4 = arith.constant 0 : index
    %4 = vector.load %arg4[%c0_3, %c0_4] : memref<256x4096xf32, #tpu.memory_space<vmem>>, vector<256x4096xf32>
    tpu.vector_store %arg4[%c0_3, %c0_4], %3 {strides = array<i32>} : memref<256x4096xf32, #tpu.memory_space<vmem>>, vector<256x4096xf32>,
    return
  }
  func.func @transform_0(%arg0: i32, %arg1: i32) -> (i32, i32) {
    %c0_i32 = arith.constant 0 : i32
    return %arg0, %arg1 : i32, i32
  }
  func.func @transform_1(%arg0: i32, %arg1: i32) -> (i32, i32) {
    %c0_i32 = arith.constant 0 : i32
    %c0_i32_0 = arith.constant 0 : i32
    return %arg0, %c0_i32 : i32, i32
  }
  func.func @transform_2(%arg0: i32, %arg1: i32) -> (i32, i32) {
    %c0_i32 = arith.constant 0 : i32
    return %arg0, %arg1 : i32, i32
  }
}

</mosaic_0001>

<llo_original>
// kernel: tpu_custom_call.1
$region0: #{tpu_custom_call.1}
  #allocation0 [shape = 'u32[]', space=smem, size = 0x4, offset = 0x4, fixed_abs, tag = 'smem constant byte address 0x4 - core index']
  #allocation1 [shape = 'u32[72,128]{1,0:T(1,128)}', space=vmem, size = 0x9000, scoped, tag = 'internal scratch']
  %s0 = inlined_call_operand.hbm [shape: f32[256,4096], index: 0, kind: input, shape index: {}]
  %s1 = inlined_call_operand.vmem [shape: f32[256,1], index: 1, kind: input, shape index: {}]
  %s2 = inlined_call_operand.hbm [shape: f32[256,4096], index: 2, kind: output, shape index: {}]
  %s3 = sld [smem:[#allocation0]]
  $region22: #{tpu_custom_call.1} parent=0
    _
  %s5 = ssub.s32 1, %s3
  %s6 = scalar_select 0, %s5, %s3
  $region1: #{tpu_custom_call.1} parent=0
    #allocation2 [shape = 'u8[4194304]{0}', space=vmem, size = 0x400000, scoped, tag = 'input window, operand 0, single buffered']
    #allocation3 [shape = 's32[1]{0}', space=sflag, size = 0x4, scoped, tag = 'scoped memory for tpu_custom_call.1']
    #allocation4 [shape = 's32[1]{0}', space=sflag, size = 0x4, scoped, tag = 'scoped memory for tpu_custom_call.1']
    #allocation5 [shape = 'u8[4194304]{0}', space=vmem, size = 0x400000, scoped, tag = 'output window, operand 0, single buffered']
    %7 = vsyncpa [#allocation3], 0
    %8 = vsyncpa [#allocation4], 0
    // Predicated region
    $region2: #{tpu_custom_call.1} parent=1 // pred_check
      _
    $region3: #{tpu_custom_call.1} parent=1 // pred_check_branch
      %10 = sbr.rel (0) target = $region5
    $region4: #{tpu_custom_call.1} parent=1 // pred_region
      %12 = vsyncadd [#allocation3], 0
      %s13 = sshll.u32 %s0, 4
      %s14 = int_to_ptr.hbm [resolvable:$true] %s13
      %s15 = sshll.u32 [#allocation2], 4
      %s16 = int_to_ptr.vmem [resolvable:$true] %s15
      %21 = dma.hbm_to_vmem [thread:$0]  %s14, 131072, %s16, [#allocation3], 4096, 4096, 256
    $region5: #{tpu_custom_call.1} parent=1 // pred_fallthru
      _
    // Predicated region
    $region6: #{tpu_custom_call.1} parent=1 // pred_check
      _
    $region7: #{tpu_custom_call.1} parent=1 // pred_check_branch
      %23 = sbr.rel (0) target = $region9
    $region8: #{tpu_custom_call.1} parent=1 // pred_region
      _
    $region9: #{tpu_custom_call.1} parent=1 // pred_fallthru
      _
    // Predicated region
    $region10: #{tpu_custom_call.1} parent=1 // pred_check
      _
    $region11: #{tpu_custom_call.1} parent=1 // pred_check_branch
      %25 = sbr.rel (0) target = $region13
    $region12: #{tpu_custom_call.1} parent=1 // pred_region
      %27 = dma.done [#allocation3], 131072
    $region13: #{tpu_custom_call.1} parent=1 // pred_fallthru
      _
    %v28 = vld [vmem:[#allocation2] sm:$0xff]
    %v29 = vld [vmem:[#allocation2 + $0x8] sm:$0xff]
    %v30 = vld [vmem:[#allocation2 + $0x10] sm:$0xff]
    %v31 = vld [vmem:[#allocation2 + $0x18] sm:$0xff]
    %v32 = vld [vmem:[#allocation2 + $0x20] sm:$0xff]
    %v33 = vld [vmem:[#allocation2 + $0x28] sm:$0xff]
    %v34 = vld [vmem:[#allocation2 + $0x30] sm:$0xff]
    %v35 = vld [vmem:[#allocation2 + $0x38] sm:$0xff]
    %v36 = vld [vmem:[#allocation2 + $0x40] sm:$0xff]
    %v37 = vld [vmem:[#allocation2 + $0x48] sm:$0xff]
    %v38 = vld [vmem:[#allocation2 + $0x50] sm:$0xff]
    %v39 = vld [vmem:[#allocation2 + $0x58] sm:$0xff]
    %v40 = vld [vmem:[#allocation2 + $0x60] sm:$0xff]
    %v41 = vld [vmem:[#allocation2 + $0x68] sm:$0xff]
    %v42 = vld [vmem:[#allocation2 + $0x70] sm:$0xff]
    %v43 = vld [vmem:[#allocation2 + $0x78] sm:$0xff]
    %v44 = vld [vmem:[#allocation2 + $0x80] sm:$0xff]
    %v45 = vld [vmem:[#allocation2 + $0x88] sm:$0xff]
    %v46 = vld [vmem:[#allocation2 + $0x90] sm:$0xff]
    %v47 = vld [vmem:[#allocation2 + $0x98] sm:$0xff]
    %v48 = vld [vmem:[#allocation2 + $0xa0] sm:$0xff]
    %v49 = vld [vmem:[#allocation2 + $0xa8] sm:$0xff]
    %v50 = vld [vmem:[#allocation2 + $0xb0] sm:$0xff]
    %v51 = vld [vmem:[#allocation2 + $0xb8] sm:$0xff]
    %v52 = vld [vmem:[#allocation2 + $0xc0] sm:$0xff]
    %v53 = vld [vmem:[#allocation2 + $0xc8] sm:$0xff]
    %v54 = vld [vmem:[#allocation2 + $0xd0] sm:$0xff]
    %v55 = vld [vmem:[#allocation2 + $0xd8] sm:$0xff]
    %v56 = vld [vmem:[#allocation2 + $0xe0] sm:$0xff]
    %v57 = vld [vmem:[#allocation2 + $0xe8] sm:$0xff]
    %v58 = vld [vmem:[#allocation2 + $0xf0] sm:$0xff]
    %v59 = vld [vmem:[#allocation2 + $0xf8] sm:$0xff]
    %v60 = vld [vmem:[#allocation2 + $0x100] sm:$0xff]
    %v61 = vld [vmem:[#allocation2 + $0x108] sm:$0xff]
    %v62 = vld [vmem:[#allocation2 + $0x110] sm:$0xff]
    %v63 = vld [vmem:[#allocation2 + $0x118] sm:$0xff]
    %v64 = vld [vmem:[#allocation2 + $0x120] sm:$0xff]
    %v65 = vld [vmem:[#allocation2 + $0x128] sm:$0xff]
    %v66 = vld [vmem:[#allocation2 + $0x130] sm:$0xff]
    %v67 = vld [vmem:[#allocation2 + $0x138] sm:$0xff]
    %v68 = vld [vmem:[#allocation2 + $0x140] sm:$0xff]
    %v69 = vld [vmem:[#allocation2 + $0x148] sm:$0xff]
    %v70 = vld [vmem:[#allocation2 + $0x150] sm:$0xff]
    %v71 = vld [vmem:[#allocation2 + $0x158] sm:$0xff]
    %v72 = vld [vmem:[#allocation2 + $0x160] sm:$0xff]
    %v73 = vld [vmem:[#allocation2 + $0x168] sm:$0xff]
    %v74 = vld [vmem:[#allocation2 + $0x170] sm:$0xff]
    %v75 = vld [vmem:[#allocation2 + $0x178] sm:$0xff]
    %v76 = vld [vmem:[#allocation2 + $0x180] sm:$0xff]
    %v77 = vld [vmem:[#allocation2 + $0x188] sm:$0xff]
    %v78 = vld [vmem:[#allocation2 + $0x190] sm:$0xff]
    %v79 = vld [vmem:[#allocation2 + $0x198] sm:$0xff]
    %v80 = vld [vmem:[#allocation2 + $0x1a0] sm:$0xff]
    %v81 = vld [vmem:[#allocation2 + $0x1a8] sm:$0xff]
    %v82 = vld [vmem:[#allocation2 + $0x1b0] sm:$0xff]
    %v83 = vld [vmem:[#allocation2 + $0x1b8] sm:$0xff]
    %v84 = vld [vmem:[#allocation2 + $0x1c0] sm:$0xff]
    %v85 = vld [vmem:[#allocation2 + $0x1c8] sm:$0xff]
    %v86 = vld [vmem:[#allocation2 + $0x1d0] sm:$0xff]
    %v87 = vld [vmem:[#allocation2 + $0x1d8] sm:$0xff]
    %v88 = vld [vmem:[#allocation2 + $0x1e0] sm:$0xff]
    %v89 = vld [vmem:[#allocation2 + $0x1e8] sm:$0xff]
    %v90 = vld [vmem:[#allocation2 + $0x1f0] sm:$0xff]
    %v91 = vld [vmem:[#allocation2 + $0x1f8] sm:$0xff]
    %v92 = vld [vmem:[#allocation2 + $0x200] sm:$0xff]
    %v93 = vld [vmem:[#allocation2 + $0x208] sm:$0xff]
    %v94 = vld [vmem:[#allocation2 + $0x210] sm:$0xff]
    %v95 = vld [vmem:[#allocation2 + $0x218] sm:$0xff]
    %v96 = vld [vmem:[#allocation2 + $0x220] sm:$0xff]
    %v97 = vld [vmem:[#allocation2 + $0x228] sm:$0xff]
    %v98 = vld [vmem:[#allocation2 + $0x230] sm:$0xff]
    %v99 = vld [vmem:[#allocation2 + $0x238] sm:$0xff]
    %v100 = vld [vmem:[#allocation2 + $0x240] sm:$0xff]
    %v101 = vld [vmem:[#allocation2 + $0x248] sm:$0xff]
    %v102 = vld [vmem:[#allocation2 + $0x250] sm:$0xff]
    %v103 = vld [vmem:[#allocation2 + $0x258] sm:$0xff]
    %v104 = vld [vmem:[#allocation2 + $0x260] sm:$0xff]
    %v105 = vld [vmem:[#allocation2 + $0x268] sm:$0xff]
    %v106 = vld [vmem:[#allocation2 + $0x270] sm:$0xff]
    %v107 = vld [vmem:[#allocation2 + $0x278] sm:$0xff]
    %v108 = vld [vmem:[#allocation2 + $0x280] sm:$0xff]
    %v109 = vld [vmem:[#allocation2 + $0x288] sm:$0xff]
    %v110 = vld [vmem:[#allocation2 + $0x290] sm:$0xff]
    %v111 = vld [vmem:[#allocation2 + $0x298] sm:$0xff]
    %v112 = vld [vmem:[#allocation2 + $0x2a0] sm:$0xff]
    %v113 = vld [vmem:[#allocation2 + $0x2a8] sm:$0xff]
    %v114 = vld [vmem:[#allocation2 + $0x2b0] sm:$0xff]
    %v115 = vld [vmem:[#allocation2 + $0x2b8] sm:$0xff]
    %v116 = vld [vmem:[#allocation2 + $0x2c0] sm:$0xff]
    %v117 = vld [vmem:[#allocation2 + $0x2c8] sm:$0xff]
    %v118 = vld [vmem:[#allocation2 + $0x2d0] sm:$0xff]
    %v119 = vld [vmem:[#allocation2 + $0x2d8] sm:$0xff]
    %v120 = vld [vmem:[#allocation2 + $0x2e0] sm:$0xff]
    %v121 = vld [vmem:[#allocation2 + $0x2e8] sm:$0xff]
    %v122 = vld [vmem:[#allocation2 + $0x2f0] sm:$0xff]
    %v123 = vld [vmem:[#allocation2 + $0x2f8] sm:$0xff]
    %v124 = vld [vmem:[#allocation2 + $0x300] sm:$0xff]
    %v125 = vld [vmem:[#allocation2 + $0x308] sm:$0xff]
    %v126 = vld [vmem:[#allocation2 + $0x310] sm:$0xff]
    %v127 = vld [vmem:[#allocation2 + $0x318] sm:$0xff]
    %v128 = vld [vmem:[#allocation2 + $0x320] sm:$0xff]
    %v129 = vld [vmem:[#allocation2 + $0x328] sm:$0xff]
    %v130 = vld [vmem:[#allocation2 + $0x330] sm:$0xff]
    %v131 = vld [vmem:[#allocation2 + $0x338] sm:$0xff]
    %v132 = vld [vmem:[#allocation2 + $0x340] sm:$0xff]
    %v133 = vld [vmem:[#allocation2 + $0x348] sm:$0xff]
    %v134 = vld [vmem:[#allocation2 + $0x350] sm:$0xff]
    %v135 = vld [vmem:[#allocation2 + $0x358] sm:$0xff]
    %v136 = vld [vmem:[#allocation2 + $0x360] sm:$0xff]
    %v137 = vld [vmem:[#allocation2 + $0x368] sm:$0xff]
    %v138 = vld [vmem:[#allocation2 + $0x370] sm:$0xff]
    %v139 = vld [vmem:[#allocation2 + $0x378] sm:$0xff]
    %v140 = vld [vmem:[#allocation2 + $0x380] sm:$0xff]
    %v141 = vld [vmem:[#allocation2 + $0x388] sm:$0xff]
    %v142 = vld [vmem:[#allocation2 + $0x390] sm:$0xff]
    %v143 = vld [vmem:[#allocation2 + $0x398] sm:$0xff]
    %v144 = vld [vmem:[#allocation2 + $0x3a0] sm:$0xff]
    %v145 = vld [vmem:[#allocation2 + $0x3a8] sm:$0xff]
    %v146 = vld [vmem:[#allocation2 + $0x3b0] sm:$0xff]
    %v147 = vld [vmem:[#allocation2 + $0x3b8] sm:$0xff]
    %v148 = vld [vmem:[#allocation2 + $0x3c0] sm:$0xff]
    %v149 = vld [vmem:[#allocation2 + $0x3c8] sm:$0xff]
    %v150 = vld [vmem:[#allocation2 + $0x3d0] sm:$0xff]
    %v151 = vld [vmem:[#allocation2 + $0x3d8] sm:$0xff]
    %v152 = vld [vmem:[#allocation2 + $0x3e0] sm:$0xff]
    %v153 = vld [vmem:[#allocation2 + $0x3e8] sm:$0xff]
    %v154 = vld [vmem:[#allocation2 + $0x3f0] sm:$0xff]
    %v155 = vld [vmem:[#allocation2 + $0x3f8] sm:$0xff]
    %v156 = vld [vmem:[#allocation2 + $0x400] sm:$0xff]
    %v157 = vld [vmem:[#allocation2 + $0x408] sm:$0xff]
    %v158 = vld [vmem:[#allocation2 + $0x410] sm:$0xff]
    %v159 = vld [vmem:[#allocation2 + $0x418] sm:$0xff]
    %v160 = vld [vmem:[#allocation2 + $0x420] sm:$0xff]
    %v161 = vld [vmem:[#allocation2 + $0x428] sm:$0xff]
    %v162 = vld [vmem:[#allocation2 + $0x430] sm:$0xff]
    %v163 = vld [vmem:[#allocation2 + $0x438] sm:$0xff]
    %v164 = vld [vmem:[#allocation2 + $0x440] sm:$0xff]
    %v165 = vld [vmem:[#allocation2 + $0x448] sm:$0xff]
    %v166 = vld [vmem:[#allocation2 + $0x450] sm:$0xff]
    %v167 = vld [vmem:[#allocation2 + $0x458] sm:$0xff]
    %v168 = vld [vmem:[#allocation2 + $0x460] sm:$0xff]
    %v169 = vld [vmem:[#allocation2 + $0x468] sm:$0xff]
    %v170 = vld [vmem:[#allocation2 + $0x470] sm:$0xff]
    %v171 = vld [vmem:[#allocation2 + $0x478] sm:$0xff]
    %v172 = vld [vmem:[#allocation2 + $0x480] sm:$0xff]
    %v173 = vld [vmem:[#allocation2 + $0x488] sm:$0xff]
    %v174 = vld [vmem:[#allocation2 + $0x490] sm:$0xff]
    %v175 = vld [vmem:[#allocation2 + $0x498] sm:$0xff]
    %v176 = vld [vmem:[#allocation2 + $0x4a0] sm:$0xff]
    %v177 = vld [vmem:[#allocation2 + $0x4a8] sm:$0xff]
    %v178 = vld [vmem:[#allocation2 + $0x4b0] sm:$0xff]
    %v179 = vld [vmem:[#allocation2 + $0x4b8] sm:$0xff]
    %v180 = vld [vmem:[#allocation2 + $0x4c0] sm:$0xff]
    %v181 = vld [vmem:[#allocation2 + $0x4c8] sm:$0xff]
    %v182 = vld [vmem:[#allocation2 + $0x4d0] sm:$0xff]
    %v183 = vld [vmem:[#allocation2 + $0x4d8] sm:$0xff]
    %v184 = vld [vmem:[#allocation2 + $0x4e0] sm:$0xff]
    %v185 = vld [vmem:[#allocation2 + $0x4e8] sm:$0xff]
    %v186 = vld [vmem:[#allocation2 + $0x4f0] sm:$0xff]
    %v187 = vld [vmem:[#allocation2 + $0x4f8] sm:$0xff]
    %v188 = vld [vmem:[#allocation2 + $0x500] sm:$0xff]
    %v189 = vld [vmem:[#allocation2 + $0x508] sm:$0xff]
    %v190 = vld [vmem:[#allocation2 + $0x510] sm:$0xff]
    %v191 = vld [vmem:[#allocation2 + $0x518] sm:$0xff]
    %v192 = vld [vmem:[#allocation2 + $0x520] sm:$0xff]
    %v193 = vld [vmem:[#allocation2 + $0x528] sm:$0xff]
    %v194 = vld [vmem:[#allocation2 + $0x530] sm:$0xff]
    %v195 = vld [vmem:[#allocation2 + $0x538] sm:$0xff]
    %v196 = vld [vmem:[#allocation2 + $0x540] sm:$0xff]
    %v197 = vld [vmem:[#allocation2 + $0x548] sm:$0xff]
    %v198 = vld [vmem:[#allocation2 + $0x550] sm:$0xff]
    %v199 = vld [vmem:[#allocation2 + $0x558] sm:$0xff]
    %v200 = vld [vmem:[#allocation2 + $0x560] sm:$0xff]
    %v201 = vld [vmem:[#allocation2 + $0x568] sm:$0xff]
    %v202 = vld [vmem:[#allocation2 + $0x570] sm:$0xff]
    %v203 = vld [vmem:[#allocation2 + $0x578] sm:$0xff]
    %v204 = vld [vmem:[#allocation2 + $0x580] sm:$0xff]
    %v205 = vld [vmem:[#allocation2 + $0x588] sm:$0xff]
    %v206 = vld [vmem:[#allocation2 + $0x590] sm:$0xff]
    %v207 = vld [vmem:[#allocation2 + $0x598] sm:$0xff]
    %v208 = vld [vmem:[#allocation2 + $0x5a0] sm:$0xff]
    %v209 = vld [vmem:[#allocation2 + $0x5a8] sm:$0xff]
    %v210 = vld [vmem:[#allocation2 + $0x5b0] sm:$0xff]
    %v211 = vld [vmem:[#allocation2 + $0x5b8] sm:$0xff]
    %v212 = vld [vmem:[#allocation2 + $0x5c0] sm:$0xff]
    %v213 = vld [vmem:[#allocation2 + $0x5c8] sm:$0xff]
    %v214 = vld [vmem:[#allocation2 + $0x5d0] sm:$0xff]
    %v215 = vld [vmem:[#allocation2 + $0x5d8] sm:$0xff]
    %v216 = vld [vmem:[#allocation2 + $0x5e0] sm:$0xff]
    %v217 = vld [vmem:[#allocation2 + $0x5e8] sm:$0xff]
    %v218 = vld [vmem:[#allocation2 + $0x5f0] sm:$0xff]
    %v219 = vld [vmem:[#allocation2 + $0x5f8] sm:$0xff]
    %v220 = vld [vmem:[#allocation2 + $0x600] sm:$0xff]
    %v221 = vld [vmem:[#allocation2 + $0x608] sm:$0xff]
    %v222 = vld [vmem:[#allocation2 + $0x610] sm:$0xff]
    %v223 = vld [vmem:[#allocation2 + $0x618] sm:$0xff]
    %v224 = vld [vmem:[#allocation2 + $0x620] sm:$0xff]
    %v225 = vld [vmem:[#allocation2 + $0x628] sm:$0xff]
    %v226 = vld [vmem:[#allocation2 + $0x630] sm:$0xff]
    %v227 = vld [vmem:[#allocation2 + $0x638] sm:$0xff]
    %v228 = vld [vmem:[#allocation2 + $0x640] sm:$0xff]
    %v229 = vld [vmem:[#allocation2 + $0x648] sm:$0xff]
    %v230 = vld [vmem:[#allocation2 + $0x650] sm:$0xff]
    %v231 = vld [vmem:[#allocation2 + $0x658] sm:$0xff]
    %v232 = vld [vmem:[#allocation2 + $0x660] sm:$0xff]
    %v233 = vld [vmem:[#allocation2 + $0x668] sm:$0xff]
    %v234 = vld [vmem:[#allocation2 + $0x670] sm:$0xff]
    %v235 = vld [vmem:[#allocation2 + $0x678] sm:$0xff]
    %v236 = vld [vmem:[#allocation2 + $0x680] sm:$0xff]
    %v237 = vld [vmem:[#allocation2 + $0x688] sm:$0xff]
    %v238 = vld [vmem:[#allocation2 + $0x690] sm:$0xff]
    %v239 = vld [vmem:[#allocation2 + $0x698] sm:$0xff]
    %v240 = vld [vmem:[#allocation2 + $0x6a0] sm:$0xff]
    %v241 = vld [vmem:[#allocation2 + $0x6a8] sm:$0xff]
    %v242 = vld [vmem:[#allocation2 + $0x6b0] sm:$0xff]
    %v243 = vld [vmem:[#allocation2 + $0x6b8] sm:$0xff]
    %v244 = vld [vmem:[#allocation2 + $0x6c0] sm:$0xff]
    %v245 = vld [vmem:[#allocation2 + $0x6c8] sm:$0xff]
    %v246 = vld [vmem:[#allocation2 + $0x6d0] sm:$0xff]
    %v247 = vld [vmem:[#allocation2 + $0x6d8] sm:$0xff]
    %v248 = vld [vmem:[#allocation2 + $0x6e0] sm:$0xff]
    %v249 = vld [vmem:[#allocation2 + $0x6e8] sm:$0xff]
    %v250 = vld [vmem:[#allocation2 + $0x6f0] sm:$0xff]
    %v251 = vld [vmem:[#allocation2 + $0x6f8] sm:$0xff]
    %v252 = vld [vmem:[#allocation2 + $0x700] sm:$0xff]
    %v253 = vld [vmem:[#allocation2 + $0x708] sm:$0xff]
    %v254 = vld [vmem:[#allocation2 + $0x710] sm:$0xff]
    %v255 = vld [vmem:[#allocation2 + $0x718] sm:$0xff]
    %v256 = vld [vmem:[#allocation2 + $0x720] sm:$0xff]
    %v257 = vld [vmem:[#allocation2 + $0x728] sm:$0xff]
    %v258 = vld [vmem:[#allocation2 + $0x730] sm:$0xff]
    %v259 = vld [vmem:[#allocation2 + $0x738] sm:$0xff]
    %v260 = vld [vmem:[#allocation2 + $0x740] sm:$0xff]
    %v261 = vld [vmem:[#allocation2 + $0x748] sm:$0xff]
    %v262 = vld [vmem:[#allocation2 + $0x750] sm:$0xff]
    %v263 = vld [vmem:[#allocation2 + $0x758] sm:$0xff]
    %v264 = vld [vmem:[#allocation2 + $0x760] sm:$0xff]
    %v265 = vld [vmem:[#allocation2 + $0x768] sm:$0xff]
    %v266 = vld [vmem:[#allocation2 + $0x770] sm:$0xff]
    %v267 = vld [vmem:[#allocation2 + $0x778] sm:$0xff]
    %v268 = vld [vmem:[#allocation2 + $0x780] sm:$0xff]
    %v269 = vld [vmem:[#allocation2 + $0x788] sm:$0xff]
    %v270 = vld [vmem:[#allocation2 + $0x790] sm:$0xff]
    %v271 = vld [vmem:[#allocation2 + $0x798] sm:$0xff]
    %v272 = vld [vmem:[#allocation2 + $0x7a0] sm:$0xff]
    %v273 = vld [vmem:[#allocation2 + $0x7a8] sm:$0xff]
    %v274 = vld [vmem:[#allocation2 + $0x7b0] sm:$0xff]
    %v275 = vld [vmem:[#allocation2 + $0x7b8] sm:$0xff]
    %v276 = vld [vmem:[#allocation2 + $0x7c0] sm:$0xff]
    %v277 = vld [vmem:[#allocation2 + $0x7c8] sm:$0xff]
    %v278 = vld [vmem:[#allocation2 + $0x7d0] sm:$0xff]
    %v279 = vld [vmem:[#allocation2 + $0x7d8] sm:$0xff]
    %v280 = vld [vmem:[#allocation2 + $0x7e0] sm:$0xff]
    %v281 = vld [vmem:[#allocation2 + $0x7e8] sm:$0xff]
    %v282 = vld [vmem:[#allocation2 + $0x7f0] sm:$0xff]
    %v283 = vld [vmem:[#allocation2 + $0x7f8] sm:$0xff]
    %v284 = vld [vmem:[#allocation2 + $0x800] sm:$0xff]
    %v285 = vld [vmem:[#allocation2 + $0x808] sm:$0xff]
    %v286 = vld [vmem:[#allocation2 + $0x810] sm:$0xff]
    %v287 = vld [vmem:[#allocation2 + $0x818] sm:$0xff]
    %v288 = vld [vmem:[#allocation2 + $0x820] sm:$0xff]
    %v289 = vld [vmem:[#allocation2 + $0x828] sm:$0xff]
    %v290 = vld [vmem:[#allocation2 + $0x830] sm:$0xff]
    %v291 = vld [vmem:[#allocation2 + $0x838] sm:$0xff]
    %v292 = vld [vmem:[#allocation2 + $0x840] sm:$0xff]
    %v293 = vld [vmem:[#allocation2 + $0x848] sm:$0xff]
    %v294 = vld [vmem:[#allocation2 + $0x850] sm:$0xff]
    %v295 = vld [vmem:[#allocation2 + $0x858] sm:$0xff]
    %v296 = vld [vmem:[#allocation2 + $0x860] sm:$0xff]
    %v297 = vld [vmem:[#allocation2 + $0x868] sm:$0xff]
    %v298 = vld [vmem:[#allocation2 + $0x870] sm:$0xff]
    %v299 = vld [vmem:[#allocation2 + $0x878] sm:$0xff]
    %v300 = vld [vmem:[#allocation2 + $0x880] sm:$0xff]
    %v301 = vld [vmem:[#allocation2 + $0x888] sm:$0xff]
    %v302 = vld [vmem:[#allocation2 + $0x890] sm:$0xff]
    %v303 = vld [vmem:[#allocation2 + $0x898] sm:$0xff]
    %v304 = vld [vmem:[#allocation2 + $0x8a0] sm:$0xff]
    %v305 = vld [vmem:[#allocation2 + $0x8a8] sm:$0xff]
    %v306 = vld [vmem:[#allocation2 + $0x8b0] sm:$0xff]
    %v307 = vld [vmem:[#allocation2 + $0x8b8] sm:$0xff]
    %v308 = vld [vmem:[#allocation2 + $0x8c0] sm:$0xff]
    %v309 = vld [vmem:[#allocation2 + $0x8c8] sm:$0xff]
    %v310 = vld [vmem:[#allocation2 + $0x8d0] sm:$0xff]
    %v311 = vld [vmem:[#allocation2 + $0x8d8] sm:$0xff]
    %v312 = vld [vmem:[#allocation2 + $0x8e0] sm:$0xff]
    %v313 = vld [vmem:[#allocation2 + $0x8e8] sm:$0xff]
    %v314 = vld [vmem:[#allocation2 + $0x8f0] sm:$0xff]
    %v315 = vld [vmem:[#allocation2 + $0x8f8] sm:$0xff]
    %v316 = vld [vmem:[#allocation2 + $0x900] sm:$0xff]
    %v317 = vld [vmem:[#allocation2 + $0x908] sm:$0xff]
    %v318 = vld [vmem:[#allocation2 + $0x910] sm:$0xff]
    %v319 = vld [vmem:[#allocation2 + $0x918] sm:$0xff]
    %v320 = vld [vmem:[#allocation2 + $0x920] sm:$0xff]
    %v321 = vld [vmem:[#allocation2 + $0x928] sm:$0xff]
    %v322 = vld [vmem:[#allocation2 + $0x930] sm:$0xff]
    %v323 = vld [vmem:[#allocation2 + $0x938] sm:$0xff]
    %v324 = vld [vmem:[#allocation2 + $0x940] sm:$0xff]
    %v325 = vld [vmem:[#allocation2 + $0x948] sm:$0xff]
    %v326 = vld [vmem:[#allocation2 + $0x950] sm:$0xff]
    %v327 = vld [vmem:[#allocation2 + $0x958] sm:$0xff]
    %v328 = vld [vmem:[#allocation2 + $0x960] sm:$0xff]
    %v329 = vld [vmem:[#allocation2 + $0x968] sm:$0xff]
    %v330 = vld [vmem:[#allocation2 + $0x970] sm:$0xff]
    %v331 = vld [vmem:[#allocation2 + $0x978] sm:$0xff]
    %v332 = vld [vmem:[#allocation2 + $0x980] sm:$0xff]
    %v333 = vld [vmem:[#allocation2 + $0x988] sm:$0xff]
    %v334 = vld [vmem:[#allocation2 + $0x990] sm:$0xff]
    %v335 = vld [vmem:[#allocation2 + $0x998] sm:$0xff]
    %v336 = vld [vmem:[#allocation2 + $0x9a0] sm:$0xff]
    %v337 = vld [vmem:[#allocation2 + $0x9a8] sm:$0xff]
    %v338 = vld [vmem:[#allocation2 + $0x9b0] sm:$0xff]
    %v339 = vld [vmem:[#allocation2 + $0x9b8] sm:$0xff]
    %v340 = vld [vmem:[#allocation2 + $0x9c0] sm:$0xff]
    %v341 = vld [vmem:[#allocation2 + $0x9c8] sm:$0xff]
    %v342 = vld [vmem:[#allocation2 + $0x9d0] sm:$0xff]
    %v343 = vld [vmem:[#allocation2 + $0x9d8] sm:$0xff]
    %v344 = vld [vmem:[#allocation2 + $0x9e0] sm:$0xff]
    %v345 = vld [vmem:[#allocation2 + $0x9e8] sm:$0xff]
    %v346 = vld [vmem:[#allocation2 + $0x9f0] sm:$0xff]
    %v347 = vld [vmem:[#allocation2 + $0x9f8] sm:$0xff]
    %v348 = vld [vmem:[#allocation2 + $0xa00] sm:$0xff]
    %v349 = vld [vmem:[#allocation2 + $0xa08] sm:$0xff]
    %v350 = vld [vmem:[#allocation2 + $0xa10] sm:$0xff]
    %v351 = vld [vmem:[#allocation2 + $0xa18] sm:$0xff]
    %v352 = vld [vmem:[#allocation2 + $0xa20] sm:$0xff]
    %v353 = vld [vmem:[#allocation2 + $0xa28] sm:$0xff]
    %v354 = vld [vmem:[#allocation2 + $0xa30] sm:$0xff]
    %v355 = vld [vmem:[#allocation2 + $0xa38] sm:$0xff]
    %v356 = vld [vmem:[#allocation2 + $0xa40] sm:$0xff]
    %v357 = vld [vmem:[#allocation2 + $0xa48] sm:$0xff]
    %v358 = vld [vmem:[#allocation2 + $0xa50] sm:$0xff]
    %v359 = vld [vmem:[#allocation2 + $0xa58] sm:$0xff]
    %v360 = vld [vmem:[#allocation2 + $0xa60] sm:$0xff]
    %v361 = vld [vmem:[#allocation2 + $0xa68] sm:$0xff]
    %v362 = vld [vmem:[#allocation2 + $0xa70] sm:$0xff]
    %v363 = vld [vmem:[#allocation2 + $0xa78] sm:$0xff]
    %v364 = vld [vmem:[#allocation2 + $0xa80] sm:$0xff]
    %v365 = vld [vmem:[#allocation2 + $0xa88] sm:$0xff]
    %v366 = vld [vmem:[#allocation2 + $0xa90] sm:$0xff]
    %v367 = vld [vmem:[#allocation2 + $0xa98] sm:$0xff]
    %v368 = vld [vmem:[#allocation2 + $0xaa0] sm:$0xff]
    %v369 = vld [vmem:[#allocation2 + $0xaa8] sm:$0xff]
    %v370 = vld [vmem:[#allocation2 + $0xab0] sm:$0xff]
    %v371 = vld [vmem:[#allocation2 + $0xab8] sm:$0xff]
    %v372 = vld [vmem:[#allocation2 + $0xac0] sm:$0xff]
    %v373 = vld [vmem:[#allocation2 + $0xac8] sm:$0xff]
    %v374 = vld [vmem:[#allocation2 + $0xad0] sm:$0xff]
    %v375 = vld [vmem:[#allocation2 + $0xad8] sm:$0xff]
    %v376 = vld [vmem:[#allocation2 + $0xae0] sm:$0xff]
    %v377 = vld [vmem:[#allocation2 + $0xae8] sm:$0xff]
    %v378 = vld [vmem:[#allocation2 + $0xaf0] sm:$0xff]
    %v379 = vld [vmem:[#allocation2 + $0xaf8] sm:$0xff]
    %v380 = vld [vmem:[#allocation2 + $0xb00] sm:$0xff]
    %v381 = vld [vmem:[#allocation2 + $0xb08] sm:$0xff]
    %v382 = vld [vmem:[#allocation2 + $0xb10] sm:$0xff]
    %v383 = vld [vmem:[#allocation2 + $0xb18] sm:$0xff]
    %v384 = vld [vmem:[#allocation2 + $0xb20] sm:$0xff]
    %v385 = vld [vmem:[#allocation2 + $0xb28] sm:$0xff]
    %v386 = vld [vmem:[#allocation2 + $0xb30] sm:$0xff]
    %v387 = vld [vmem:[#allocation2 + $0xb38] sm:$0xff]
    %v388 = vld [vmem:[#allocation2 + $0xb40] sm:$0xff]
    %v389 = vld [vmem:[#allocation2 + $0xb48] sm:$0xff]
    %v390 = vld [vmem:[#allocation2 + $0xb50] sm:$0xff]
    %v391 = vld [vmem:[#allocation2 + $0xb58] sm:$0xff]
    %v392 = vld [vmem:[#allocation2 + $0xb60] sm:$0xff]
    %v393 = vld [vmem:[#allocation2 + $0xb68] sm:$0xff]
    %v394 = vld [vmem:[#allocation2 + $0xb70] sm:$0xff]
    %v395 = vld [vmem:[#allocation2 + $0xb78] sm:$0xff]
    %v396 = vld [vmem:[#allocation2 + $0xb80] sm:$0xff]
    %v397 = vld [vmem:[#allocation2 + $0xb88] sm:$0xff]
    %v398 = vld [vmem:[#allocation2 + $0xb90] sm:$0xff]
    %v399 = vld [vmem:[#allocation2 + $0xb98] sm:$0xff]
    %v400 = vld [vmem:[#allocation2 + $0xba0] sm:$0xff]
    %v401 = vld [vmem:[#allocation2 + $0xba8] sm:$0xff]
    %v402 = vld [vmem:[#allocation2 + $0xbb0] sm:$0xff]
    %v403 = vld [vmem:[#allocation2 + $0xbb8] sm:$0xff]
    %v404 = vld [vmem:[#allocation2 + $0xbc0] sm:$0xff]
    %v405 = vld [vmem:[#allocation2 + $0xbc8] sm:$0xff]
    %v406 = vld [vmem:[#allocation2 + $0xbd0] sm:$0xff]
    %v407 = vld [vmem:[#allocation2 + $0xbd8] sm:$0xff]
    %v408 = vld [vmem:[#allocation2 + $0xbe0] sm:$0xff]
    %v409 = vld [vmem:[#allocation2 + $0xbe8] sm:$0xff]
    %v410 = vld [vmem:[#allocation2 + $0xbf0] sm:$0xff]
    %v411 = vld [vmem:[#allocation2 + $0xbf8] sm:$0xff]
    %v412 = vld [vmem:[#allocation2 + $0xc00] sm:$0xff]
    %v413 = vld [vmem:[#allocation2 + $0xc08] sm:$0xff]
    %v414 = vld [vmem:[#allocation2 + $0xc10] sm:$0xff]
    %v415 = vld [vmem:[#allocation2 + $0xc18] sm:$0xff]
    %v416 = vld [vmem:[#allocation2 + $0xc20] sm:$0xff]
    %v417 = vld [vmem:[#allocation2 + $0xc28] sm:$0xff]
    %v418 = vld [vmem:[#allocation2 + $0xc30] sm:$0xff]
    %v419 = vld [vmem:[#allocation2 + $0xc38] sm:$0xff]
    %v420 = vld [vmem:[#allocation2 + $0xc40] sm:$0xff]
    %v421 = vld [vmem:[#allocation2 + $0xc48] sm:$0xff]
    %v422 = vld [vmem:[#allocation2 + $0xc50] sm:$0xff]
    %v423 = vld [vmem:[#allocation2 + $0xc58] sm:$0xff]
    %v424 = vld [vmem:[#allocation2 + $0xc60] sm:$0xff]
    %v425 = vld [vmem:[#allocation2 + $0xc68] sm:$0xff]
    %v426 = vld [vmem:[#allocation2 + $0xc70] sm:$0xff]
    %v427 = vld [vmem:[#allocation2 + $0xc78] sm:$0xff]
    %v428 = vld [vmem:[#allocation2 + $0xc80] sm:$0xff]
    %v429 = vld [vmem:[#allocation2 + $0xc88] sm:$0xff]
    %v430 = vld [vmem:[#allocation2 + $0xc90] sm:$0xff]
    %v431 = vld [vmem:[#allocation2 + $0xc98] sm:$0xff]
    %v432 = vld [vmem:[#allocation2 + $0xca0] sm:$0xff]
    %v433 = vld [vmem:[#allocation2 + $0xca8] sm:$0xff]
    %v434 = vld [vmem:[#allocation2 + $0xcb0] sm:$0xff]
    %v435 = vld [vmem:[#allocation2 + $0xcb8] sm:$0xff]
    %v436 = vld [vmem:[#allocation2 + $0xcc0] sm:$0xff]
    %v437 = vld [vmem:[#allocation2 + $0xcc8] sm:$0xff]
    %v438 = vld [vmem:[#allocation2 + $0xcd0] sm:$0xff]
    %v439 = vld [vmem:[#allocation2 + $0xcd8] sm:$0xff]
    %v440 = vld [vmem:[#allocation2 + $0xce0] sm:$0xff]
    %v441 = vld [vmem:[#allocation2 + $0xce8] sm:$0xff]
    %v442 = vld [vmem:[#allocation2 + $0xcf0] sm:$0xff]
    %v443 = vld [vmem:[#allocation2 + $0xcf8] sm:$0xff]
    %v444 = vld [vmem:[#allocation2 + $0xd00] sm:$0xff]
    %v445 = vld [vmem:[#allocation2 + $0xd08] sm:$0xff]
    %v446 = vld [vmem:[#allocation2 + $0xd10] sm:$0xff]
    %v447 = vld [vmem:[#allocation2 + $0xd18] sm:$0xff]
    %v448 = vld [vmem:[#allocation2 + $0xd20] sm:$0xff]
    %v449 = vld [vmem:[#allocation2 + $0xd28] sm:$0xff]
    %v450 = vld [vmem:[#allocation2 + $0xd30] sm:$0xff]
    %v451 = vld [vmem:[#allocation2 + $0xd38] sm:$0xff]
    %v452 = vld [vmem:[#allocation2 + $0xd40] sm:$0xff]
    %v453 = vld [vmem:[#allocation2 + $0xd48] sm:$0xff]
    %v454 = vld [vmem:[#allocation2 + $0xd50] sm:$0xff]
    %v455 = vld [vmem:[#allocation2 + $0xd58] sm:$0xff]
    %v456 = vld [vmem:[#allocation2 + $0xd60] sm:$0xff]
    %v457 = vld [vmem:[#allocation2 + $0xd68] sm:$0xff]
    %v458 = vld [vmem:[#allocation2 + $0xd70] sm:$0xff]
    %v459 = vld [vmem:[#allocation2 + $0xd78] sm:$0xff]
    %v460 = vld [vmem:[#allocation2 + $0xd80] sm:$0xff]
    %v461 = vld [vmem:[#allocation2 + $0xd88] sm:$0xff]
    %v462 = vld [vmem:[#allocation2 + $0xd90] sm:$0xff]
    %v463 = vld [vmem:[#allocation2 + $0xd98] sm:$0xff]
    %v464 = vld [vmem:[#allocation2 + $0xda0] sm:$0xff]
    %v465 = vld [vmem:[#allocation2 + $0xda8] sm:$0xff]
    %v466 = vld [vmem:[#allocation2 + $0xdb0] sm:$0xff]
    %v467 = vld [vmem:[#allocation2 + $0xdb8] sm:$0xff]
    %v468 = vld [vmem:[#allocation2 + $0xdc0] sm:$0xff]
    %v469 = vld [vmem:[#allocation2 + $0xdc8] sm:$0xff]
    %v470 = vld [vmem:[#allocation2 + $0xdd0] sm:$0xff]
    %v471 = vld [vmem:[#allocation2 + $0xdd8] sm:$0xff]
    %v472 = vld [vmem:[#allocation2 + $0xde0] sm:$0xff]
    %v473 = vld [vmem:[#allocation2 + $0xde8] sm:$0xff]
    %v474 = vld [vmem:[#allocation2 + $0xdf0] sm:$0xff]
    %v475 = vld [vmem:[#allocation2 + $0xdf8] sm:$0xff]
    %v476 = vld [vmem:[#allocation2 + $0xe00] sm:$0xff]
    %v477 = vld [vmem:[#allocation2 + $0xe08] sm:$0xff]
    %v478 = vld [vmem:[#allocation2 + $0xe10] sm:$0xff]
    %v479 = vld [vmem:[#allocation2 + $0xe18] sm:$0xff]
    %v480 = vld [vmem:[#allocation2 + $0xe20] sm:$0xff]
    %v481 = vld [vmem:[#allocation2 + $0xe28] sm:$0xff]
    %v482 = vld [vmem:[#allocation2 + $0xe30] sm:$0xff]
    %v483 = vld [vmem:[#allocation2 + $0xe38] sm:$0xff]
    %v484 = vld [vmem:[#allocation2 + $0xe40] sm:$0xff]
    %v485 = vld [vmem:[#allocation2 + $0xe48] sm:$0xff]
    %v486 = vld [vmem:[#allocation2 + $0xe50] sm:$0xff]
    %v487 = vld [vmem:[#allocation2 + $0xe58] sm:$0xff]
    %v488 = vld [vmem:[#allocation2 + $0xe60] sm:$0xff]
    %v489 = vld [vmem:[#allocation2 + $0xe68] sm:$0xff]
    %v490 = vld [vmem:[#allocation2 + $0xe70] sm:$0xff]
    %v491 = vld [vmem:[#allocation2 + $0xe78] sm:$0xff]
    %v492 = vld [vmem:[#allocation2 + $0xe80] sm:$0xff]
    %v493 = vld [vmem:[#allocation2 + $0xe88] sm:$0xff]
    %v494 = vld [vmem:[#allocation2 + $0xe90] sm:$0xff]
    %v495 = vld [vmem:[#allocation2 + $0xe98] sm:$0xff]
    %v496 = vld [vmem:[#allocation2 + $0xea0] sm:$0xff]
    %v497 = vld [vmem:[#allocation2 + $0xea8] sm:$0xff]
    %v498 = vld [vmem:[#allocation2 + $0xeb0] sm:$0xff]
    %v499 = vld [vmem:[#allocation2 + $0xeb8] sm:$0xff]
    %v500 = vld [vmem:[#allocation2 + $0xec0] sm:$0xff]
    %v501 = vld [vmem:[#allocation2 + $0xec8] sm:$0xff]
    %v502 = vld [vmem:[#allocation2 + $0xed0] sm:$0xff]
    %v503 = vld [vmem:[#allocation2 + $0xed8] sm:$0xff]
    %v504 = vld [vmem:[#allocation2 + $0xee0] sm:$0xff]
    %v505 = vld [vmem:[#allocation2 + $0xee8] sm:$0xff]
    %v506 = vld [vmem:[#allocation2 + $0xef0] sm:$0xff]
    %v507 = vld [vmem:[#allocation2 + $0xef8] sm:$0xff]
    %v508 = vld [vmem:[#allocation2 + $0xf00] sm:$0xff]
    %v509 = vld [vmem:[#allocation2 + $0xf08] sm:$0xff]
    %v510 = vld [vmem:[#allocation2 + $0xf10] sm:$0xff]
    %v511 = vld [vmem:[#allocation2 + $0xf18] sm:$0xff]
    %v512 = vld [vmem:[#allocation2 + $0xf20] sm:$0xff]
    %v513 = vld [vmem:[#allocation2 + $0xf28] sm:$0xff]
    %v514 = vld [vmem:[#allocation2 + $0xf30] sm:$0xff]
    %v515 = vld [vmem:[#allocation2 + $0xf38] sm:$0xff]
    %v516 = vld [vmem:[#allocation2 + $0xf40] sm:$0xff]
    %v517 = vld [vmem:[#allocation2 + $0xf48] sm:$0xff]
    %v518 = vld [vmem:[#allocation2 + $0xf50] sm:$0xff]
    %v519 = vld [vmem:[#allocation2 + $0xf58] sm:$0xff]
    %v520 = vld [vmem:[#allocation2 + $0xf60] sm:$0xff]
    %v521 = vld [vmem:[#allocation2 + $0xf68] sm:$0xff]
    %v522 = vld [vmem:[#allocation2 + $0xf70] sm:$0xff]
    %v523 = vld [vmem:[#allocation2 + $0xf78] sm:$0xff]
    %v524 = vld [vmem:[#allocation2 + $0xf80] sm:$0xff]
    %v525 = vld [vmem:[#allocation2 + $0xf88] sm:$0xff]
    %v526 = vld [vmem:[#allocation2 + $0xf90] sm:$0xff]
    %v527 = vld [vmem:[#allocation2 + $0xf98] sm:$0xff]
    %v528 = vld [vmem:[#allocation2 + $0xfa0] sm:$0xff]
    %v529 = vld [vmem:[#allocation2 + $0xfa8] sm:$0xff]
    %v530 = vld [vmem:[#allocation2 + $0xfb0] sm:$0xff]
    %v531 = vld [vmem:[#allocation2 + $0xfb8] sm:$0xff]
    %v532 = vld [vmem:[#allocation2 + $0xfc0] sm:$0xff]
    %v533 = vld [vmem:[#allocation2 + $0xfc8] sm:$0xff]
    %v534 = vld [vmem:[#allocation2 + $0xfd0] sm:$0xff]
    %v535 = vld [vmem:[#allocation2 + $0xfd8] sm:$0xff]
    %v536 = vld [vmem:[#allocation2 + $0xfe0] sm:$0xff]
    %v537 = vld [vmem:[#allocation2 + $0xfe8] sm:$0xff]
    %v538 = vld [vmem:[#allocation2 + $0xff0] sm:$0xff]
    %v539 = vld [vmem:[#allocation2 + $0xff8] sm:$0xff]
    %v540 = vld [vmem:[#allocation2 + $0x1000] sm:$0xff]
    %v541 = vld [vmem:[#allocation2 + $0x1008] sm:$0xff]
    %v542 = vld [vmem:[#allocation2 + $0x1010] sm:$0xff]
    %v543 = vld [vmem:[#allocation2 + $0x1018] sm:$0xff]
    %v544 = vld [vmem:[#allocation2 + $0x1020] sm:$0xff]
    %v545 = vld [vmem:[#allocation2 + $0x1028] sm:$0xff]
    %v546 = vld [vmem:[#allocation2 + $0x1030] sm:$0xff]
    %v547 = vld [vmem:[#allocation2 + $0x1038] sm:$0xff]
    %v548 = vld [vmem:[#allocation2 + $0x1040] sm:$0xff]
    %v549 = vld [vmem:[#allocation2 + $0x1048] sm:$0xff]
    %v550 = vld [vmem:[#allocation2 + $0x1050] sm:$0xff]
    %v551 = vld [vmem:[#allocation2 + $0x1058] sm:$0xff]
    %v552 = vld [vmem:[#allocation2 + $0x1060] sm:$0xff]
    %v553 = vld [vmem:[#allocation2 + $0x1068] sm:$0xff]
    %v554 = vld [vmem:[#allocation2 + $0x1070] sm:$0xff]
    %v555 = vld [vmem:[#allocation2 + $0x1078] sm:$0xff]
    %v556 = vld [vmem:[#allocation2 + $0x1080] sm:$0xff]
    %v557 = vld [vmem:[#allocation2 + $0x1088] sm:$0xff]
    %v558 = vld [vmem:[#allocation2 + $0x1090] sm:$0xff]
    %v559 = vld [vmem:[#allocation2 + $0x1098] sm:$0xff]
    %v560 = vld [vmem:[#allocation2 + $0x10a0] sm:$0xff]
    %v561 = vld [vmem:[#allocation2 + $0x10a8] sm:$0xff]
    %v562 = vld [vmem:[#allocation2 + $0x10b0] sm:$0xff]
    %v563 = vld [vmem:[#allocation2 + $0x10b8] sm:$0xff]
    %v564 = vld [vmem:[#allocation2 + $0x10c0] sm:$0xff]
    %v565 = vld [vmem:[#allocation2 + $0x10c8] sm:$0xff]
    %v566 = vld [vmem:[#allocation2 + $0x10d0] sm:$0xff]
    %v567 = vld [vmem:[#allocation2 + $0x10d8] sm:$0xff]
    %v568 = vld [vmem:[#allocation2 + $0x10e0] sm:$0xff]
    %v569 = vld [vmem:[#allocation2 + $0x10e8] sm:$0xff]
    %v570 = vld [vmem:[#allocation2 + $0x10f0] sm:$0xff]
    %v571 = vld [vmem:[#allocation2 + $0x10f8] sm:$0xff]
    %v572 = vld [vmem:[#allocation2 + $0x1100] sm:$0xff]
    %v573 = vld [vmem:[#allocation2 + $0x1108] sm:$0xff]
    %v574 = vld [vmem:[#allocation2 + $0x1110] sm:$0xff]
    %v575 = vld [vmem:[#allocation2 + $0x1118] sm:$0xff]
    %v576 = vld [vmem:[#allocation2 + $0x1120] sm:$0xff]
    %v577 = vld [vmem:[#allocation2 + $0x1128] sm:$0xff]
    %v578 = vld [vmem:[#allocation2 + $0x1130] sm:$0xff]
    %v579 = vld [vmem:[#allocation2 + $0x1138] sm:$0xff]
    %v580 = vld [vmem:[#allocation2 + $0x1140] sm:$0xff]
    %v581 = vld [vmem:[#allocation2 + $0x1148] sm:$0xff]
    %v582 = vld [vmem:[#allocation2 + $0x1150] sm:$0xff]
    %v583 = vld [vmem:[#allocation2 + $0x1158] sm:$0xff]
    %v584 = vld [vmem:[#allocation2 + $0x1160] sm:$0xff]
    %v585 = vld [vmem:[#allocation2 + $0x1168] sm:$0xff]
    %v586 = vld [vmem:[#allocation2 + $0x1170] sm:$0xff]
    %v587 = vld [vmem:[#allocation2 + $0x1178] sm:$0xff]
    %v588 = vld [vmem:[#allocation2 + $0x1180] sm:$0xff]
    %v589 = vld [vmem:[#allocation2 + $0x1188] sm:$0xff]
    %v590 = vld [vmem:[#allocation2 + $0x1190] sm:$0xff]
    %v591 = vld [vmem:[#allocation2 + $0x1198] sm:$0xff]
    %v592 = vld [vmem:[#allocation2 + $0x11a0] sm:$0xff]
    %v593 = vld [vmem:[#allocation2 + $0x11a8] sm:$0xff]
    %v594 = vld [vmem:[#allocation2 + $0x11b0] sm:$0xff]
    %v595 = vld [vmem:[#allocation2 + $0x11b8] sm:$0xff]
    %v596 = vld [vmem:[#allocation2 + $0x11c0] sm:$0xff]
    %v597 = vld [vmem:[#allocation2 + $0x11c8] sm:$0xff]
    %v598 = vld [vmem:[#allocation2 + $0x11d0] sm:$0xff]
    %v599 = vld [vmem:[#allocation2 + $0x11d8] sm:$0xff]
    %v600 = vld [vmem:[#allocation2 + $0x11e0] sm:$0xff]
    %v601 = vld [vmem:[#allocation2 + $0x11e8] sm:$0xff]
    %v602 = vld [vmem:[#allocation2 + $0x11f0] sm:$0xff]
    %v603 = vld [vmem:[#allocation2 + $0x11f8] sm:$0xff]
    %v604 = vld [vmem:[#allocation2 + $0x1200] sm:$0xff]
    %v605 = vld [vmem:[#allocation2 + $0x1208] sm:$0xff]
    %v606 = vld [vmem:[#allocation2 + $0x1210] sm:$0xff]
    %v607 = vld [vmem:[#allocation2 + $0x1218] sm:$0xff]
    %v608 = vld [vmem:[#allocation2 + $0x1220] sm:$0xff]
    %v609 = vld [vmem:[#allocation2 + $0x1228] sm:$0xff]
    %v610 = vld [vmem:[#allocation2 + $0x1230] sm:$0xff]
    %v611 = vld [vmem:[#allocation2 + $0x1238] sm:$0xff]
    %v612 = vld [vmem:[#allocation2 + $0x1240] sm:$0xff]
    %v613 = vld [vmem:[#allocation2 + $0x1248] sm:$0xff]
    %v614 = vld [vmem:[#allocation2 + $0x1250] sm:$0xff]
    %v615 = vld [vmem:[#allocation2 + $0x1258] sm:$0xff]
    %v616 = vld [vmem:[#allocation2 + $0x1260] sm:$0xff]
    %v617 = vld [vmem:[#allocation2 + $0x1268] sm:$0xff]
    %v618 = vld [vmem:[#allocation2 + $0x1270] sm:$0xff]
    %v619 = vld [vmem:[#allocation2 + $0x1278] sm:$0xff]
    %v620 = vld [vmem:[#allocation2 + $0x1280] sm:$0xff]
    %v621 = vld [vmem:[#allocation2 + $0x1288] sm:$0xff]
    %v622 = vld [vmem:[#allocation2 + $0x1290] sm:$0xff]
    %v623 = vld [vmem:[#allocation2 + $0x1298] sm:$0xff]
    %v624 = vld [vmem:[#allocation2 + $0x12a0] sm:$0xff]
    %v625 = vld [vmem:[#allocation2 + $0x12a8] sm:$0xff]
    %v626 = vld [vmem:[#allocation2 + $0x12b0] sm:$0xff]
    %v627 = vld [vmem:[#allocation2 + $0x12b8] sm:$0xff]
    %v628 = vld [vmem:[#allocation2 + $0x12c0] sm:$0xff]
    %v629 = vld [vmem:[#allocation2 + $0x12c8] sm:$0xff]
    %v630 = vld [vmem:[#allocation2 + $0x12d0] sm:$0xff]
    %v631 = vld [vmem:[#allocation2 + $0x12d8] sm:$0xff]
    %v632 = vld [vmem:[#allocation2 + $0x12e0] sm:$0xff]
    %v633 = vld [vmem:[#allocation2 + $0x12e8] sm:$0xff]
    %v634 = vld [vmem:[#allocation2 + $0x12f0] sm:$0xff]
    %v635 = vld [vmem:[#allocation2 + $0x12f8] sm:$0xff]
    %v636 = vld [vmem:[#allocation2 + $0x1300] sm:$0xff]
    %v637 = vld [vmem:[#allocation2 + $0x1308] sm:$0xff]
    %v638 = vld [vmem:[#allocation2 + $0x1310] sm:$0xff]
    %v639 = vld [vmem:[#allocation2 + $0x1318] sm:$0xff]
    %v640 = vld [vmem:[#allocation2 + $0x1320] sm:$0xff]
    %v641 = vld [vmem:[#allocation2 + $0x1328] sm:$0xff]
    %v642 = vld [vmem:[#allocation2 + $0x1330] sm:$0xff]
    %v643 = vld [vmem:[#allocation2 + $0x1338] sm:$0xff]
    %v644 = vld [vmem:[#allocation2 + $0x1340] sm:$0xff]
    %v645 = vld [vmem:[#allocation2 + $0x1348] sm:$0xff]
    %v646 = vld [vmem:[#allocation2 + $0x1350] sm:$0xff]
    %v647 = vld [vmem:[#allocation2 + $0x1358] sm:$0xff]
    %v648 = vld [vmem:[#allocation2 + $0x1360] sm:$0xff]
    %v649 = vld [vmem:[#allocation2 + $0x1368] sm:$0xff]
    %v650 = vld [vmem:[#allocation2 + $0x1370] sm:$0xff]
    %v651 = vld [vmem:[#allocation2 + $0x1378] sm:$0xff]
    %v652 = vld [vmem:[#allocation2 + $0x1380] sm:$0xff]
    %v653 = vld [vmem:[#allocation2 + $0x1388] sm:$0xff]
    %v654 = vld [vmem:[#allocation2 + $0x1390] sm:$0xff]
    %v655 = vld [vmem:[#allocation2 + $0x1398] sm:$0xff]
    %v656 = vld [vmem:[#allocation2 + $0x13a0] sm:$0xff]
    %v657 = vld [vmem:[#allocation2 + $0x13a8] sm:$0xff]
    %v658 = vld [vmem:[#allocation2 + $0x13b0] sm:$0xff]
    %v659 = vld [vmem:[#allocation2 + $0x13b8] sm:$0xff]
    %v660 = vld [vmem:[#allocation2 + $0x13c0] sm:$0xff]
    %v661 = vld [vmem:[#allocation2 + $0x13c8] sm:$0xff]
    %v662 = vld [vmem:[#allocation2 + $0x13d0] sm:$0xff]
    %v663 = vld [vmem:[#allocation2 + $0x13d8] sm:$0xff]
    %v664 = vld [vmem:[#allocation2 + $0x13e0] sm:$0xff]
    %v665 = vld [vmem:[#allocation2 + $0x13e8] sm:$0xff]
    %v666 = vld [vmem:[#allocation2 + $0x13f0] sm:$0xff]
    %v667 = vld [vmem:[#allocation2 + $0x13f8] sm:$0xff]
    %v668 = vld [vmem:[#allocation2 + $0x1400] sm:$0xff]
    %v669 = vld [vmem:[#allocation2 + $0x1408] sm:$0xff]
    %v670 = vld [vmem:[#allocation2 + $0x1410] sm:$0xff]
    %v671 = vld [vmem:[#allocation2 + $0x1418] sm:$0xff]
    %v672 = vld [vmem:[#allocation2 + $0x1420] sm:$0xff]
    %v673 = vld [vmem:[#allocation2 + $0x1428] sm:$0xff]
    %v674 = vld [vmem:[#allocation2 + $0x1430] sm:$0xff]
    %v675 = vld [vmem:[#allocation2 + $0x1438] sm:$0xff]
    %v676 = vld [vmem:[#allocation2 + $0x1440] sm:$0xff]
    %v677 = vld [vmem:[#allocation2 + $0x1448] sm:$0xff]
    %v678 = vld [vmem:[#allocation2 + $0x1450] sm:$0xff]
    %v679 = vld [vmem:[#allocation2 + $0x1458] sm:$0xff]
    %v680 = vld [vmem:[#allocation2 + $0x1460] sm:$0xff]
    %v681 = vld [vmem:[#allocation2 + $0x1468] sm:$0xff]
    %v682 = vld [vmem:[#allocation2 + $0x1470] sm:$0xff]
    %v683 = vld [vmem:[#allocation2 + $0x1478] sm:$0xff]
    %v684 = vld [vmem:[#allocation2 + $0x1480] sm:$0xff]
    %v685 = vld [vmem:[#allocation2 + $0x1488] sm:$0xff]
    %v686 = vld [vmem:[#allocation2 + $0x1490] sm:$0xff]
    %v687 = vld [vmem:[#allocation2 + $0x1498] sm:$0xff]
    %v688 = vld [vmem:[#allocation2 + $0x14a0] sm:$0xff]
    %v689 = vld [vmem:[#allocation2 + $0x14a8] sm:$0xff]
    %v690 = vld [vmem:[#allocation2 + $0x14b0] sm:$0xff]
    %v691 = vld [vmem:[#allocation2 + $0x14b8] sm:$0xff]
    %v692 = vld [vmem:[#allocation2 + $0x14c0] sm:$0xff]
    %v693 = vld [vmem:[#allocation2 + $0x14c8] sm:$0xff]
    %v694 = vld [vmem:[#allocation2 + $0x14d0] sm:$0xff]
    %v695 = vld [vmem:[#allocation2 + $0x14d8] sm:$0xff]
    %v696 = vld [vmem:[#allocation2 + $0x14e0] sm:$0xff]
    %v697 = vld [vmem:[#allocation2 + $0x14e8] sm:$0xff]
    %v698 = vld [vmem:[#allocation2 + $0x14f0] sm:$0xff]
    %v699 = vld [vmem:[#allocation2 + $0x14f8] sm:$0xff]
    %v700 = vld [vmem:[#allocation2 + $0x1500] sm:$0xff]
    %v701 = vld [vmem:[#allocation2 + $0x1508] sm:$0xff]
    %v702 = vld [vmem:[#allocation2 + $0x1510] sm:$0xff]
    %v703 = vld [vmem:[#allocation2 + $0x1518] sm:$0xff]
    %v704 = vld [vmem:[#allocation2 + $0x1520] sm:$0xff]
    %v705 = vld [vmem:[#allocation2 + $0x1528] sm:$0xff]
    %v706 = vld [vmem:[#allocation2 + $0x1530] sm:$0xff]
    %v707 = vld [vmem:[#allocation2 + $0x1538] sm:$0xff]
    %v708 = vld [vmem:[#allocation2 + $0x1540] sm:$0xff]
    %v709 = vld [vmem:[#allocation2 + $0x1548] sm:$0xff]
    %v710 = vld [vmem:[#allocation2 + $0x1550] sm:$0xff]
    %v711 = vld [vmem:[#allocation2 + $0x1558] sm:$0xff]
    %v712 = vld [vmem:[#allocation2 + $0x1560] sm:$0xff]
    %v713 = vld [vmem:[#allocation2 + $0x1568] sm:$0xff]
    %v714 = vld [vmem:[#allocation2 + $0x1570] sm:$0xff]
    %v715 = vld [vmem:[#allocation2 + $0x1578] sm:$0xff]
    %v716 = vld [vmem:[#allocation2 + $0x1580] sm:$0xff]
    %v717 = vld [vmem:[#allocation2 + $0x1588] sm:$0xff]
    %v718 = vld [vmem:[#allocation2 + $0x1590] sm:$0xff]
    %v719 = vld [vmem:[#allocation2 + $0x1598] sm:$0xff]
    %v720 = vld [vmem:[#allocation2 + $0x15a0] sm:$0xff]
    %v721 = vld [vmem:[#allocation2 + $0x15a8] sm:$0xff]
    %v722 = vld [vmem:[#allocation2 + $0x15b0] sm:$0xff]
    %v723 = vld [vmem:[#allocation2 + $0x15b8] sm:$0xff]
    %v724 = vld [vmem:[#allocation2 + $0x15c0] sm:$0xff]
    %v725 = vld [vmem:[#allocation2 + $0x15c8] sm:$0xff]
    %v726 = vld [vmem:[#allocation2 + $0x15d0] sm:$0xff]
    %v727 = vld [vmem:[#allocation2 + $0x15d8] sm:$0xff]
    %v728 = vld [vmem:[#allocation2 + $0x15e0] sm:$0xff]
    %v729 = vld [vmem:[#allocation2 + $0x15e8] sm:$0xff]
    %v730 = vld [vmem:[#allocation2 + $0x15f0] sm:$0xff]
    %v731 = vld [vmem:[#allocation2 + $0x15f8] sm:$0xff]
    %v732 = vld [vmem:[#allocation2 + $0x1600] sm:$0xff]
    %v733 = vld [vmem:[#allocation2 + $0x1608] sm:$0xff]
    %v734 = vld [vmem:[#allocation2 + $0x1610] sm:$0xff]
    %v735 = vld [vmem:[#allocation2 + $0x1618] sm:$0xff]
    %v736 = vld [vmem:[#allocation2 + $0x1620] sm:$0xff]
    %v737 = vld [vmem:[#allocation2 + $0x1628] sm:$0xff]
    %v738 = vld [vmem:[#allocation2 + $0x1630] sm:$0xff]
    %v739 = vld [vmem:[#allocation2 + $0x1638] sm:$0xff]
    %v740 = vld [vmem:[#allocation2 + $0x1640] sm:$0xff]
    %v741 = vld [vmem:[#allocation2 + $0x1648] sm:$0xff]
    %v742 = vld [vmem:[#allocation2 + $0x1650] sm:$0xff]
    %v743 = vld [vmem:[#allocation2 + $0x1658] sm:$0xff]
    %v744 = vld [vmem:[#allocation2 + $0x1660] sm:$0xff]
    %v745 = vld [vmem:[#allocation2 + $0x1668] sm:$0xff]
    %v746 = vld [vmem:[#allocation2 + $0x1670] sm:$0xff]
    %v747 = vld [vmem:[#allocation2 + $0x1678] sm:$0xff]
    %v748 = vld [vmem:[#allocation2 + $0x1680] sm:$0xff]
    %v749 = vld [vmem:[#allocation2 + $0x1688] sm:$0xff]
    %v750 = vld [vmem:[#allocation2 + $0x1690] sm:$0xff]
    %v751 = vld [vmem:[#allocation2 + $0x1698] sm:$0xff]
    %v752 = vld [vmem:[#allocation2 + $0x16a0] sm:$0xff]
    %v753 = vld [vmem:[#allocation2 + $0x16a8] sm:$0xff]
    %v754 = vld [vmem:[#allocation2 + $0x16b0] sm:$0xff]
    %v755 = vld [vmem:[#allocation2 + $0x16b8] sm:$0xff]
    %v756 = vld [vmem:[#allocation2 + $0x16c0] sm:$0xff]
    %v757 = vld [vmem:[#allocation2 + $0x16c8] sm:$0xff]
    %v758 = vld [vmem:[#allocation2 + $0x16d0] sm:$0xff]
    %v759 = vld [vmem:[#allocation2 + $0x16d8] sm:$0xff]
    %v760 = vld [vmem:[#allocation2 + $0x16e0] sm:$0xff]
    %v761 = vld [vmem:[#allocation2 + $0x16e8] sm:$0xff]
    %v762 = vld [vmem:[#allocation2 + $0x16f0] sm:$0xff]
    %v763 = vld [vmem:[#allocation2 + $0x16f8] sm:$0xff]
    %v764 = vld [vmem:[#allocation2 + $0x1700] sm:$0xff]
    %v765 = vld [vmem:[#allocation2 + $0x1708] sm:$0xff]
    %v766 = vld [vmem:[#allocation2 + $0x1710] sm:$0xff]
    %v767 = vld [vmem:[#allocation2 + $0x1718] sm:$0xff]
    %v768 = vld [vmem:[#allocation2 + $0x1720] sm:$0xff]
    %v769 = vld [vmem:[#allocation2 + $0x1728] sm:$0xff]
    %v770 = vld [vmem:[#allocation2 + $0x1730] sm:$0xff]
    %v771 = vld [vmem:[#allocation2 + $0x1738] sm:$0xff]
    %v772 = vld [vmem:[#allocation2 + $0x1740] sm:$0xff]
    %v773 = vld [vmem:[#allocation2 + $0x1748] sm:$0xff]
    %v774 = vld [vmem:[#allocation2 + $0x1750] sm:$0xff]
    %v775 = vld [vmem:[#allocation2 + $0x1758] sm:$0xff]
    %v776 = vld [vmem:[#allocation2 + $0x1760] sm:$0xff]
    %v777 = vld [vmem:[#allocation2 + $0x1768] sm:$0xff]
    %v778 = vld [vmem:[#allocation2 + $0x1770] sm:$0xff]
    %v779 = vld [vmem:[#allocation2 + $0x1778] sm:$0xff]
    %v780 = vld [vmem:[#allocation2 + $0x1780] sm:$0xff]
    %v781 = vld [vmem:[#allocation2 + $0x1788] sm:$0xff]
    %v782 = vld [vmem:[#allocation2 + $0x1790] sm:$0xff]
    %v783 = vld [vmem:[#allocation2 + $0x1798] sm:$0xff]
    %v784 = vld [vmem:[#allocation2 + $0x17a0] sm:$0xff]
    %v785 = vld [vmem:[#allocation2 + $0x17a8] sm:$0xff]
    %v786 = vld [vmem:[#allocation2 + $0x17b0] sm:$0xff]
    %v787 = vld [vmem:[#allocation2 + $0x17b8] sm:$0xff]
    %v788 = vld [vmem:[#allocation2 + $0x17c0] sm:$0xff]
    %v789 = vld [vmem:[#allocation2 + $0x17c8] sm:$0xff]
    %v790 = vld [vmem:[#allocation2 + $0x17d0] sm:$0xff]
    %v791 = vld [vmem:[#allocation2 + $0x17d8] sm:$0xff]
    %v792 = vld [vmem:[#allocation2 + $0x17e0] sm:$0xff]
    %v793 = vld [vmem:[#allocation2 + $0x17e8] sm:$0xff]
    %v794 = vld [vmem:[#allocation2 + $0x17f0] sm:$0xff]
    %v795 = vld [vmem:[#allocation2 + $0x17f8] sm:$0xff]
    %v796 = vld [vmem:[#allocation2 + $0x1800] sm:$0xff]
    %v797 = vld [vmem:[#allocation2 + $0x1808] sm:$0xff]
    %v798 = vld [vmem:[#allocation2 + $0x1810] sm:$0xff]
    %v799 = vld [vmem:[#allocation2 + $0x1818] sm:$0xff]
    %v800 = vld [vmem:[#allocation2 + $0x1820] sm:$0xff]
    %v801 = vld [vmem:[#allocation2 + $0x1828] sm:$0xff]
    %v802 = vld [vmem:[#allocation2 + $0x1830] sm:$0xff]
    %v803 = vld [vmem:[#allocation2 + $0x1838] sm:$0xff]
    %v804 = vld [vmem:[#allocation2 + $0x1840] sm:$0xff]
    %v805 = vld [vmem:[#allocation2 + $0x1848] sm:$0xff]
    %v806 = vld [vmem:[#allocation2 + $0x1850] sm:$0xff]
    %v807 = vld [vmem:[#allocation2 + $0x1858] sm:$0xff]
    %v808 = vld [vmem:[#allocation2 + $0x1860] sm:$0xff]
    %v809 = vld [vmem:[#allocation2 + $0x1868] sm:$0xff]
    %v810 = vld [vmem:[#allocation2 + $0x1870] sm:$0xff]
    %v811 = vld [vmem:[#allocation2 + $0x1878] sm:$0xff]
    %v812 = vld [vmem:[#allocation2 + $0x1880] sm:$0xff]
    %v813 = vld [vmem:[#allocation2 + $0x1888] sm:$0xff]
    %v814 = vld [vmem:[#allocation2 + $0x1890] sm:$0xff]
    %v815 = vld [vmem:[#allocation2 + $0x1898] sm:$0xff]
    %v816 = vld [vmem:[#allocation2 + $0x18a0] sm:$0xff]
    %v817 = vld [vmem:[#allocation2 + $0x18a8] sm:$0xff]
    %v818 = vld [vmem:[#allocation2 + $0x18b0] sm:$0xff]
    %v819 = vld [vmem:[#allocation2 + $0x18b8] sm:$0xff]
    %v820 = vld [vmem:[#allocation2 + $0x18c0] sm:$0xff]
    %v821 = vld [vmem:[#allocation2 + $0x18c8] sm:$0xff]
    %v822 = vld [vmem:[#allocation2 + $0x18d0] sm:$0xff]
    %v823 = vld [vmem:[#allocation2 + $0x18d8] sm:$0xff]
    %v824 = vld [vmem:[#allocation2 + $0x18e0] sm:$0xff]
    %v825 = vld [vmem:[#allocation2 + $0x18e8] sm:$0xff]
    %v826 = vld [vmem:[#allocation2 + $0x18f0] sm:$0xff]
    %v827 = vld [vmem:[#allocation2 + $0x18f8] sm:$0xff]
    %v828 = vld [vmem:[#allocation2 + $0x1900] sm:$0xff]
    %v829 = vld [vmem:[#allocation2 + $0x1908] sm:$0xff]
    %v830 = vld [vmem:[#allocation2 + $0x1910] sm:$0xff]
    %v831 = vld [vmem:[#allocation2 + $0x1918] sm:$0xff]
    %v832 = vld [vmem:[#allocation2 + $0x1920] sm:$0xff]
    %v833 = vld [vmem:[#allocation2 + $0x1928] sm:$0xff]
    %v834 = vld [vmem:[#allocation2 + $0x1930] sm:$0xff]
    %v835 = vld [vmem:[#allocation2 + $0x1938] sm:$0xff]
    %v836 = vld [vmem:[#allocation2 + $0x1940] sm:$0xff]
    %v837 = vld [vmem:[#allocation2 + $0x1948] sm:$0xff]
    %v838 = vld [vmem:[#allocation2 + $0x1950] sm:$0xff]
    %v839 = vld [vmem:[#allocation2 + $0x1958] sm:$0xff]
    %v840 = vld [vmem:[#allocation2 + $0x1960] sm:$0xff]
    %v841 = vld [vmem:[#allocation2 + $0x1968] sm:$0xff]
    %v842 = vld [vmem:[#allocation2 + $0x1970] sm:$0xff]
    %v843 = vld [vmem:[#allocation2 + $0x1978] sm:$0xff]
    %v844 = vld [vmem:[#allocation2 + $0x1980] sm:$0xff]
    %v845 = vld [vmem:[#allocation2 + $0x1988] sm:$0xff]
    %v846 = vld [vmem:[#allocation2 + $0x1990] sm:$0xff]
    %v847 = vld [vmem:[#allocation2 + $0x1998] sm:$0xff]
    %v848 = vld [vmem:[#allocation2 + $0x19a0] sm:$0xff]
    %v849 = vld [vmem:[#allocation2 + $0x19a8] sm:$0xff]
    %v850 = vld [vmem:[#allocation2 + $0x19b0] sm:$0xff]
    %v851 = vld [vmem:[#allocation2 + $0x19b8] sm:$0xff]
    %v852 = vld [vmem:[#allocation2 + $0x19c0] sm:$0xff]
    %v853 = vld [vmem:[#allocation2 + $0x19c8] sm:$0xff]
    %v854 = vld [vmem:[#allocation2 + $0x19d0] sm:$0xff]
    %v855 = vld [vmem:[#allocation2 + $0x19d8] sm:$0xff]
    %v856 = vld [vmem:[#allocation2 + $0x19e0] sm:$0xff]
    %v857 = vld [vmem:[#allocation2 + $0x19e8] sm:$0xff]
    %v858 = vld [vmem:[#allocation2 + $0x19f0] sm:$0xff]
    %v859 = vld [vmem:[#allocation2 + $0x19f8] sm:$0xff]
    %v860 = vld [vmem:[#allocation2 + $0x1a00] sm:$0xff]
    %v861 = vld [vmem:[#allocation2 + $0x1a08] sm:$0xff]
    %v862 = vld [vmem:[#allocation2 + $0x1a10] sm:$0xff]
    %v863 = vld [vmem:[#allocation2 + $0x1a18] sm:$0xff]
    %v864 = vld [vmem:[#allocation2 + $0x1a20] sm:$0xff]
    %v865 = vld [vmem:[#allocation2 + $0x1a28] sm:$0xff]
    %v866 = vld [vmem:[#allocation2 + $0x1a30] sm:$0xff]
    %v867 = vld [vmem:[#allocation2 + $0x1a38] sm:$0xff]
    %v868 = vld [vmem:[#allocation2 + $0x1a40] sm:$0xff]
    %v869 = vld [vmem:[#allocation2 + $0x1a48] sm:$0xff]
    %v870 = vld [vmem:[#allocation2 + $0x1a50] sm:$0xff]
    %v871 = vld [vmem:[#allocation2 + $0x1a58] sm:$0xff]
    %v872 = vld [vmem:[#allocation2 + $0x1a60] sm:$0xff]
    %v873 = vld [vmem:[#allocation2 + $0x1a68] sm:$0xff]
    %v874 = vld [vmem:[#allocation2 + $0x1a70] sm:$0xff]
    %v875 = vld [vmem:[#allocation2 + $0x1a78] sm:$0xff]
    %v876 = vld [vmem:[#allocation2 + $0x1a80] sm:$0xff]
    %v877 = vld [vmem:[#allocation2 + $0x1a88] sm:$0xff]
    %v878 = vld [vmem:[#allocation2 + $0x1a90] sm:$0xff]
    %v879 = vld [vmem:[#allocation2 + $0x1a98] sm:$0xff]
    %v880 = vld [vmem:[#allocation2 + $0x1aa0] sm:$0xff]
    %v881 = vld [vmem:[#allocation2 + $0x1aa8] sm:$0xff]
    %v882 = vld [vmem:[#allocation2 + $0x1ab0] sm:$0xff]
    %v883 = vld [vmem:[#allocation2 + $0x1ab8] sm:$0xff]
    %v884 = vld [vmem:[#allocation2 + $0x1ac0] sm:$0xff]
    %v885 = vld [vmem:[#allocation2 + $0x1ac8] sm:$0xff]
    %v886 = vld [vmem:[#allocation2 + $0x1ad0] sm:$0xff]
    %v887 = vld [vmem:[#allocation2 + $0x1ad8] sm:$0xff]
    %v888 = vld [vmem:[#allocation2 + $0x1ae0] sm:$0xff]
    %v889 = vld [vmem:[#allocation2 + $0x1ae8] sm:$0xff]
    %v890 = vld [vmem:[#allocation2 + $0x1af0] sm:$0xff]
    %v891 = vld [vmem:[#allocation2 + $0x1af8] sm:$0xff]
    %v892 = vld [vmem:[#allocation2 + $0x1b00] sm:$0xff]
    %v893 = vld [vmem:[#allocation2 + $0x1b08] sm:$0xff]
    %v894 = vld [vmem:[#allocation2 + $0x1b10] sm:$0xff]
    %v895 = vld [vmem:[#allocation2 + $0x1b18] sm:$0xff]
    %v896 = vld [vmem:[#allocation2 + $0x1b20] sm:$0xff]
    %v897 = vld [vmem:[#allocation2 + $0x1b28] sm:$0xff]
    %v898 = vld [vmem:[#allocation2 + $0x1b30] sm:$0xff]
    %v899 = vld [vmem:[#allocation2 + $0x1b38] sm:$0xff]
    %v900 = vld [vmem:[#allocation2 + $0x1b40] sm:$0xff]
    %v901 = vld [vmem:[#allocation2 + $0x1b48] sm:$0xff]
    %v902 = vld [vmem:[#allocation2 + $0x1b50] sm:$0xff]
    %v903 = vld [vmem:[#allocation2 + $0x1b58] sm:$0xff]
    %v904 = vld [vmem:[#allocation2 + $0x1b60] sm:$0xff]
    %v905 = vld [vmem:[#allocation2 + $0x1b68] sm:$0xff]
    %v906 = vld [vmem:[#allocation2 + $0x1b70] sm:$0xff]
    %v907 = vld [vmem:[#allocation2 + $0x1b78] sm:$0xff]
    %v908 = vld [vmem:[#allocation2 + $0x1b80] sm:$0xff]
    %v909 = vld [vmem:[#allocation2 + $0x1b88] sm:$0xff]
    %v910 = vld [vmem:[#allocation2 + $0x1b90] sm:$0xff]
    %v911 = vld [vmem:[#allocation2 + $0x1b98] sm:$0xff]
    %v912 = vld [vmem:[#allocation2 + $0x1ba0] sm:$0xff]
    %v913 = vld [vmem:[#allocation2 + $0x1ba8] sm:$0xff]
    %v914 = vld [vmem:[#allocation2 + $0x1bb0] sm:$0xff]
    %v915 = vld [vmem:[#allocation2 + $0x1bb8] sm:$0xff]
    %v916 = vld [vmem:[#allocation2 + $0x1bc0] sm:$0xff]
    %v917 = vld [vmem:[#allocation2 + $0x1bc8] sm:$0xff]
    %v918 = vld [vmem:[#allocation2 + $0x1bd0] sm:$0xff]
    %v919 = vld [vmem:[#allocation2 + $0x1bd8] sm:$0xff]
    %v920 = vld [vmem:[#allocation2 + $0x1be0] sm:$0xff]
    %v921 = vld [vmem:[#allocation2 + $0x1be8] sm:$0xff]
    %v922 = vld [vmem:[#allocation2 + $0x1bf0] sm:$0xff]
    %v923 = vld [vmem:[#allocation2 + $0x1bf8] sm:$0xff]
    %v924 = vld [vmem:[#allocation2 + $0x1c00] sm:$0xff]
    %v925 = vld [vmem:[#allocation2 + $0x1c08] sm:$0xff]
    %v926 = vld [vmem:[#allocation2 + $0x1c10] sm:$0xff]
    %v927 = vld [vmem:[#allocation2 + $0x1c18] sm:$0xff]
    %v928 = vld [vmem:[#allocation2 + $0x1c20] sm:$0xff]
    %v929 = vld [vmem:[#allocation2 + $0x1c28] sm:$0xff]
    %v930 = vld [vmem:[#allocation2 + $0x1c30] sm:$0xff]
    %v931 = vld [vmem:[#allocation2 + $0x1c38] sm:$0xff]
    %v932 = vld [vmem:[#allocation2 + $0x1c40] sm:$0xff]
    %v933 = vld [vmem:[#allocation2 + $0x1c48] sm:$0xff]
    %v934 = vld [vmem:[#allocation2 + $0x1c50] sm:$0xff]
    %v935 = vld [vmem:[#allocation2 + $0x1c58] sm:$0xff]
    %v936 = vld [vmem:[#allocation2 + $0x1c60] sm:$0xff]
    %v937 = vld [vmem:[#allocation2 + $0x1c68] sm:$0xff]
    %v938 = vld [vmem:[#allocation2 + $0x1c70] sm:$0xff]
    %v939 = vld [vmem:[#allocation2 + $0x1c78] sm:$0xff]
    %v940 = vld [vmem:[#allocation2 + $0x1c80] sm:$0xff]
    %v941 = vld [vmem:[#allocation2 + $0x1c88] sm:$0xff]
    %v942 = vld [vmem:[#allocation2 + $0x1c90] sm:$0xff]
    %v943 = vld [vmem:[#allocation2 + $0x1c98] sm:$0xff]
    %v944 = vld [vmem:[#allocation2 + $0x1ca0] sm:$0xff]
    %v945 = vld [vmem:[#allocation2 + $0x1ca8] sm:$0xff]
    %v946 = vld [vmem:[#allocation2 + $0x1cb0] sm:$0xff]
    %v947 = vld [vmem:[#allocation2 + $0x1cb8] sm:$0xff]
    %v948 = vld [vmem:[#allocation2 + $0x1cc0] sm:$0xff]
    %v949 = vld [vmem:[#allocation2 + $0x1cc8] sm:$0xff]
    %v950 = vld [vmem:[#allocation2 + $0x1cd0] sm:$0xff]
    %v951 = vld [vmem:[#allocation2 + $0x1cd8] sm:$0xff]
    %v952 = vld [vmem:[#allocation2 + $0x1ce0] sm:$0xff]
    %v953 = vld [vmem:[#allocation2 + $0x1ce8] sm:$0xff]
    %v954 = vld [vmem:[#allocation2 + $0x1cf0] sm:$0xff]
    %v955 = vld [vmem:[#allocation2 + $0x1cf8] sm:$0xff]
    %v956 = vld [vmem:[#allocation2 + $0x1d00] sm:$0xff]
    %v957 = vld [vmem:[#allocation2 + $0x1d08] sm:$0xff]
    %v958 = vld [vmem:[#allocation2 + $0x1d10] sm:$0xff]
    %v959 = vld [vmem:[#allocation2 + $0x1d18] sm:$0xff]
    %v960 = vld [vmem:[#allocation2 + $0x1d20] sm:$0xff]
    %v961 = vld [vmem:[#allocation2 + $0x1d28] sm:$0xff]
    %v962 = vld [vmem:[#allocation2 + $0x1d30] sm:$0xff]
    %v963 = vld [vmem:[#allocation2 + $0x1d38] sm:$0xff]
    %v964 = vld [vmem:[#allocation2 + $0x1d40] sm:$0xff]
    %v965 = vld [vmem:[#allocation2 + $0x1d48] sm:$0xff]
    %v966 = vld [vmem:[#allocation2 + $0x1d50] sm:$0xff]
    %v967 = vld [vmem:[#allocation2 + $0x1d58] sm:$0xff]
    %v968 = vld [vmem:[#allocation2 + $0x1d60] sm:$0xff]
    %v969 = vld [vmem:[#allocation2 + $0x1d68] sm:$0xff]
    %v970 = vld [vmem:[#allocation2 + $0x1d70] sm:$0xff]
    %v971 = vld [vmem:[#allocation2 + $0x1d78] sm:$0xff]
    %v972 = vld [vmem:[#allocation2 + $0x1d80] sm:$0xff]
    %v973 = vld [vmem:[#allocation2 + $0x1d88] sm:$0xff]
    %v974 = vld [vmem:[#allocation2 + $0x1d90] sm:$0xff]
    %v975 = vld [vmem:[#allocation2 + $0x1d98] sm:$0xff]
    %v976 = vld [vmem:[#allocation2 + $0x1da0] sm:$0xff]
    %v977 = vld [vmem:[#allocation2 + $0x1da8] sm:$0xff]
    %v978 = vld [vmem:[#allocation2 + $0x1db0] sm:$0xff]
    %v979 = vld [vmem:[#allocation2 + $0x1db8] sm:$0xff]
    %v980 = vld [vmem:[#allocation2 + $0x1dc0] sm:$0xff]
    %v981 = vld [vmem:[#allocation2 + $0x1dc8] sm:$0xff]
    %v982 = vld [vmem:[#allocation2 + $0x1dd0] sm:$0xff]
    %v983 = vld [vmem:[#allocation2 + $0x1dd8] sm:$0xff]
    %v984 = vld [vmem:[#allocation2 + $0x1de0] sm:$0xff]
    %v985 = vld [vmem:[#allocation2 + $0x1de8] sm:$0xff]
    %v986 = vld [vmem:[#allocation2 + $0x1df0] sm:$0xff]
    %v987 = vld [vmem:[#allocation2 + $0x1df8] sm:$0xff]
    %v988 = vld [vmem:[#allocation2 + $0x1e00] sm:$0xff]
    %v989 = vld [vmem:[#allocation2 + $0x1e08] sm:$0xff]
    %v990 = vld [vmem:[#allocation2 + $0x1e10] sm:$0xff]
    %v991 = vld [vmem:[#allocation2 + $0x1e18] sm:$0xff]
    %v992 = vld [vmem:[#allocation2 + $0x1e20] sm:$0xff]
    %v993 = vld [vmem:[#allocation2 + $0x1e28] sm:$0xff]
    %v994 = vld [vmem:[#allocation2 + $0x1e30] sm:$0xff]
    %v995 = vld [vmem:[#allocation2 + $0x1e38] sm:$0xff]
    %v996 = vld [vmem:[#allocation2 + $0x1e40] sm:$0xff]
    %v997 = vld [vmem:[#allocation2 + $0x1e48] sm:$0xff]
    %v998 = vld [vmem:[#allocation2 + $0x1e50] sm:$0xff]
    %v999 = vld [vmem:[#allocation2 + $0x1e58] sm:$0xff]
    %v1000 = vld [vmem:[#allocation2 + $0x1e60] sm:$0xff]
    %v1001 = vld [vmem:[#allocation2 + $0x1e68] sm:$0xff]
    %v1002 = vld [vmem:[#allocation2 + $0x1e70] sm:$0xff]
    %v1003 = vld [vmem:[#allocation2 + $0x1e78] sm:$0xff]
    %v1004 = vld [vmem:[#allocation2 + $0x1e80] sm:$0xff]
    %v1005 = vld [vmem:[#allocation2 + $0x1e88] sm:$0xff]
    %v1006 = vld [vmem:[#allocation2 + $0x1e90] sm:$0xff]
    %v1007 = vld [vmem:[#allocation2 + $0x1e98] sm:$0xff]
    %v1008 = vld [vmem:[#allocation2 + $0x1ea0] sm:$0xff]
    %v1009 = vld [vmem:[#allocation2 + $0x1ea8] sm:$0xff]
    %v1010 = vld [vmem:[#allocation2 + $0x1eb0] sm:$0xff]
    %v1011 = vld [vmem:[#allocation2 + $0x1eb8] sm:$0xff]
    %v1012 = vld [vmem:[#allocation2 + $0x1ec0] sm:$0xff]
    %v1013 = vld [vmem:[#allocation2 + $0x1ec8] sm:$0xff]
    %v1014 = vld [vmem:[#allocation2 + $0x1ed0] sm:$0xff]
    %v1015 = vld [vmem:[#allocation2 + $0x1ed8] sm:$0xff]
    %v1016 = vld [vmem:[#allocation2 + $0x1ee0] sm:$0xff]
    %v1017 = vld [vmem:[#allocation2 + $0x1ee8] sm:$0xff]
    %v1018 = vld [vmem:[#allocation2 + $0x1ef0] sm:$0xff]
    %v1019 = vld [vmem:[#allocation2 + $0x1ef8] sm:$0xff]
    %v1020 = vld [vmem:[#allocation2 + $0x1f00] sm:$0xff]
    %v1021 = vld [vmem:[#allocation2 + $0x1f08] sm:$0xff]
    %v1022 = vld [vmem:[#allocation2 + $0x1f10] sm:$0xff]
    %v1023 = vld [vmem:[#allocation2 + $0x1f18] sm:$0xff]
    %v1024 = vld [vmem:[#allocation2 + $0x1f20] sm:$0xff]
    %v1025 = vld [vmem:[#allocation2 + $0x1f28] sm:$0xff]
    %v1026 = vld [vmem:[#allocation2 + $0x1f30] sm:$0xff]
    %v1027 = vld [vmem:[#allocation2 + $0x1f38] sm:$0xff]
    %v1028 = vld [vmem:[#allocation2 + $0x1f40] sm:$0xff]
    %v1029 = vld [vmem:[#allocation2 + $0x1f48] sm:$0xff]
    %v1030 = vld [vmem:[#allocation2 + $0x1f50] sm:$0xff]
    %v1031 = vld [vmem:[#allocation2 + $0x1f58] sm:$0xff]
    %v1032 = vld [vmem:[#allocation2 + $0x1f60] sm:$0xff]
    %v1033 = vld [vmem:[#allocation2 + $0x1f68] sm:$0xff]
    %v1034 = vld [vmem:[#allocation2 + $0x1f70] sm:$0xff]
    %v1035 = vld [vmem:[#allocation2 + $0x1f78] sm:$0xff]
    %v1036 = vld [vmem:[#allocation2 + $0x1f80] sm:$0xff]
    %v1037 = vld [vmem:[#allocation2 + $0x1f88] sm:$0xff]
    %v1038 = vld [vmem:[#allocation2 + $0x1f90] sm:$0xff]
    %v1039 = vld [vmem:[#allocation2 + $0x1f98] sm:$0xff]
    %v1040 = vld [vmem:[#allocation2 + $0x1fa0] sm:$0xff]
    %v1041 = vld [vmem:[#allocation2 + $0x1fa8] sm:$0xff]
    %v1042 = vld [vmem:[#allocation2 + $0x1fb0] sm:$0xff]
    %v1043 = vld [vmem:[#allocation2 + $0x1fb8] sm:$0xff]
    %v1044 = vld [vmem:[#allocation2 + $0x1fc0] sm:$0xff]
    %v1045 = vld [vmem:[#allocation2 + $0x1fc8] sm:$0xff]
    %v1046 = vld [vmem:[#allocation2 + $0x1fd0] sm:$0xff]
    %v1047 = vld [vmem:[#allocation2 + $0x1fd8] sm:$0xff]
    %v1048 = vld [vmem:[#allocation2 + $0x1fe0] sm:$0xff]
    %v1049 = vld [vmem:[#allocation2 + $0x1fe8] sm:$0xff]
    %v1050 = vld [vmem:[#allocation2 + $0x1ff0] sm:$0xff]
    %v1051 = vld [vmem:[#allocation2 + $0x1ff8] sm:$0xff]
    %v1052 = vld [vmem:[%s1] sm:$0xff]
    %v1053 = vld [vmem:[%s1 + $0x8] sm:$0xff]
    %v1054 = vld [vmem:[%s1 + $0x10] sm:$0xff]
    %v1055 = vld [vmem:[%s1 + $0x18] sm:$0xff]
    %v1056 = vld [vmem:[%s1 + $0x20] sm:$0xff]
    %v1057 = vld [vmem:[%s1 + $0x28] sm:$0xff]
    %v1058 = vld [vmem:[%s1 + $0x30] sm:$0xff]
    %v1059 = vld [vmem:[%s1 + $0x38] sm:$0xff]
    %v1060 = vld [vmem:[%s1 + $0x40] sm:$0xff]
    %v1061 = vld [vmem:[%s1 + $0x48] sm:$0xff]
    %v1062 = vld [vmem:[%s1 + $0x50] sm:$0xff]
    %v1063 = vld [vmem:[%s1 + $0x58] sm:$0xff]
    %v1064 = vld [vmem:[%s1 + $0x60] sm:$0xff]
    %v1065 = vld [vmem:[%s1 + $0x68] sm:$0xff]
    %v1066 = vld [vmem:[%s1 + $0x70] sm:$0xff]
    %v1067 = vld [vmem:[%s1 + $0x78] sm:$0xff]
    %v1068 = vld [vmem:[%s1 + $0x80] sm:$0xff]
    %v1069 = vld [vmem:[%s1 + $0x88] sm:$0xff]
    %v1070 = vld [vmem:[%s1 + $0x90] sm:$0xff]
    %v1071 = vld [vmem:[%s1 + $0x98] sm:$0xff]
    %v1072 = vld [vmem:[%s1 + $0xa0] sm:$0xff]
    %v1073 = vld [vmem:[%s1 + $0xa8] sm:$0xff]
    %v1074 = vld [vmem:[%s1 + $0xb0] sm:$0xff]
    %v1075 = vld [vmem:[%s1 + $0xb8] sm:$0xff]
    %v1076 = vld [vmem:[%s1 + $0xc0] sm:$0xff]
    %v1077 = vld [vmem:[%s1 + $0xc8] sm:$0xff]
    %v1078 = vld [vmem:[%s1 + $0xd0] sm:$0xff]
    %v1079 = vld [vmem:[%s1 + $0xd8] sm:$0xff]
    %v1080 = vld [vmem:[%s1 + $0xe0] sm:$0xff]
    %v1081 = vld [vmem:[%s1 + $0xe8] sm:$0xff]
    %v1082 = vld [vmem:[%s1 + $0xf0] sm:$0xff]
    %v1083 = vld [vmem:[%s1 + $0xf8] sm:$0xff]
    %1085 = vset.pattern.permute.xlu0 0
    %1086 = vperm.xlu0 %1085, %v1052
    %v1087 = vpop.permute.xlu0 %1086
    %1090 = vset.pattern.permute.xlu0 0
    %1091 = vperm.xlu0 %1090, %v1053
    %v1092 = vpop.permute.xlu0 %1091
    %1095 = vset.pattern.permute.xlu0 0
    %1096 = vperm.xlu0 %1095, %v1054
    %v1097 = vpop.permute.xlu0 %1096
    %1100 = vset.pattern.permute.xlu0 0
    %1101 = vperm.xlu0 %1100, %v1055
    %v1102 = vpop.permute.xlu0 %1101
    %1105 = vset.pattern.permute.xlu0 0
    %1106 = vperm.xlu0 %1105, %v1056
    %v1107 = vpop.permute.xlu0 %1106
    %1110 = vset.pattern.permute.xlu0 0
    %1111 = vperm.xlu0 %1110, %v1057
    %v1112 = vpop.permute.xlu0 %1111
    %1115 = vset.pattern.permute.xlu0 0
    %1116 = vperm.xlu0 %1115, %v1058
    %v1117 = vpop.permute.xlu0 %1116
    %1120 = vset.pattern.permute.xlu0 0
    %1121 = vperm.xlu0 %1120, %v1059
    %v1122 = vpop.permute.xlu0 %1121
    %1125 = vset.pattern.permute.xlu0 0
    %1126 = vperm.xlu0 %1125, %v1060
    %v1127 = vpop.permute.xlu0 %1126
    %1130 = vset.pattern.permute.xlu0 0
    %1131 = vperm.xlu0 %1130, %v1061
    %v1132 = vpop.permute.xlu0 %1131
    %1135 = vset.pattern.permute.xlu0 0
    %1136 = vperm.xlu0 %1135, %v1062
    %v1137 = vpop.permute.xlu0 %1136
    %1140 = vset.pattern.permute.xlu0 0
    %1141 = vperm.xlu0 %1140, %v1063
    %v1142 = vpop.permute.xlu0 %1141
    %1145 = vset.pattern.permute.xlu0 0
    %1146 = vperm.xlu0 %1145, %v1064
    %v1147 = vpop.permute.xlu0 %1146
    %1150 = vset.pattern.permute.xlu0 0
    %1151 = vperm.xlu0 %1150, %v1065
    %v1152 = vpop.permute.xlu0 %1151
    %1155 = vset.pattern.permute.xlu0 0
    %1156 = vperm.xlu0 %1155, %v1066
    %v1157 = vpop.permute.xlu0 %1156
    %1160 = vset.pattern.permute.xlu0 0
    %1161 = vperm.xlu0 %1160, %v1067
    %v1162 = vpop.permute.xlu0 %1161
    %1165 = vset.pattern.permute.xlu0 0
    %1166 = vperm.xlu0 %1165, %v1068
    %v1167 = vpop.permute.xlu0 %1166
    %1170 = vset.pattern.permute.xlu0 0
    %1171 = vperm.xlu0 %1170, %v1069
    %v1172 = vpop.permute.xlu0 %1171
    %1175 = vset.pattern.permute.xlu0 0
    %1176 = vperm.xlu0 %1175, %v1070
    %v1177 = vpop.permute.xlu0 %1176
    %1180 = vset.pattern.permute.xlu0 0
    %1181 = vperm.xlu0 %1180, %v1071
    %v1182 = vpop.permute.xlu0 %1181
    %1185 = vset.pattern.permute.xlu0 0
    %1186 = vperm.xlu0 %1185, %v1072
    %v1187 = vpop.permute.xlu0 %1186
    %1190 = vset.pattern.permute.xlu0 0
    %1191 = vperm.xlu0 %1190, %v1073
    %v1192 = vpop.permute.xlu0 %1191
    %1195 = vset.pattern.permute.xlu0 0
    %1196 = vperm.xlu0 %1195, %v1074
    %v1197 = vpop.permute.xlu0 %1196
    %1200 = vset.pattern.permute.xlu0 0
    %1201 = vperm.xlu0 %1200, %v1075
    %v1202 = vpop.permute.xlu0 %1201
    %1205 = vset.pattern.permute.xlu0 0
    %1206 = vperm.xlu0 %1205, %v1076
    %v1207 = vpop.permute.xlu0 %1206
    %1210 = vset.pattern.permute.xlu0 0
    %1211 = vperm.xlu0 %1210, %v1077
    %v1212 = vpop.permute.xlu0 %1211
    %1215 = vset.pattern.permute.xlu0 0
    %1216 = vperm.xlu0 %1215, %v1078
    %v1217 = vpop.permute.xlu0 %1216
    %1220 = vset.pattern.permute.xlu0 0
    %1221 = vperm.xlu0 %1220, %v1079
    %v1222 = vpop.permute.xlu0 %1221
    %1225 = vset.pattern.permute.xlu0 0
    %1226 = vperm.xlu0 %1225, %v1080
    %v1227 = vpop.permute.xlu0 %1226
    %1230 = vset.pattern.permute.xlu0 0
    %1231 = vperm.xlu0 %1230, %v1081
    %v1232 = vpop.permute.xlu0 %1231
    %1235 = vset.pattern.permute.xlu0 0
    %1236 = vperm.xlu0 %1235, %v1082
    %v1237 = vpop.permute.xlu0 %1236
    %1240 = vset.pattern.permute.xlu0 0
    %1241 = vperm.xlu0 %1240, %v1083
    %v1242 = vpop.permute.xlu0 %1241
    %v1244 = vadd.f32 %v28, %v1087
    %v1245 = vadd.f32 %v29, %v1087
    %v1246 = vadd.f32 %v30, %v1087
    %v1247 = vadd.f32 %v31, %v1087
    %v1248 = vadd.f32 %v32, %v1087
    %v1249 = vadd.f32 %v33, %v1087
    %v1250 = vadd.f32 %v34, %v1087
    %v1251 = vadd.f32 %v35, %v1087
    %v1252 = vadd.f32 %v36, %v1087
    %v1253 = vadd.f32 %v37, %v1087
    %v1254 = vadd.f32 %v38, %v1087
    %v1255 = vadd.f32 %v39, %v1087
    %v1256 = vadd.f32 %v40, %v1087
    %v1257 = vadd.f32 %v41, %v1087
    %v1258 = vadd.f32 %v42, %v1087
    %v1259 = vadd.f32 %v43, %v1087
    %v1260 = vadd.f32 %v44, %v1087
    %v1261 = vadd.f32 %v45, %v1087
    %v1262 = vadd.f32 %v46, %v1087
    %v1263 = vadd.f32 %v47, %v1087
    %v1264 = vadd.f32 %v48, %v1087
    %v1265 = vadd.f32 %v49, %v1087
    %v1266 = vadd.f32 %v50, %v1087
    %v1267 = vadd.f32 %v51, %v1087
    %v1268 = vadd.f32 %v52, %v1087
    %v1269 = vadd.f32 %v53, %v1087
    %v1270 = vadd.f32 %v54, %v1087
    %v1271 = vadd.f32 %v55, %v1087
    %v1272 = vadd.f32 %v56, %v1087
    %v1273 = vadd.f32 %v57, %v1087
    %v1274 = vadd.f32 %v58, %v1087
    %v1275 = vadd.f32 %v59, %v1087
    %v1276 = vadd.f32 %v60, %v1092
    %v1277 = vadd.f32 %v61, %v1092
    %v1278 = vadd.f32 %v62, %v1092
    %v1279 = vadd.f32 %v63, %v1092
    %v1280 = vadd.f32 %v64, %v1092
    %v1281 = vadd.f32 %v65, %v1092
    %v1282 = vadd.f32 %v66, %v1092
    %v1283 = vadd.f32 %v67, %v1092
    %v1284 = vadd.f32 %v68, %v1092
    %v1285 = vadd.f32 %v69, %v1092
    %v1286 = vadd.f32 %v70, %v1092
    %v1287 = vadd.f32 %v71, %v1092
    %v1288 = vadd.f32 %v72, %v1092
    %v1289 = vadd.f32 %v73, %v1092
    %v1290 = vadd.f32 %v74, %v1092
    %v1291 = vadd.f32 %v75, %v1092
    %v1292 = vadd.f32 %v76, %v1092
    %v1293 = vadd.f32 %v77, %v1092
    %v1294 = vadd.f32 %v78, %v1092
    %v1295 = vadd.f32 %v79, %v1092
    %v1296 = vadd.f32 %v80, %v1092
    %v1297 = vadd.f32 %v81, %v1092
    %v1298 = vadd.f32 %v82, %v1092
    %v1299 = vadd.f32 %v83, %v1092
    %v1300 = vadd.f32 %v84, %v1092
    %v1301 = vadd.f32 %v85, %v1092
    %v1302 = vadd.f32 %v86, %v1092
    %v1303 = vadd.f32 %v87, %v1092
    %v1304 = vadd.f32 %v88, %v1092
    %v1305 = vadd.f32 %v89, %v1092
    %v1306 = vadd.f32 %v90, %v1092
    %v1307 = vadd.f32 %v91, %v1092
    %v1308 = vadd.f32 %v92, %v1097
    %v1309 = vadd.f32 %v93, %v1097
    %v1310 = vadd.f32 %v94, %v1097
    %v1311 = vadd.f32 %v95, %v1097
    %v1312 = vadd.f32 %v96, %v1097
    %v1313 = vadd.f32 %v97, %v1097
    %v1314 = vadd.f32 %v98, %v1097
    %v1315 = vadd.f32 %v99, %v1097
    %v1316 = vadd.f32 %v100, %v1097
    %v1317 = vadd.f32 %v101, %v1097
    %v1318 = vadd.f32 %v102, %v1097
    %v1319 = vadd.f32 %v103, %v1097
    %v1320 = vadd.f32 %v104, %v1097
    %v1321 = vadd.f32 %v105, %v1097
    %v1322 = vadd.f32 %v106, %v1097
    %v1323 = vadd.f32 %v107, %v1097
    %v1324 = vadd.f32 %v108, %v1097
    %v1325 = vadd.f32 %v109, %v1097
    %v1326 = vadd.f32 %v110, %v1097
    %v1327 = vadd.f32 %v111, %v1097
    %v1328 = vadd.f32 %v112, %v1097
    %v1329 = vadd.f32 %v113, %v1097
    %v1330 = vadd.f32 %v114, %v1097
    %v1331 = vadd.f32 %v115, %v1097
    %v1332 = vadd.f32 %v116, %v1097
    %v1333 = vadd.f32 %v117, %v1097
    %v1334 = vadd.f32 %v118, %v1097
    %v1335 = vadd.f32 %v119, %v1097
    %v1336 = vadd.f32 %v120, %v1097
    %v1337 = vadd.f32 %v121, %v1097
    %v1338 = vadd.f32 %v122, %v1097
    %v1339 = vadd.f32 %v123, %v1097
    %v1340 = vadd.f32 %v124, %v1102
    %v1341 = vadd.f32 %v125, %v1102
    %v1342 = vadd.f32 %v126, %v1102
    %v1343 = vadd.f32 %v127, %v1102
    %v1344 = vadd.f32 %v128, %v1102
    %v1345 = vadd.f32 %v129, %v1102
    %v1346 = vadd.f32 %v130, %v1102
    %v1347 = vadd.f32 %v131, %v1102
    %v1348 = vadd.f32 %v132, %v1102
    %v1349 = vadd.f32 %v133, %v1102
    %v1350 = vadd.f32 %v134, %v1102
    %v1351 = vadd.f32 %v135, %v1102
    %v1352 = vadd.f32 %v136, %v1102
    %v1353 = vadd.f32 %v137, %v1102
    %v1354 = vadd.f32 %v138, %v1102
    %v1355 = vadd.f32 %v139, %v1102
    %v1356 = vadd.f32 %v140, %v1102
    %v1357 = vadd.f32 %v141, %v1102
    %v1358 = vadd.f32 %v142, %v1102
    %v1359 = vadd.f32 %v143, %v1102
    %v1360 = vadd.f32 %v144, %v1102
    %v1361 = vadd.f32 %v145, %v1102
    %v1362 = vadd.f32 %v146, %v1102
    %v1363 = vadd.f32 %v147, %v1102
    %v1364 = vadd.f32 %v148, %v1102
    %v1365 = vadd.f32 %v149, %v1102
    %v1366 = vadd.f32 %v150, %v1102
    %v1367 = vadd.f32 %v151, %v1102
    %v1368 = vadd.f32 %v152, %v1102
    %v1369 = vadd.f32 %v153, %v1102
    %v1370 = vadd.f32 %v154, %v1102
    %v1371 = vadd.f32 %v155, %v1102
    %v1372 = vadd.f32 %v156, %v1107
    %v1373 = vadd.f32 %v157, %v1107
    %v1374 = vadd.f32 %v158, %v1107
    %v1375 = vadd.f32 %v159, %v1107
    %v1376 = vadd.f32 %v160, %v1107
    %v1377 = vadd.f32 %v161, %v1107
    %v1378 = vadd.f32 %v162, %v1107
    %v1379 = vadd.f32 %v163, %v1107
    %v1380 = vadd.f32 %v164, %v1107
    %v1381 = vadd.f32 %v165, %v1107
    %v1382 = vadd.f32 %v166, %v1107
    %v1383 = vadd.f32 %v167, %v1107
    %v1384 = vadd.f32 %v168, %v1107
    %v1385 = vadd.f32 %v169, %v1107
    %v1386 = vadd.f32 %v170, %v1107
    %v1387 = vadd.f32 %v171, %v1107
    %v1388 = vadd.f32 %v172, %v1107
    %v1389 = vadd.f32 %v173, %v1107
    %v1390 = vadd.f32 %v174, %v1107
    %v1391 = vadd.f32 %v175, %v1107
    %v1392 = vadd.f32 %v176, %v1107
    %v1393 = vadd.f32 %v177, %v1107
    %v1394 = vadd.f32 %v178, %v1107
    %v1395 = vadd.f32 %v179, %v1107
    %v1396 = vadd.f32 %v180, %v1107
    %v1397 = vadd.f32 %v181, %v1107
    %v1398 = vadd.f32 %v182, %v1107
    %v1399 = vadd.f32 %v183, %v1107
    %v1400 = vadd.f32 %v184, %v1107
    %v1401 = vadd.f32 %v185, %v1107
    %v1402 = vadd.f32 %v186, %v1107
    %v1403 = vadd.f32 %v187, %v1107
    %v1404 = vadd.f32 %v188, %v1112
    %v1405 = vadd.f32 %v189, %v1112
    %v1406 = vadd.f32 %v190, %v1112
    %v1407 = vadd.f32 %v191, %v1112
    %v1408 = vadd.f32 %v192, %v1112
    %v1409 = vadd.f32 %v193, %v1112
    %v1410 = vadd.f32 %v194, %v1112
    %v1411 = vadd.f32 %v195, %v1112
    %v1412 = vadd.f32 %v196, %v1112
    %v1413 = vadd.f32 %v197, %v1112
    %v1414 = vadd.f32 %v198, %v1112
    %v1415 = vadd.f32 %v199, %v1112
    %v1416 = vadd.f32 %v200, %v1112
    %v1417 = vadd.f32 %v201, %v1112
    %v1418 = vadd.f32 %v202, %v1112
    %v1419 = vadd.f32 %v203, %v1112
    %v1420 = vadd.f32 %v204, %v1112
    %v1421 = vadd.f32 %v205, %v1112
    %v1422 = vadd.f32 %v206, %v1112
    %v1423 = vadd.f32 %v207, %v1112
    %v1424 = vadd.f32 %v208, %v1112
    %v1425 = vadd.f32 %v209, %v1112
    %v1426 = vadd.f32 %v210, %v1112
    %v1427 = vadd.f32 %v211, %v1112
    %v1428 = vadd.f32 %v212, %v1112
    %v1429 = vadd.f32 %v213, %v1112
    %v1430 = vadd.f32 %v214, %v1112
    %v1431 = vadd.f32 %v215, %v1112
    %v1432 = vadd.f32 %v216, %v1112
    %v1433 = vadd.f32 %v217, %v1112
    %v1434 = vadd.f32 %v218, %v1112
    %v1435 = vadd.f32 %v219, %v1112
    %v1436 = vadd.f32 %v220, %v1117
    %v1437 = vadd.f32 %v221, %v1117
    %v1438 = vadd.f32 %v222, %v1117
    %v1439 = vadd.f32 %v223, %v1117
    %v1440 = vadd.f32 %v224, %v1117
    %v1441 = vadd.f32 %v225, %v1117
    %v1442 = vadd.f32 %v226, %v1117
    %v1443 = vadd.f32 %v227, %v1117
    %v1444 = vadd.f32 %v228, %v1117
    %v1445 = vadd.f32 %v229, %v1117
    %v1446 = vadd.f32 %v230, %v1117
    %v1447 = vadd.f32 %v231, %v1117
    %v1448 = vadd.f32 %v232, %v1117
    %v1449 = vadd.f32 %v233, %v1117
    %v1450 = vadd.f32 %v234, %v1117
    %v1451 = vadd.f32 %v235, %v1117
    %v1452 = vadd.f32 %v236, %v1117
    %v1453 = vadd.f32 %v237, %v1117
    %v1454 = vadd.f32 %v238, %v1117
    %v1455 = vadd.f32 %v239, %v1117
    %v1456 = vadd.f32 %v240, %v1117
    %v1457 = vadd.f32 %v241, %v1117
    %v1458 = vadd.f32 %v242, %v1117
    %v1459 = vadd.f32 %v243, %v1117
    %v1460 = vadd.f32 %v244, %v1117
    %v1461 = vadd.f32 %v245, %v1117
    %v1462 = vadd.f32 %v246, %v1117
    %v1463 = vadd.f32 %v247, %v1117
    %v1464 = vadd.f32 %v248, %v1117
    %v1465 = vadd.f32 %v249, %v1117
    %v1466 = vadd.f32 %v250, %v1117
    %v1467 = vadd.f32 %v251, %v1117
    %v1468 = vadd.f32 %v252, %v1122
    %v1469 = vadd.f32 %v253, %v1122
    %v1470 = vadd.f32 %v254, %v1122
    %v1471 = vadd.f32 %v255, %v1122
    %v1472 = vadd.f32 %v256, %v1122
    %v1473 = vadd.f32 %v257, %v1122
    %v1474 = vadd.f32 %v258, %v1122
    %v1475 = vadd.f32 %v259, %v1122
    %v1476 = vadd.f32 %v260, %v1122
    %v1477 = vadd.f32 %v261, %v1122
    %v1478 = vadd.f32 %v262, %v1122
    %v1479 = vadd.f32 %v263, %v1122
    %v1480 = vadd.f32 %v264, %v1122
    %v1481 = vadd.f32 %v265, %v1122
    %v1482 = vadd.f32 %v266, %v1122
    %v1483 = vadd.f32 %v267, %v1122
    %v1484 = vadd.f32 %v268, %v1122
    %v1485 = vadd.f32 %v269, %v1122
    %v1486 = vadd.f32 %v270, %v1122
    %v1487 = vadd.f32 %v271, %v1122
    %v1488 = vadd.f32 %v272, %v1122
    %v1489 = vadd.f32 %v273, %v1122
    %v1490 = vadd.f32 %v274, %v1122
    %v1491 = vadd.f32 %v275, %v1122
    %v1492 = vadd.f32 %v276, %v1122
    %v1493 = vadd.f32 %v277, %v1122
    %v1494 = vadd.f32 %v278, %v1122
    %v1495 = vadd.f32 %v279, %v1122
    %v1496 = vadd.f32 %v280, %v1122
    %v1497 = vadd.f32 %v281, %v1122
    %v1498 = vadd.f32 %v282, %v1122
    %v1499 = vadd.f32 %v283, %v1122
    %v1500 = vadd.f32 %v284, %v1127
    %v1501 = vadd.f32 %v285, %v1127
    %v1502 = vadd.f32 %v286, %v1127
    %v1503 = vadd.f32 %v287, %v1127
    %v1504 = vadd.f32 %v288, %v1127
    %v1505 = vadd.f32 %v289, %v1127
    %v1506 = vadd.f32 %v290, %v1127
    %v1507 = vadd.f32 %v291, %v1127
    %v1508 = vadd.f32 %v292, %v1127
    %v1509 = vadd.f32 %v293, %v1127
    %v1510 = vadd.f32 %v294, %v1127
    %v1511 = vadd.f32 %v295, %v1127
    %v1512 = vadd.f32 %v296, %v1127
    %v1513 = vadd.f32 %v297, %v1127
    %v1514 = vadd.f32 %v298, %v1127
    %v1515 = vadd.f32 %v299, %v1127
    %v1516 = vadd.f32 %v300, %v1127
    %v1517 = vadd.f32 %v301, %v1127
    %v1518 = vadd.f32 %v302, %v1127
    %v1519 = vadd.f32 %v303, %v1127
    %v1520 = vadd.f32 %v304, %v1127
    %v1521 = vadd.f32 %v305, %v1127
    %v1522 = vadd.f32 %v306, %v1127
    %v1523 = vadd.f32 %v307, %v1127
    %v1524 = vadd.f32 %v308, %v1127
    %v1525 = vadd.f32 %v309, %v1127
    %v1526 = vadd.f32 %v310, %v1127
    %v1527 = vadd.f32 %v311, %v1127
    %v1528 = vadd.f32 %v312, %v1127
    %v1529 = vadd.f32 %v313, %v1127
    %v1530 = vadd.f32 %v314, %v1127
    %v1531 = vadd.f32 %v315, %v1127
    %v1532 = vadd.f32 %v316, %v1132
    %v1533 = vadd.f32 %v317, %v1132
    %v1534 = vadd.f32 %v318, %v1132
    %v1535 = vadd.f32 %v319, %v1132
    %v1536 = vadd.f32 %v320, %v1132
    %v1537 = vadd.f32 %v321, %v1132
    %v1538 = vadd.f32 %v322, %v1132
    %v1539 = vadd.f32 %v323, %v1132
    %v1540 = vadd.f32 %v324, %v1132
    %v1541 = vadd.f32 %v325, %v1132
    %v1542 = vadd.f32 %v326, %v1132
    %v1543 = vadd.f32 %v327, %v1132
    %v1544 = vadd.f32 %v328, %v1132
    %v1545 = vadd.f32 %v329, %v1132
    %v1546 = vadd.f32 %v330, %v1132
    %v1547 = vadd.f32 %v331, %v1132
    %v1548 = vadd.f32 %v332, %v1132
    %v1549 = vadd.f32 %v333, %v1132
    %v1550 = vadd.f32 %v334, %v1132
    %v1551 = vadd.f32 %v335, %v1132
    %v1552 = vadd.f32 %v336, %v1132
    %v1553 = vadd.f32 %v337, %v1132
    %v1554 = vadd.f32 %v338, %v1132
    %v1555 = vadd.f32 %v339, %v1132
    %v1556 = vadd.f32 %v340, %v1132
    %v1557 = vadd.f32 %v341, %v1132
    %v1558 = vadd.f32 %v342, %v1132
    %v1559 = vadd.f32 %v343, %v1132
    %v1560 = vadd.f32 %v344, %v1132
    %v1561 = vadd.f32 %v345, %v1132
    %v1562 = vadd.f32 %v346, %v1132
    %v1563 = vadd.f32 %v347, %v1132
    %v1564 = vadd.f32 %v348, %v1137
    %v1565 = vadd.f32 %v349, %v1137
    %v1566 = vadd.f32 %v350, %v1137
    %v1567 = vadd.f32 %v351, %v1137
    %v1568 = vadd.f32 %v352, %v1137
    %v1569 = vadd.f32 %v353, %v1137
    %v1570 = vadd.f32 %v354, %v1137
    %v1571 = vadd.f32 %v355, %v1137
    %v1572 = vadd.f32 %v356, %v1137
    %v1573 = vadd.f32 %v357, %v1137
    %v1574 = vadd.f32 %v358, %v1137
    %v1575 = vadd.f32 %v359, %v1137
    %v1576 = vadd.f32 %v360, %v1137
    %v1577 = vadd.f32 %v361, %v1137
    %v1578 = vadd.f32 %v362, %v1137
    %v1579 = vadd.f32 %v363, %v1137
    %v1580 = vadd.f32 %v364, %v1137
    %v1581 = vadd.f32 %v365, %v1137
    %v1582 = vadd.f32 %v366, %v1137
    %v1583 = vadd.f32 %v367, %v1137
    %v1584 = vadd.f32 %v368, %v1137
    %v1585 = vadd.f32 %v369, %v1137
    %v1586 = vadd.f32 %v370, %v1137
    %v1587 = vadd.f32 %v371, %v1137
    %v1588 = vadd.f32 %v372, %v1137
    %v1589 = vadd.f32 %v373, %v1137
    %v1590 = vadd.f32 %v374, %v1137
    %v1591 = vadd.f32 %v375, %v1137
    %v1592 = vadd.f32 %v376, %v1137
    %v1593 = vadd.f32 %v377, %v1137
    %v1594 = vadd.f32 %v378, %v1137
    %v1595 = vadd.f32 %v379, %v1137
    %v1596 = vadd.f32 %v380, %v1142
    %v1597 = vadd.f32 %v381, %v1142
    %v1598 = vadd.f32 %v382, %v1142
    %v1599 = vadd.f32 %v383, %v1142
    %v1600 = vadd.f32 %v384, %v1142
    %v1601 = vadd.f32 %v385, %v1142
    %v1602 = vadd.f32 %v386, %v1142
    %v1603 = vadd.f32 %v387, %v1142
    %v1604 = vadd.f32 %v388, %v1142
    %v1605 = vadd.f32 %v389, %v1142
    %v1606 = vadd.f32 %v390, %v1142
    %v1607 = vadd.f32 %v391, %v1142
    %v1608 = vadd.f32 %v392, %v1142
    %v1609 = vadd.f32 %v393, %v1142
    %v1610 = vadd.f32 %v394, %v1142
    %v1611 = vadd.f32 %v395, %v1142
    %v1612 = vadd.f32 %v396, %v1142
    %v1613 = vadd.f32 %v397, %v1142
    %v1614 = vadd.f32 %v398, %v1142
    %v1615 = vadd.f32 %v399, %v1142
    %v1616 = vadd.f32 %v400, %v1142
    %v1617 = vadd.f32 %v401, %v1142
    %v1618 = vadd.f32 %v402, %v1142
    %v1619 = vadd.f32 %v403, %v1142
    %v1620 = vadd.f32 %v404, %v1142
    %v1621 = vadd.f32 %v405, %v1142
    %v1622 = vadd.f32 %v406, %v1142
    %v1623 = vadd.f32 %v407, %v1142
    %v1624 = vadd.f32 %v408, %v1142
    %v1625 = vadd.f32 %v409, %v1142
    %v1626 = vadd.f32 %v410, %v1142
    %v1627 = vadd.f32 %v411, %v1142
    %v1628 = vadd.f32 %v412, %v1147
    %v1629 = vadd.f32 %v413, %v1147
    %v1630 = vadd.f32 %v414, %v1147
    %v1631 = vadd.f32 %v415, %v1147
    %v1632 = vadd.f32 %v416, %v1147
    %v1633 = vadd.f32 %v417, %v1147
    %v1634 = vadd.f32 %v418, %v1147
    %v1635 = vadd.f32 %v419, %v1147
    %v1636 = vadd.f32 %v420, %v1147
    %v1637 = vadd.f32 %v421, %v1147
    %v1638 = vadd.f32 %v422, %v1147
    %v1639 = vadd.f32 %v423, %v1147
    %v1640 = vadd.f32 %v424, %v1147
    %v1641 = vadd.f32 %v425, %v1147
    %v1642 = vadd.f32 %v426, %v1147
    %v1643 = vadd.f32 %v427, %v1147
    %v1644 = vadd.f32 %v428, %v1147
    %v1645 = vadd.f32 %v429, %v1147
    %v1646 = vadd.f32 %v430, %v1147
    %v1647 = vadd.f32 %v431, %v1147
    %v1648 = vadd.f32 %v432, %v1147
    %v1649 = vadd.f32 %v433, %v1147
    %v1650 = vadd.f32 %v434, %v1147
    %v1651 = vadd.f32 %v435, %v1147
    %v1652 = vadd.f32 %v436, %v1147
    %v1653 = vadd.f32 %v437, %v1147
    %v1654 = vadd.f32 %v438, %v1147
    %v1655 = vadd.f32 %v439, %v1147
    %v1656 = vadd.f32 %v440, %v1147
    %v1657 = vadd.f32 %v441, %v1147
    %v1658 = vadd.f32 %v442, %v1147
    %v1659 = vadd.f32 %v443, %v1147
    %v1660 = vadd.f32 %v444, %v1152
    %v1661 = vadd.f32 %v445, %v1152
    %v1662 = vadd.f32 %v446, %v1152
    %v1663 = vadd.f32 %v447, %v1152
    %v1664 = vadd.f32 %v448, %v1152
    %v1665 = vadd.f32 %v449, %v1152
    %v1666 = vadd.f32 %v450, %v1152
    %v1667 = vadd.f32 %v451, %v1152
    %v1668 = vadd.f32 %v452, %v1152
    %v1669 = vadd.f32 %v453, %v1152
    %v1670 = vadd.f32 %v454, %v1152
    %v1671 = vadd.f32 %v455, %v1152
    %v1672 = vadd.f32 %v456, %v1152
    %v1673 = vadd.f32 %v457, %v1152
    %v1674 = vadd.f32 %v458, %v1152
    %v1675 = vadd.f32 %v459, %v1152
    %v1676 = vadd.f32 %v460, %v1152
    %v1677 = vadd.f32 %v461, %v1152
    %v1678 = vadd.f32 %v462, %v1152
    %v1679 = vadd.f32 %v463, %v1152
    %v1680 = vadd.f32 %v464, %v1152
    %v1681 = vadd.f32 %v465, %v1152
    %v1682 = vadd.f32 %v466, %v1152
    %v1683 = vadd.f32 %v467, %v1152
    %v1684 = vadd.f32 %v468, %v1152
    %v1685 = vadd.f32 %v469, %v1152
    %v1686 = vadd.f32 %v470, %v1152
    %v1687 = vadd.f32 %v471, %v1152
    %v1688 = vadd.f32 %v472, %v1152
    %v1689 = vadd.f32 %v473, %v1152
    %v1690 = vadd.f32 %v474, %v1152
    %v1691 = vadd.f32 %v475, %v1152
    %v1692 = vadd.f32 %v476, %v1157
    %v1693 = vadd.f32 %v477, %v1157
    %v1694 = vadd.f32 %v478, %v1157
    %v1695 = vadd.f32 %v479, %v1157
    %v1696 = vadd.f32 %v480, %v1157
    %v1697 = vadd.f32 %v481, %v1157
    %v1698 = vadd.f32 %v482, %v1157
    %v1699 = vadd.f32 %v483, %v1157
    %v1700 = vadd.f32 %v484, %v1157
    %v1701 = vadd.f32 %v485, %v1157
    %v1702 = vadd.f32 %v486, %v1157
    %v1703 = vadd.f32 %v487, %v1157
    %v1704 = vadd.f32 %v488, %v1157
    %v1705 = vadd.f32 %v489, %v1157
    %v1706 = vadd.f32 %v490, %v1157
    %v1707 = vadd.f32 %v491, %v1157
    %v1708 = vadd.f32 %v492, %v1157
    %v1709 = vadd.f32 %v493, %v1157
    %v1710 = vadd.f32 %v494, %v1157
    %v1711 = vadd.f32 %v495, %v1157
    %v1712 = vadd.f32 %v496, %v1157
    %v1713 = vadd.f32 %v497, %v1157
    %v1714 = vadd.f32 %v498, %v1157
    %v1715 = vadd.f32 %v499, %v1157
    %v1716 = vadd.f32 %v500, %v1157
    %v1717 = vadd.f32 %v501, %v1157
    %v1718 = vadd.f32 %v502, %v1157
    %v1719 = vadd.f32 %v503, %v1157
    %v1720 = vadd.f32 %v504, %v1157
    %v1721 = vadd.f32 %v505, %v1157
    %v1722 = vadd.f32 %v506, %v1157
    %v1723 = vadd.f32 %v507, %v1157
    %v1724 = vadd.f32 %v508, %v1162
    %v1725 = vadd.f32 %v509, %v1162
    %v1726 = vadd.f32 %v510, %v1162
    %v1727 = vadd.f32 %v511, %v1162
    %v1728 = vadd.f32 %v512, %v1162
    %v1729 = vadd.f32 %v513, %v1162
    %v1730 = vadd.f32 %v514, %v1162
    %v1731 = vadd.f32 %v515, %v1162
    %v1732 = vadd.f32 %v516, %v1162
    %v1733 = vadd.f32 %v517, %v1162
    %v1734 = vadd.f32 %v518, %v1162
    %v1735 = vadd.f32 %v519, %v1162
    %v1736 = vadd.f32 %v520, %v1162
    %v1737 = vadd.f32 %v521, %v1162
    %v1738 = vadd.f32 %v522, %v1162
    %v1739 = vadd.f32 %v523, %v1162
    %v1740 = vadd.f32 %v524, %v1162
    %v1741 = vadd.f32 %v525, %v1162
    %v1742 = vadd.f32 %v526, %v1162
    %v1743 = vadd.f32 %v527, %v1162
    %v1744 = vadd.f32 %v528, %v1162
    %v1745 = vadd.f32 %v529, %v1162
    %v1746 = vadd.f32 %v530, %v1162
    %v1747 = vadd.f32 %v531, %v1162
    %v1748 = vadd.f32 %v532, %v1162
    %v1749 = vadd.f32 %v533, %v1162
    %v1750 = vadd.f32 %v534, %v1162
    %v1751 = vadd.f32 %v535, %v1162
    %v1752 = vadd.f32 %v536, %v1162
    %v1753 = vadd.f32 %v537, %v1162
    %v1754 = vadd.f32 %v538, %v1162
    %v1755 = vadd.f32 %v539, %v1162
    %v1756 = vadd.f32 %v540, %v1167
    %v1757 = vadd.f32 %v541, %v1167
    %v1758 = vadd.f32 %v542, %v1167
    %v1759 = vadd.f32 %v543, %v1167
    %v1760 = vadd.f32 %v544, %v1167
    %v1761 = vadd.f32 %v545, %v1167
    %v1762 = vadd.f32 %v546, %v1167
    %v1763 = vadd.f32 %v547, %v1167
    %v1764 = vadd.f32 %v548, %v1167
    %v1765 = vadd.f32 %v549, %v1167
    %v1766 = vadd.f32 %v550, %v1167
    %v1767 = vadd.f32 %v551, %v1167
    %v1768 = vadd.f32 %v552, %v1167
    %v1769 = vadd.f32 %v553, %v1167
    %v1770 = vadd.f32 %v554, %v1167
    %v1771 = vadd.f32 %v555, %v1167
    %v1772 = vadd.f32 %v556, %v1167
    %v1773 = vadd.f32 %v557, %v1167
    %v1774 = vadd.f32 %v558, %v1167
    %v1775 = vadd.f32 %v559, %v1167
    %v1776 = vadd.f32 %v560, %v1167
    %v1777 = vadd.f32 %v561, %v1167
    %v1778 = vadd.f32 %v562, %v1167
    %v1779 = vadd.f32 %v563, %v1167
    %v1780 = vadd.f32 %v564, %v1167
    %v1781 = vadd.f32 %v565, %v1167
    %v1782 = vadd.f32 %v566, %v1167
    %v1783 = vadd.f32 %v567, %v1167
    %v1784 = vadd.f32 %v568, %v1167
    %v1785 = vadd.f32 %v569, %v1167
    %v1786 = vadd.f32 %v570, %v1167
    %v1787 = vadd.f32 %v571, %v1167
    %v1788 = vadd.f32 %v572, %v1172
    %v1789 = vadd.f32 %v573, %v1172
    %v1790 = vadd.f32 %v574, %v1172
    %v1791 = vadd.f32 %v575, %v1172
    %v1792 = vadd.f32 %v576, %v1172
    %v1793 = vadd.f32 %v577, %v1172
    %v1794 = vadd.f32 %v578, %v1172
    %v1795 = vadd.f32 %v579, %v1172
    %v1796 = vadd.f32 %v580, %v1172
    %v1797 = vadd.f32 %v581, %v1172
    %v1798 = vadd.f32 %v582, %v1172
    %v1799 = vadd.f32 %v583, %v1172
    %v1800 = vadd.f32 %v584, %v1172
    %v1801 = vadd.f32 %v585, %v1172
    %v1802 = vadd.f32 %v586, %v1172
    %v1803 = vadd.f32 %v587, %v1172
    %v1804 = vadd.f32 %v588, %v1172
    %v1805 = vadd.f32 %v589, %v1172
    %v1806 = vadd.f32 %v590, %v1172
    %v1807 = vadd.f32 %v591, %v1172
    %v1808 = vadd.f32 %v592, %v1172
    %v1809 = vadd.f32 %v593, %v1172
    %v1810 = vadd.f32 %v594, %v1172
    %v1811 = vadd.f32 %v595, %v1172
    %v1812 = vadd.f32 %v596, %v1172
    %v1813 = vadd.f32 %v597, %v1172
    %v1814 = vadd.f32 %v598, %v1172
    %v1815 = vadd.f32 %v599, %v1172
    %v1816 = vadd.f32 %v600, %v1172
    %v1817 = vadd.f32 %v601, %v1172
    %v1818 = vadd.f32 %v602, %v1172
    %v1819 = vadd.f32 %v603, %v1172
    %v1820 = vadd.f32 %v604, %v1177
    %v1821 = vadd.f32 %v605, %v1177
    %v1822 = vadd.f32 %v606, %v1177
    %v1823 = vadd.f32 %v607, %v1177
    %v1824 = vadd.f32 %v608, %v1177
    %v1825 = vadd.f32 %v609, %v1177
    %v1826 = vadd.f32 %v610, %v1177
    %v1827 = vadd.f32 %v611, %v1177
    %v1828 = vadd.f32 %v612, %v1177
    %v1829 = vadd.f32 %v613, %v1177
    %v1830 = vadd.f32 %v614, %v1177
    %v1831 = vadd.f32 %v615, %v1177
    %v1832 = vadd.f32 %v616, %v1177
    %v1833 = vadd.f32 %v617, %v1177
    %v1834 = vadd.f32 %v618, %v1177
    %v1835 = vadd.f32 %v619, %v1177
    %v1836 = vadd.f32 %v620, %v1177
    %v1837 = vadd.f32 %v621, %v1177
    %v1838 = vadd.f32 %v622, %v1177
    %v1839 = vadd.f32 %v623, %v1177
    %v1840 = vadd.f32 %v624, %v1177
    %v1841 = vadd.f32 %v625, %v1177
    %v1842 = vadd.f32 %v626, %v1177
    %v1843 = vadd.f32 %v627, %v1177
    %v1844 = vadd.f32 %v628, %v1177
    %v1845 = vadd.f32 %v629, %v1177
    %v1846 = vadd.f32 %v630, %v1177
    %v1847 = vadd.f32 %v631, %v1177
    %v1848 = vadd.f32 %v632, %v1177
    %v1849 = vadd.f32 %v633, %v1177
    %v1850 = vadd.f32 %v634, %v1177
    %v1851 = vadd.f32 %v635, %v1177
    %v1852 = vadd.f32 %v636, %v1182
    %v1853 = vadd.f32 %v637, %v1182
    %v1854 = vadd.f32 %v638, %v1182
    %v1855 = vadd.f32 %v639, %v1182
    %v1856 = vadd.f32 %v640, %v1182
    %v1857 = vadd.f32 %v641, %v1182
    %v1858 = vadd.f32 %v642, %v1182
    %v1859 = vadd.f32 %v643, %v1182
    %v1860 = vadd.f32 %v644, %v1182
    %v1861 = vadd.f32 %v645, %v1182
    %v1862 = vadd.f32 %v646, %v1182
    %v1863 = vadd.f32 %v647, %v1182
    %v1864 = vadd.f32 %v648, %v1182
    %v1865 = vadd.f32 %v649, %v1182
    %v1866 = vadd.f32 %v650, %v1182
    %v1867 = vadd.f32 %v651, %v1182
    %v1868 = vadd.f32 %v652, %v1182
    %v1869 = vadd.f32 %v653, %v1182
    %v1870 = vadd.f32 %v654, %v1182
    %v1871 = vadd.f32 %v655, %v1182
    %v1872 = vadd.f32 %v656, %v1182
    %v1873 = vadd.f32 %v657, %v1182
    %v1874 = vadd.f32 %v658, %v1182
    %v1875 = vadd.f32 %v659, %v1182
    %v1876 = vadd.f32 %v660, %v1182
    %v1877 = vadd.f32 %v661, %v1182
    %v1878 = vadd.f32 %v662, %v1182
    %v1879 = vadd.f32 %v663, %v1182
    %v1880 = vadd.f32 %v664, %v1182
    %v1881 = vadd.f32 %v665, %v1182
    %v1882 = vadd.f32 %v666, %v1182
    %v1883 = vadd.f32 %v667, %v1182
    %v1884 = vadd.f32 %v668, %v1187
    %v1885 = vadd.f32 %v669, %v1187
    %v1886 = vadd.f32 %v670, %v1187
    %v1887 = vadd.f32 %v671, %v1187
    %v1888 = vadd.f32 %v672, %v1187
    %v1889 = vadd.f32 %v673, %v1187
    %v1890 = vadd.f32 %v674, %v1187
    %v1891 = vadd.f32 %v675, %v1187
    %v1892 = vadd.f32 %v676, %v1187
    %v1893 = vadd.f32 %v677, %v1187
    %v1894 = vadd.f32 %v678, %v1187
    %v1895 = vadd.f32 %v679, %v1187
    %v1896 = vadd.f32 %v680, %v1187
    %v1897 = vadd.f32 %v681, %v1187
    %v1898 = vadd.f32 %v682, %v1187
    %v1899 = vadd.f32 %v683, %v1187
    %v1900 = vadd.f32 %v684, %v1187
    %v1901 = vadd.f32 %v685, %v1187
    %v1902 = vadd.f32 %v686, %v1187
    %v1903 = vadd.f32 %v687, %v1187
    %v1904 = vadd.f32 %v688, %v1187
    %v1905 = vadd.f32 %v689, %v1187
    %v1906 = vadd.f32 %v690, %v1187
    %v1907 = vadd.f32 %v691, %v1187
    %v1908 = vadd.f32 %v692, %v1187
    %v1909 = vadd.f32 %v693, %v1187
    %v1910 = vadd.f32 %v694, %v1187
    %v1911 = vadd.f32 %v695, %v1187
    %v1912 = vadd.f32 %v696, %v1187
    %v1913 = vadd.f32 %v697, %v1187
    %v1914 = vadd.f32 %v698, %v1187
    %v1915 = vadd.f32 %v699, %v1187
    %v1916 = vadd.f32 %v700, %v1192
    %v1917 = vadd.f32 %v701, %v1192
    %v1918 = vadd.f32 %v702, %v1192
    %v1919 = vadd.f32 %v703, %v1192
    %v1920 = vadd.f32 %v704, %v1192
    %v1921 = vadd.f32 %v705, %v1192
    %v1922 = vadd.f32 %v706, %v1192
    %v1923 = vadd.f32 %v707, %v1192
    %v1924 = vadd.f32 %v708, %v1192
    %v1925 = vadd.f32 %v709, %v1192
    %v1926 = vadd.f32 %v710, %v1192
    %v1927 = vadd.f32 %v711, %v1192
    %v1928 = vadd.f32 %v712, %v1192
    %v1929 = vadd.f32 %v713, %v1192
    %v1930 = vadd.f32 %v714, %v1192
    %v1931 = vadd.f32 %v715, %v1192
    %v1932 = vadd.f32 %v716, %v1192
    %v1933 = vadd.f32 %v717, %v1192
    %v1934 = vadd.f32 %v718, %v1192
    %v1935 = vadd.f32 %v719, %v1192
    %v1936 = vadd.f32 %v720, %v1192
    %v1937 = vadd.f32 %v721, %v1192
    %v1938 = vadd.f32 %v722, %v1192
    %v1939 = vadd.f32 %v723, %v1192
    %v1940 = vadd.f32 %v724, %v1192
    %v1941 = vadd.f32 %v725, %v1192
    %v1942 = vadd.f32 %v726, %v1192
    %v1943 = vadd.f32 %v727, %v1192
    %v1944 = vadd.f32 %v728, %v1192
    %v1945 = vadd.f32 %v729, %v1192
    %v1946 = vadd.f32 %v730, %v1192
    %v1947 = vadd.f32 %v731, %v1192
    %v1948 = vadd.f32 %v732, %v1197
    %v1949 = vadd.f32 %v733, %v1197
    %v1950 = vadd.f32 %v734, %v1197
    %v1951 = vadd.f32 %v735, %v1197
    %v1952 = vadd.f32 %v736, %v1197
    %v1953 = vadd.f32 %v737, %v1197
    %v1954 = vadd.f32 %v738, %v1197
    %v1955 = vadd.f32 %v739, %v1197
    %v1956 = vadd.f32 %v740, %v1197
    %v1957 = vadd.f32 %v741, %v1197
    %v1958 = vadd.f32 %v742, %v1197
    %v1959 = vadd.f32 %v743, %v1197
    %v1960 = vadd.f32 %v744, %v1197
    %v1961 = vadd.f32 %v745, %v1197
    %v1962 = vadd.f32 %v746, %v1197
    %v1963 = vadd.f32 %v747, %v1197
    %v1964 = vadd.f32 %v748, %v1197
    %v1965 = vadd.f32 %v749, %v1197
    %v1966 = vadd.f32 %v750, %v1197
    %v1967 = vadd.f32 %v751, %v1197
    %v1968 = vadd.f32 %v752, %v1197
    %v1969 = vadd.f32 %v753, %v1197
    %v1970 = vadd.f32 %v754, %v1197
    %v1971 = vadd.f32 %v755, %v1197
    %v1972 = vadd.f32 %v756, %v1197
    %v1973 = vadd.f32 %v757, %v1197
    %v1974 = vadd.f32 %v758, %v1197
    %v1975 = vadd.f32 %v759, %v1197
    %v1976 = vadd.f32 %v760, %v1197
    %v1977 = vadd.f32 %v761, %v1197
    %v1978 = vadd.f32 %v762, %v1197
    %v1979 = vadd.f32 %v763, %v1197
    %v1980 = vadd.f32 %v764, %v1202
    %v1981 = vadd.f32 %v765, %v1202
    %v1982 = vadd.f32 %v766, %v1202
    %v1983 = vadd.f32 %v767, %v1202
    %v1984 = vadd.f32 %v768, %v1202
    %v1985 = vadd.f32 %v769, %v1202
    %v1986 = vadd.f32 %v770, %v1202
    %v1987 = vadd.f32 %v771, %v1202
    %v1988 = vadd.f32 %v772, %v1202
    %v1989 = vadd.f32 %v773, %v1202
    %v1990 = vadd.f32 %v774, %v1202
    %v1991 = vadd.f32 %v775, %v1202
    %v1992 = vadd.f32 %v776, %v1202
    %v1993 = vadd.f32 %v777, %v1202
    %v1994 = vadd.f32 %v778, %v1202
    %v1995 = vadd.f32 %v779, %v1202
    %v1996 = vadd.f32 %v780, %v1202
    %v1997 = vadd.f32 %v781, %v1202
    %v1998 = vadd.f32 %v782, %v1202
    %v1999 = vadd.f32 %v783, %v1202
    %v2000 = vadd.f32 %v784, %v1202
    %v2001 = vadd.f32 %v785, %v1202
    %v2002 = vadd.f32 %v786, %v1202
    %v2003 = vadd.f32 %v787, %v1202
    %v2004 = vadd.f32 %v788, %v1202
    %v2005 = vadd.f32 %v789, %v1202
    %v2006 = vadd.f32 %v790, %v1202
    %v2007 = vadd.f32 %v791, %v1202
    %v2008 = vadd.f32 %v792, %v1202
    %v2009 = vadd.f32 %v793, %v1202
    %v2010 = vadd.f32 %v794, %v1202
    %v2011 = vadd.f32 %v795, %v1202
    %v2012 = vadd.f32 %v796, %v1207
    %v2013 = vadd.f32 %v797, %v1207
    %v2014 = vadd.f32 %v798, %v1207
    %v2015 = vadd.f32 %v799, %v1207
    %v2016 = vadd.f32 %v800, %v1207
    %v2017 = vadd.f32 %v801, %v1207
    %v2018 = vadd.f32 %v802, %v1207
    %v2019 = vadd.f32 %v803, %v1207
    %v2020 = vadd.f32 %v804, %v1207
    %v2021 = vadd.f32 %v805, %v1207
    %v2022 = vadd.f32 %v806, %v1207
    %v2023 = vadd.f32 %v807, %v1207
    %v2024 = vadd.f32 %v808, %v1207
    %v2025 = vadd.f32 %v809, %v1207
    %v2026 = vadd.f32 %v810, %v1207
    %v2027 = vadd.f32 %v811, %v1207
    %v2028 = vadd.f32 %v812, %v1207
    %v2029 = vadd.f32 %v813, %v1207
    %v2030 = vadd.f32 %v814, %v1207
    %v2031 = vadd.f32 %v815, %v1207
    %v2032 = vadd.f32 %v816, %v1207
    %v2033 = vadd.f32 %v817, %v1207
    %v2034 = vadd.f32 %v818, %v1207
    %v2035 = vadd.f32 %v819, %v1207
    %v2036 = vadd.f32 %v820, %v1207
    %v2037 = vadd.f32 %v821, %v1207
    %v2038 = vadd.f32 %v822, %v1207
    %v2039 = vadd.f32 %v823, %v1207
    %v2040 = vadd.f32 %v824, %v1207
    %v2041 = vadd.f32 %v825, %v1207
    %v2042 = vadd.f32 %v826, %v1207
    %v2043 = vadd.f32 %v827, %v1207
    %v2044 = vadd.f32 %v828, %v1212
    %v2045 = vadd.f32 %v829, %v1212
    %v2046 = vadd.f32 %v830, %v1212
    %v2047 = vadd.f32 %v831, %v1212
    %v2048 = vadd.f32 %v832, %v1212
    %v2049 = vadd.f32 %v833, %v1212
    %v2050 = vadd.f32 %v834, %v1212
    %v2051 = vadd.f32 %v835, %v1212
    %v2052 = vadd.f32 %v836, %v1212
    %v2053 = vadd.f32 %v837, %v1212
    %v2054 = vadd.f32 %v838, %v1212
    %v2055 = vadd.f32 %v839, %v1212
    %v2056 = vadd.f32 %v840, %v1212
    %v2057 = vadd.f32 %v841, %v1212
    %v2058 = vadd.f32 %v842, %v1212
    %v2059 = vadd.f32 %v843, %v1212
    %v2060 = vadd.f32 %v844, %v1212
    %v2061 = vadd.f32 %v845, %v1212
    %v2062 = vadd.f32 %v846, %v1212
    %v2063 = vadd.f32 %v847, %v1212
    %v2064 = vadd.f32 %v848, %v1212
    %v2065 = vadd.f32 %v849, %v1212
    %v2066 = vadd.f32 %v850, %v1212
    %v2067 = vadd.f32 %v851, %v1212
    %v2068 = vadd.f32 %v852, %v1212
    %v2069 = vadd.f32 %v853, %v1212
    %v2070 = vadd.f32 %v854, %v1212
    %v2071 = vadd.f32 %v855, %v1212
    %v2072 = vadd.f32 %v856, %v1212
    %v2073 = vadd.f32 %v857, %v1212
    %v2074 = vadd.f32 %v858, %v1212
    %v2075 = vadd.f32 %v859, %v1212
    %v2076 = vadd.f32 %v860, %v1217
    %v2077 = vadd.f32 %v861, %v1217
    %v2078 = vadd.f32 %v862, %v1217
    %v2079 = vadd.f32 %v863, %v1217
    %v2080 = vadd.f32 %v864, %v1217
    %v2081 = vadd.f32 %v865, %v1217
    %v2082 = vadd.f32 %v866, %v1217
    %v2083 = vadd.f32 %v867, %v1217
    %v2084 = vadd.f32 %v868, %v1217
    %v2085 = vadd.f32 %v869, %v1217
    %v2086 = vadd.f32 %v870, %v1217
    %v2087 = vadd.f32 %v871, %v1217
    %v2088 = vadd.f32 %v872, %v1217
    %v2089 = vadd.f32 %v873, %v1217
    %v2090 = vadd.f32 %v874, %v1217
    %v2091 = vadd.f32 %v875, %v1217
    %v2092 = vadd.f32 %v876, %v1217
    %v2093 = vadd.f32 %v877, %v1217
    %v2094 = vadd.f32 %v878, %v1217
    %v2095 = vadd.f32 %v879, %v1217
    %v2096 = vadd.f32 %v880, %v1217
    %v2097 = vadd.f32 %v881, %v1217
    %v2098 = vadd.f32 %v882, %v1217
    %v2099 = vadd.f32 %v883, %v1217
    %v2100 = vadd.f32 %v884, %v1217
    %v2101 = vadd.f32 %v885, %v1217
    %v2102 = vadd.f32 %v886, %v1217
    %v2103 = vadd.f32 %v887, %v1217
    %v2104 = vadd.f32 %v888, %v1217
    %v2105 = vadd.f32 %v889, %v1217
    %v2106 = vadd.f32 %v890, %v1217
    %v2107 = vadd.f32 %v891, %v1217
    %v2108 = vadd.f32 %v892, %v1222
    %v2109 = vadd.f32 %v893, %v1222
    %v2110 = vadd.f32 %v894, %v1222
    %v2111 = vadd.f32 %v895, %v1222
    %v2112 = vadd.f32 %v896, %v1222
    %v2113 = vadd.f32 %v897, %v1222
    %v2114 = vadd.f32 %v898, %v1222
    %v2115 = vadd.f32 %v899, %v1222
    %v2116 = vadd.f32 %v900, %v1222
    %v2117 = vadd.f32 %v901, %v1222
    %v2118 = vadd.f32 %v902, %v1222
    %v2119 = vadd.f32 %v903, %v1222
    %v2120 = vadd.f32 %v904, %v1222
    %v2121 = vadd.f32 %v905, %v1222
    %v2122 = vadd.f32 %v906, %v1222
    %v2123 = vadd.f32 %v907, %v1222
    %v2124 = vadd.f32 %v908, %v1222
    %v2125 = vadd.f32 %v909, %v1222
    %v2126 = vadd.f32 %v910, %v1222
    %v2127 = vadd.f32 %v911, %v1222
    %v2128 = vadd.f32 %v912, %v1222
    %v2129 = vadd.f32 %v913, %v1222
    %v2130 = vadd.f32 %v914, %v1222
    %v2131 = vadd.f32 %v915, %v1222
    %v2132 = vadd.f32 %v916, %v1222
    %v2133 = vadd.f32 %v917, %v1222
    %v2134 = vadd.f32 %v918, %v1222
    %v2135 = vadd.f32 %v919, %v1222
    %v2136 = vadd.f32 %v920, %v1222
    %v2137 = vadd.f32 %v921, %v1222
    %v2138 = vadd.f32 %v922, %v1222
    %v2139 = vadd.f32 %v923, %v1222
    %v2140 = vadd.f32 %v924, %v1227
    %v2141 = vadd.f32 %v925, %v1227
    %v2142 = vadd.f32 %v926, %v1227
    %v2143 = vadd.f32 %v927, %v1227
    %v2144 = vadd.f32 %v928, %v1227
    %v2145 = vadd.f32 %v929, %v1227
    %v2146 = vadd.f32 %v930, %v1227
    %v2147 = vadd.f32 %v931, %v1227
    %v2148 = vadd.f32 %v932, %v1227
    %v2149 = vadd.f32 %v933, %v1227
    %v2150 = vadd.f32 %v934, %v1227
    %v2151 = vadd.f32 %v935, %v1227
    %v2152 = vadd.f32 %v936, %v1227
    %v2153 = vadd.f32 %v937, %v1227
    %v2154 = vadd.f32 %v938, %v1227
    %v2155 = vadd.f32 %v939, %v1227
    %v2156 = vadd.f32 %v940, %v1227
    %v2157 = vadd.f32 %v941, %v1227
    %v2158 = vadd.f32 %v942, %v1227
    %v2159 = vadd.f32 %v943, %v1227
    %v2160 = vadd.f32 %v944, %v1227
    %v2161 = vadd.f32 %v945, %v1227
    %v2162 = vadd.f32 %v946, %v1227
    %v2163 = vadd.f32 %v947, %v1227
    %v2164 = vadd.f32 %v948, %v1227
    %v2165 = vadd.f32 %v949, %v1227
    %v2166 = vadd.f32 %v950, %v1227
    %v2167 = vadd.f32 %v951, %v1227
    %v2168 = vadd.f32 %v952, %v1227
    %v2169 = vadd.f32 %v953, %v1227
    %v2170 = vadd.f32 %v954, %v1227
    %v2171 = vadd.f32 %v955, %v1227
    %v2172 = vadd.f32 %v956, %v1232
    %v2173 = vadd.f32 %v957, %v1232
    %v2174 = vadd.f32 %v958, %v1232
    %v2175 = vadd.f32 %v959, %v1232
    %v2176 = vadd.f32 %v960, %v1232
    %v2177 = vadd.f32 %v961, %v1232
    %v2178 = vadd.f32 %v962, %v1232
    %v2179 = vadd.f32 %v963, %v1232
    %v2180 = vadd.f32 %v964, %v1232
    %v2181 = vadd.f32 %v965, %v1232
    %v2182 = vadd.f32 %v966, %v1232
    %v2183 = vadd.f32 %v967, %v1232
    %v2184 = vadd.f32 %v968, %v1232
    %v2185 = vadd.f32 %v969, %v1232
    %v2186 = vadd.f32 %v970, %v1232
    %v2187 = vadd.f32 %v971, %v1232
    %v2188 = vadd.f32 %v972, %v1232
    %v2189 = vadd.f32 %v973, %v1232
    %v2190 = vadd.f32 %v974, %v1232
    %v2191 = vadd.f32 %v975, %v1232
    %v2192 = vadd.f32 %v976, %v1232
    %v2193 = vadd.f32 %v977, %v1232
    %v2194 = vadd.f32 %v978, %v1232
    %v2195 = vadd.f32 %v979, %v1232
    %v2196 = vadd.f32 %v980, %v1232
    %v2197 = vadd.f32 %v981, %v1232
    %v2198 = vadd.f32 %v982, %v1232
    %v2199 = vadd.f32 %v983, %v1232
    %v2200 = vadd.f32 %v984, %v1232
    %v2201 = vadd.f32 %v985, %v1232
    %v2202 = vadd.f32 %v986, %v1232
    %v2203 = vadd.f32 %v987, %v1232
    %v2204 = vadd.f32 %v988, %v1237
    %v2205 = vadd.f32 %v989, %v1237
    %v2206 = vadd.f32 %v990, %v1237
    %v2207 = vadd.f32 %v991, %v1237
    %v2208 = vadd.f32 %v992, %v1237
    %v2209 = vadd.f32 %v993, %v1237
    %v2210 = vadd.f32 %v994, %v1237
    %v2211 = vadd.f32 %v995, %v1237
    %v2212 = vadd.f32 %v996, %v1237
    %v2213 = vadd.f32 %v997, %v1237
    %v2214 = vadd.f32 %v998, %v1237
    %v2215 = vadd.f32 %v999, %v1237
    %v2216 = vadd.f32 %v1000, %v1237
    %v2217 = vadd.f32 %v1001, %v1237
    %v2218 = vadd.f32 %v1002, %v1237
    %v2219 = vadd.f32 %v1003, %v1237
    %v2220 = vadd.f32 %v1004, %v1237
    %v2221 = vadd.f32 %v1005, %v1237
    %v2222 = vadd.f32 %v1006, %v1237
    %v2223 = vadd.f32 %v1007, %v1237
    %v2224 = vadd.f32 %v1008, %v1237
    %v2225 = vadd.f32 %v1009, %v1237
    %v2226 = vadd.f32 %v1010, %v1237
    %v2227 = vadd.f32 %v1011, %v1237
    %v2228 = vadd.f32 %v1012, %v1237
    %v2229 = vadd.f32 %v1013, %v1237
    %v2230 = vadd.f32 %v1014, %v1237
    %v2231 = vadd.f32 %v1015, %v1237
    %v2232 = vadd.f32 %v1016, %v1237
    %v2233 = vadd.f32 %v1017, %v1237
    %v2234 = vadd.f32 %v1018, %v1237
    %v2235 = vadd.f32 %v1019, %v1237
    %v2236 = vadd.f32 %v1020, %v1242
    %v2237 = vadd.f32 %v1021, %v1242
    %v2238 = vadd.f32 %v1022, %v1242
    %v2239 = vadd.f32 %v1023, %v1242
    %v2240 = vadd.f32 %v1024, %v1242
    %v2241 = vadd.f32 %v1025, %v1242
    %v2242 = vadd.f32 %v1026, %v1242
    %v2243 = vadd.f32 %v1027, %v1242
    %v2244 = vadd.f32 %v1028, %v1242
    %v2245 = vadd.f32 %v1029, %v1242
    %v2246 = vadd.f32 %v1030, %v1242
    %v2247 = vadd.f32 %v1031, %v1242
    %v2248 = vadd.f32 %v1032, %v1242
    %v2249 = vadd.f32 %v1033, %v1242
    %v2250 = vadd.f32 %v1034, %v1242
    %v2251 = vadd.f32 %v1035, %v1242
    %v2252 = vadd.f32 %v1036, %v1242
    %v2253 = vadd.f32 %v1037, %v1242
    %v2254 = vadd.f32 %v1038, %v1242
    %v2255 = vadd.f32 %v1039, %v1242
    %v2256 = vadd.f32 %v1040, %v1242
    %v2257 = vadd.f32 %v1041, %v1242
    %v2258 = vadd.f32 %v1042, %v1242
    %v2259 = vadd.f32 %v1043, %v1242
    %v2260 = vadd.f32 %v1044, %v1242
    %v2261 = vadd.f32 %v1045, %v1242
    %v2262 = vadd.f32 %v1046, %v1242
    %v2263 = vadd.f32 %v1047, %v1242
    %v2264 = vadd.f32 %v1048, %v1242
    %v2265 = vadd.f32 %v1049, %v1242
    %v2266 = vadd.f32 %v1050, %v1242
    %v2267 = vadd.f32 %v1051, %v1242
    %2268 = vst [vmem:[#allocation5] sm:$0xff] %v1244
    %2269 = vst [vmem:[#allocation5 + $0x8] sm:$0xff] %v1245
    %2270 = vst [vmem:[#allocation5 + $0x10] sm:$0xff] %v1246
    %2271 = vst [vmem:[#allocation5 + $0x18] sm:$0xff] %v1247
    %2272 = vst [vmem:[#allocation5 + $0x20] sm:$0xff] %v1248
    %2273 = vst [vmem:[#allocation5 + $0x28] sm:$0xff] %v1249
    %2274 = vst [vmem:[#allocation5 + $0x30] sm:$0xff] %v1250
    %2275 = vst [vmem:[#allocation5 + $0x38] sm:$0xff] %v1251
    %2276 = vst [vmem:[#allocation5 + $0x40] sm:$0xff] %v1252
    %2277 = vst [vmem:[#allocation5 + $0x48] sm:$0xff] %v1253
    %2278 = vst [vmem:[#allocation5 + $0x50] sm:$0xff] %v1254
    %2279 = vst [vmem:[#allocation5 + $0x58] sm:$0xff] %v1255
    %2280 = vst [vmem:[#allocation5 + $0x60] sm:$0xff] %v1256
    %2281 = vst [vmem:[#allocation5 + $0x68] sm:$0xff] %v1257
    %2282 = vst [vmem:[#allocation5 + $0x70] sm:$0xff] %v1258
    %2283 = vst [vmem:[#allocation5 + $0x78] sm:$0xff] %v1259
    %2284 = vst [vmem:[#allocation5 + $0x80] sm:$0xff] %v1260
    %2285 = vst [vmem:[#allocation5 + $0x88] sm:$0xff] %v1261
    %2286 = vst [vmem:[#allocation5 + $0x90] sm:$0xff] %v1262
    %2287 = vst [vmem:[#allocation5 + $0x98] sm:$0xff] %v1263
    %2288 = vst [vmem:[#allocation5 + $0xa0] sm:$0xff] %v1264
    %2289 = vst [vmem:[#allocation5 + $0xa8] sm:$0xff] %v1265
    %2290 = vst [vmem:[#allocation5 + $0xb0] sm:$0xff] %v1266
    %2291 = vst [vmem:[#allocation5 + $0xb8] sm:$0xff] %v1267
    %2292 = vst [vmem:[#allocation5 + $0xc0] sm:$0xff] %v1268
    %2293 = vst [vmem:[#allocation5 + $0xc8] sm:$0xff] %v1269
    %2294 = vst [vmem:[#allocation5 + $0xd0] sm:$0xff] %v1270
    %2295 = vst [vmem:[#allocation5 + $0xd8] sm:$0xff] %v1271
    %2296 = vst [vmem:[#allocation5 + $0xe0] sm:$0xff] %v1272
    %2297 = vst [vmem:[#allocation5 + $0xe8] sm:$0xff] %v1273
    %2298 = vst [vmem:[#allocation5 + $0xf0] sm:$0xff] %v1274
    %2299 = vst [vmem:[#allocation5 + $0xf8] sm:$0xff] %v1275
    %2300 = vst [vmem:[#allocation5 + $0x100] sm:$0xff] %v1276
    %2301 = vst [vmem:[#allocation5 + $0x108] sm:$0xff] %v1277
    %2302 = vst [vmem:[#allocation5 + $0x110] sm:$0xff] %v1278
    %2303 = vst [vmem:[#allocation5 + $0x118] sm:$0xff] %v1279
    %2304 = vst [vmem:[#allocation5 + $0x120] sm:$0xff] %v1280
    %2305 = vst [vmem:[#allocation5 + $0x128] sm:$0xff] %v1281
    %2306 = vst [vmem:[#allocation5 + $0x130] sm:$0xff] %v1282
    %2307 = vst [vmem:[#allocation5 + $0x138] sm:$0xff] %v1283
    %2308 = vst [vmem:[#allocation5 + $0x140] sm:$0xff] %v1284
    %2309 = vst [vmem:[#allocation5 + $0x148] sm:$0xff] %v1285
    %2310 = vst [vmem:[#allocation5 + $0x150] sm:$0xff] %v1286
    %2311 = vst [vmem:[#allocation5 + $0x158] sm:$0xff] %v1287
    %2312 = vst [vmem:[#allocation5 + $0x160] sm:$0xff] %v1288
    %2313 = vst [vmem:[#allocation5 + $0x168] sm:$0xff] %v1289
    %2314 = vst [vmem:[#allocation5 + $0x170] sm:$0xff] %v1290
    %2315 = vst [vmem:[#allocation5 + $0x178] sm:$0xff] %v1291
    %2316 = vst [vmem:[#allocation5 + $0x180] sm:$0xff] %v1292
    %2317 = vst [vmem:[#allocation5 + $0x188] sm:$0xff] %v1293
    %2318 = vst [vmem:[#allocation5 + $0x190] sm:$0xff] %v1294
    %2319 = vst [vmem:[#allocation5 + $0x198] sm:$0xff] %v1295
    %2320 = vst [vmem:[#allocation5 + $0x1a0] sm:$0xff] %v1296
    %2321 = vst [vmem:[#allocation5 + $0x1a8] sm:$0xff] %v1297
    %2322 = vst [vmem:[#allocation5 + $0x1b0] sm:$0xff] %v1298
    %2323 = vst [vmem:[#allocation5 + $0x1b8] sm:$0xff] %v1299
    %2324 = vst [vmem:[#allocation5 + $0x1c0] sm:$0xff] %v1300
    %2325 = vst [vmem:[#allocation5 + $0x1c8] sm:$0xff] %v1301
    %2326 = vst [vmem:[#allocation5 + $0x1d0] sm:$0xff] %v1302
    %2327 = vst [vmem:[#allocation5 + $0x1d8] sm:$0xff] %v1303
    %2328 = vst [vmem:[#allocation5 + $0x1e0] sm:$0xff] %v1304
    %2329 = vst [vmem:[#allocation5 + $0x1e8] sm:$0xff] %v1305
    %2330 = vst [vmem:[#allocation5 + $0x1f0] sm:$0xff] %v1306
    %2331 = vst [vmem:[#allocation5 + $0x1f8] sm:$0xff] %v1307
    %2332 = vst [vmem:[#allocation5 + $0x200] sm:$0xff] %v1308
    %2333 = vst [vmem:[#allocation5 + $0x208] sm:$0xff] %v1309
    %2334 = vst [vmem:[#allocation5 + $0x210] sm:$0xff] %v1310
    %2335 = vst [vmem:[#allocation5 + $0x218] sm:$0xff] %v1311
    %2336 = vst [vmem:[#allocation5 + $0x220] sm:$0xff] %v1312
    %2337 = vst [vmem:[#allocation5 + $0x228] sm:$0xff] %v1313
    %2338 = vst [vmem:[#allocation5 + $0x230] sm:$0xff] %v1314
    %2339 = vst [vmem:[#allocation5 + $0x238] sm:$0xff] %v1315
    %2340 = vst [vmem:[#allocation5 + $0x240] sm:$0xff] %v1316
    %2341 = vst [vmem:[#allocation5 + $0x248] sm:$0xff] %v1317
    %2342 = vst [vmem:[#allocation5 + $0x250] sm:$0xff] %v1318
    %2343 = vst [vmem:[#allocation5 + $0x258] sm:$0xff] %v1319
    %2344 = vst [vmem:[#allocation5 + $0x260] sm:$0xff] %v1320
    %2345 = vst [vmem:[#allocation5 + $0x268] sm:$0xff] %v1321
    %2346 = vst [vmem:[#allocation5 + $0x270] sm:$0xff] %v1322
    %2347 = vst [vmem:[#allocation5 + $0x278] sm:$0xff] %v1323
    %2348 = vst [vmem:[#allocation5 + $0x280] sm:$0xff] %v1324
    %2349 = vst [vmem:[#allocation5 + $0x288] sm:$0xff] %v1325
    %2350 = vst [vmem:[#allocation5 + $0x290] sm:$0xff] %v1326
    %2351 = vst [vmem:[#allocation5 + $0x298] sm:$0xff] %v1327
    %2352 = vst [vmem:[#allocation5 + $0x2a0] sm:$0xff] %v1328
    %2353 = vst [vmem:[#allocation5 + $0x2a8] sm:$0xff] %v1329
    %2354 = vst [vmem:[#allocation5 + $0x2b0] sm:$0xff] %v1330
    %2355 = vst [vmem:[#allocation5 + $0x2b8] sm:$0xff] %v1331
    %2356 = vst [vmem:[#allocation5 + $0x2c0] sm:$0xff] %v1332
    %2357 = vst [vmem:[#allocation5 + $0x2c8] sm:$0xff] %v1333
    %2358 = vst [vmem:[#allocation5 + $0x2d0] sm:$0xff] %v1334
    %2359 = vst [vmem:[#allocation5 + $0x2d8] sm:$0xff] %v1335
    %2360 = vst [vmem:[#allocation5 + $0x2e0] sm:$0xff] %v1336
    %2361 = vst [vmem:[#allocation5 + $0x2e8] sm:$0xff] %v1337
    %2362 = vst [vmem:[#allocation5 + $0x2f0] sm:$0xff] %v1338
    %2363 = vst [vmem:[#allocation5 + $0x2f8] sm:$0xff] %v1339
    %2364 = vst [vmem:[#allocation5 + $0x300] sm:$0xff] %v1340
    %2365 = vst [vmem:[#allocation5 + $0x308] sm:$0xff] %v1341
    %2366 = vst [vmem:[#allocation5 + $0x310] sm:$0xff] %v1342
    %2367 = vst [vmem:[#allocation5 + $0x318] sm:$0xff] %v1343
    %2368 = vst [vmem:[#allocation5 + $0x320] sm:$0xff] %v1344
    %2369 = vst [vmem:[#allocation5 + $0x328] sm:$0xff] %v1345
    %2370 = vst [vmem:[#allocation5 + $0x330] sm:$0xff] %v1346
    %2371 = vst [vmem:[#allocation5 + $0x338] sm:$0xff] %v1347
    %2372 = vst [vmem:[#allocation5 + $0x340] sm:$0xff] %v1348
    %2373 = vst [vmem:[#allocation5 + $0x348] sm:$0xff] %v1349
    %2374 = vst [vmem:[#allocation5 + $0x350] sm:$0xff] %v1350
    %2375 = vst [vmem:[#allocation5 + $0x358] sm:$0xff] %v1351
    %2376 = vst [vmem:[#allocation5 + $0x360] sm:$0xff] %v1352
    %2377 = vst [vmem:[#allocation5 + $0x368] sm:$0xff] %v1353
    %2378 = vst [vmem:[#allocation5 + $0x370] sm:$0xff] %v1354
    %2379 = vst [vmem:[#allocation5 + $0x378] sm:$0xff] %v1355
    %2380 = vst [vmem:[#allocation5 + $0x380] sm:$0xff] %v1356
    %2381 = vst [vmem:[#allocation5 + $0x388] sm:$0xff] %v1357
    %2382 = vst [vmem:[#allocation5 + $0x390] sm:$0xff] %v1358
    %2383 = vst [vmem:[#allocation5 + $0x398] sm:$0xff] %v1359
    %2384 = vst [vmem:[#allocation5 + $0x3a0] sm:$0xff] %v1360
    %2385 = vst [vmem:[#allocation5 + $0x3a8] sm:$0xff] %v1361
    %2386 = vst [vmem:[#allocation5 + $0x3b0] sm:$0xff] %v1362
    %2387 = vst [vmem:[#allocation5 + $0x3b8] sm:$0xff] %v1363
    %2388 = vst [vmem:[#allocation5 + $0x3c0] sm:$0xff] %v1364
    %2389 = vst [vmem:[#allocation5 + $0x3c8] sm:$0xff] %v1365
    %2390 = vst [vmem:[#allocation5 + $0x3d0] sm:$0xff] %v1366
    %2391 = vst [vmem:[#allocation5 + $0x3d8] sm:$0xff] %v1367
    %2392 = vst [vmem:[#allocation5 + $0x3e0] sm:$0xff] %v1368
    %2393 = vst [vmem:[#allocation5 + $0x3e8] sm:$0xff] %v1369
    %2394 = vst [vmem:[#allocation5 + $0x3f0] sm:$0xff] %v1370
    %2395 = vst [vmem:[#allocation5 + $0x3f8] sm:$0xff] %v1371
    %2396 = vst [vmem:[#allocation5 + $0x400] sm:$0xff] %v1372
    %2397 = vst [vmem:[#allocation5 + $0x408] sm:$0xff] %v1373
    %2398 = vst [vmem:[#allocation5 + $0x410] sm:$0xff] %v1374
    %2399 = vst [vmem:[#allocation5 + $0x418] sm:$0xff] %v1375
    %2400 = vst [vmem:[#allocation5 + $0x420] sm:$0xff] %v1376
    %2401 = vst [vmem:[#allocation5 + $0x428] sm:$0xff] %v1377
    %2402 = vst [vmem:[#allocation5 + $0x430] sm:$0xff] %v1378
    %2403 = vst [vmem:[#allocation5 + $0x438] sm:$0xff] %v1379
    %2404 = vst [vmem:[#allocation5 + $0x440] sm:$0xff] %v1380
    %2405 = vst [vmem:[#allocation5 + $0x448] sm:$0xff] %v1381
    %2406 = vst [vmem:[#allocation5 + $0x450] sm:$0xff] %v1382
    %2407 = vst [vmem:[#allocation5 + $0x458] sm:$0xff] %v1383
    %2408 = vst [vmem:[#allocation5 + $0x460] sm:$0xff] %v1384
    %2409 = vst [vmem:[#allocation5 + $0x468] sm:$0xff] %v1385
    %2410 = vst [vmem:[#allocation5 + $0x470] sm:$0xff] %v1386
    %2411 = vst [vmem:[#allocation5 + $0x478] sm:$0xff] %v1387
    %2412 = vst [vmem:[#allocation5 + $0x480] sm:$0xff] %v1388
    %2413 = vst [vmem:[#allocation5 + $0x488] sm:$0xff] %v1389
    %2414 = vst [vmem:[#allocation5 + $0x490] sm:$0xff] %v1390
    %2415 = vst [vmem:[#allocation5 + $0x498] sm:$0xff] %v1391
    %2416 = vst [vmem:[#allocation5 + $0x4a0] sm:$0xff] %v1392
    %2417 = vst [vmem:[#allocation5 + $0x4a8] sm:$0xff] %v1393
    %2418 = vst [vmem:[#allocation5 + $0x4b0] sm:$0xff] %v1394
    %2419 = vst [vmem:[#allocation5 + $0x4b8] sm:$0xff] %v1395
    %2420 = vst [vmem:[#allocation5 + $0x4c0] sm:$0xff] %v1396
    %2421 = vst [vmem:[#allocation5 + $0x4c8] sm:$0xff] %v1397
    %2422 = vst [vmem:[#allocation5 + $0x4d0] sm:$0xff] %v1398
    %2423 = vst [vmem:[#allocation5 + $0x4d8] sm:$0xff] %v1399
    %2424 = vst [vmem:[#allocation5 + $0x4e0] sm:$0xff] %v1400
    %2425 = vst [vmem:[#allocation5 + $0x4e8] sm:$0xff] %v1401
    %2426 = vst [vmem:[#allocation5 + $0x4f0] sm:$0xff] %v1402
    %2427 = vst [vmem:[#allocation5 + $0x4f8] sm:$0xff] %v1403
    %2428 = vst [vmem:[#allocation5 + $0x500] sm:$0xff] %v1404
    %2429 = vst [vmem:[#allocation5 + $0x508] sm:$0xff] %v1405
    %2430 = vst [vmem:[#allocation5 + $0x510] sm:$0xff] %v1406
    %2431 = vst [vmem:[#allocation5 + $0x518] sm:$0xff] %v1407
    %2432 = vst [vmem:[#allocation5 + $0x520] sm:$0xff] %v1408
    %2433 = vst [vmem:[#allocation5 + $0x528] sm:$0xff] %v1409
    %2434 = vst [vmem:[#allocation5 + $0x530] sm:$0xff] %v1410
    %2435 = vst [vmem:[#allocation5 + $0x538] sm:$0xff] %v1411
    %2436 = vst [vmem:[#allocation5 + $0x540] sm:$0xff] %v1412
    %2437 = vst [vmem:[#allocation5 + $0x548] sm:$0xff] %v1413
    %2438 = vst [vmem:[#allocation5 + $0x550] sm:$0xff] %v1414
    %2439 = vst [vmem:[#allocation5 + $0x558] sm:$0xff] %v1415
    %2440 = vst [vmem:[#allocation5 + $0x560] sm:$0xff] %v1416
    %2441 = vst [vmem:[#allocation5 + $0x568] sm:$0xff] %v1417
    %2442 = vst [vmem:[#allocation5 + $0x570] sm:$0xff] %v1418
    %2443 = vst [vmem:[#allocation5 + $0x578] sm:$0xff] %v1419
    %2444 = vst [vmem:[#allocation5 + $0x580] sm:$0xff] %v1420
    %2445 = vst [vmem:[#allocation5 + $0x588] sm:$0xff] %v1421
    %2446 = vst [vmem:[#allocation5 + $0x590] sm:$0xff] %v1422
    %2447 = vst [vmem:[#allocation5 + $0x598] sm:$0xff] %v1423
    %2448 = vst [vmem:[#allocation5 + $0x5a0] sm:$0xff] %v1424
    %2449 = vst [vmem:[#allocation5 + $0x5a8] sm:$0xff] %v1425
    %2450 = vst [vmem:[#allocation5 + $0x5b0] sm:$0xff] %v1426
    %2451 = vst [vmem:[#allocation5 + $0x5b8] sm:$0xff] %v1427
    %2452 = vst [vmem:[#allocation5 + $0x5c0] sm:$0xff] %v1428
    %2453 = vst [vmem:[#allocation5 + $0x5c8] sm:$0xff] %v1429
    %2454 = vst [vmem:[#allocation5 + $0x5d0] sm:$0xff] %v1430
    %2455 = vst [vmem:[#allocation5 + $0x5d8] sm:$0xff] %v1431
    %2456 = vst [vmem:[#allocation5 + $0x5e0] sm:$0xff] %v1432
    %2457 = vst [vmem:[#allocation5 + $0x5e8] sm:$0xff] %v1433
    %2458 = vst [vmem:[#allocation5 + $0x5f0] sm:$0xff] %v1434
    %2459 = vst [vmem:[#allocation5 + $0x5f8] sm:$0xff] %v1435
    %2460 = vst [vmem:[#allocation5 + $0x600] sm:$0xff] %v1436
    %2461 = vst [vmem:[#allocation5 + $0x608] sm:$0xff] %v1437
    %2462 = vst [vmem:[#allocation5 + $0x610] sm:$0xff] %v1438
    %2463 = vst [vmem:[#allocation5 + $0x618] sm:$0xff] %v1439
    %2464 = vst [vmem:[#allocation5 + $0x620] sm:$0xff] %v1440
    %2465 = vst [vmem:[#allocation5 + $0x628] sm:$0xff] %v1441
    %2466 = vst [vmem:[#allocation5 + $0x630] sm:$0xff] %v1442
    %2467 = vst [vmem:[#allocation5 + $0x638] sm:$0xff] %v1443
    %2468 = vst [vmem:[#allocation5 + $0x640] sm:$0xff] %v1444
    %2469 = vst [vmem:[#allocation5 + $0x648] sm:$0xff] %v1445
    %2470 = vst [vmem:[#allocation5 + $0x650] sm:$0xff] %v1446
    %2471 = vst [vmem:[#allocation5 + $0x658] sm:$0xff] %v1447
    %2472 = vst [vmem:[#allocation5 + $0x660] sm:$0xff] %v1448
    %2473 = vst [vmem:[#allocation5 + $0x668] sm:$0xff] %v1449
    %2474 = vst [vmem:[#allocation5 + $0x670] sm:$0xff] %v1450
    %2475 = vst [vmem:[#allocation5 + $0x678] sm:$0xff] %v1451
    %2476 = vst [vmem:[#allocation5 + $0x680] sm:$0xff] %v1452
    %2477 = vst [vmem:[#allocation5 + $0x688] sm:$0xff] %v1453
    %2478 = vst [vmem:[#allocation5 + $0x690] sm:$0xff] %v1454
    %2479 = vst [vmem:[#allocation5 + $0x698] sm:$0xff] %v1455
    %2480 = vst [vmem:[#allocation5 + $0x6a0] sm:$0xff] %v1456
    %2481 = vst [vmem:[#allocation5 + $0x6a8] sm:$0xff] %v1457
    %2482 = vst [vmem:[#allocation5 + $0x6b0] sm:$0xff] %v1458
    %2483 = vst [vmem:[#allocation5 + $0x6b8] sm:$0xff] %v1459
    %2484 = vst [vmem:[#allocation5 + $0x6c0] sm:$0xff] %v1460
    %2485 = vst [vmem:[#allocation5 + $0x6c8] sm:$0xff] %v1461
    %2486 = vst [vmem:[#allocation5 + $0x6d0] sm:$0xff] %v1462
    %2487 = vst [vmem:[#allocation5 + $0x6d8] sm:$0xff] %v1463
    %2488 = vst [vmem:[#allocation5 + $0x6e0] sm:$0xff] %v1464
    %2489 = vst [vmem:[#allocation5 + $0x6e8] sm:$0xff] %v1465
    %2490 = vst [vmem:[#allocation5 + $0x6f0] sm:$0xff] %v1466
    %2491 = vst [vmem:[#allocation5 + $0x6f8] sm:$0xff] %v1467
    %2492 = vst [vmem:[#allocation5 + $0x700] sm:$0xff] %v1468
    %2493 = vst [vmem:[#allocation5 + $0x708] sm:$0xff] %v1469
    %2494 = vst [vmem:[#allocation5 + $0x710] sm:$0xff] %v1470
    %2495 = vst [vmem:[#allocation5 + $0x718] sm:$0xff] %v1471
    %2496 = vst [vmem:[#allocation5 + $0x720] sm:$0xff] %v1472
    %2497 = vst [vmem:[#allocation5 + $0x728] sm:$0xff] %v1473
    %2498 = vst [vmem:[#allocation5 + $0x730] sm:$0xff] %v1474
    %2499 = vst [vmem:[#allocation5 + $0x738] sm:$0xff] %v1475
    %2500 = vst [vmem:[#allocation5 + $0x740] sm:$0xff] %v1476
    %2501 = vst [vmem:[#allocation5 + $0x748] sm:$0xff] %v1477
    %2502 = vst [vmem:[#allocation5 + $0x750] sm:$0xff] %v1478
    %2503 = vst [vmem:[#allocation5 + $0x758] sm:$0xff] %v1479
    %2504 = vst [vmem:[#allocation5 + $0x760] sm:$0xff] %v1480
    %2505 = vst [vmem:[#allocation5 + $0x768] sm:$0xff] %v1481
    %2506 = vst [vmem:[#allocation5 + $0x770] sm:$0xff] %v1482
    %2507 = vst [vmem:[#allocation5 + $0x778] sm:$0xff] %v1483
    %2508 = vst [vmem:[#allocation5 + $0x780] sm:$0xff] %v1484
    %2509 = vst [vmem:[#allocation5 + $0x788] sm:$0xff] %v1485
    %2510 = vst [vmem:[#allocation5 + $0x790] sm:$0xff] %v1486
    %2511 = vst [vmem:[#allocation5 + $0x798] sm:$0xff] %v1487
    %2512 = vst [vmem:[#allocation5 + $0x7a0] sm:$0xff] %v1488
    %2513 = vst [vmem:[#allocation5 + $0x7a8] sm:$0xff] %v1489
    %2514 = vst [vmem:[#allocation5 + $0x7b0] sm:$0xff] %v1490
    %2515 = vst [vmem:[#allocation5 + $0x7b8] sm:$0xff] %v1491
    %2516 = vst [vmem:[#allocation5 + $0x7c0] sm:$0xff] %v1492
    %2517 = vst [vmem:[#allocation5 + $0x7c8] sm:$0xff] %v1493
    %2518 = vst [vmem:[#allocation5 + $0x7d0] sm:$0xff] %v1494
    %2519 = vst [vmem:[#allocation5 + $0x7d8] sm:$0xff] %v1495
    %2520 = vst [vmem:[#allocation5 + $0x7e0] sm:$0xff] %v1496
    %2521 = vst [vmem:[#allocation5 + $0x7e8] sm:$0xff] %v1497
    %2522 = vst [vmem:[#allocation5 + $0x7f0] sm:$0xff] %v1498
    %2523 = vst [vmem:[#allocation5 + $0x7f8] sm:$0xff] %v1499
    %2524 = vst [vmem:[#allocation5 + $0x800] sm:$0xff] %v1500
    %2525 = vst [vmem:[#allocation5 + $0x808] sm:$0xff] %v1501
    %2526 = vst [vmem:[#allocation5 + $0x810] sm:$0xff] %v1502
    %2527 = vst [vmem:[#allocation5 + $0x818] sm:$0xff] %v1503
    %2528 = vst [vmem:[#allocation5 + $0x820] sm:$0xff] %v1504
    %2529 = vst [vmem:[#allocation5 + $0x828] sm:$0xff] %v1505
    %2530 = vst [vmem:[#allocation5 + $0x830] sm:$0xff] %v1506
    %2531 = vst [vmem:[#allocation5 + $0x838] sm:$0xff] %v1507
    %2532 = vst [vmem:[#allocation5 + $0x840] sm:$0xff] %v1508
    %2533 = vst [vmem:[#allocation5 + $0x848] sm:$0xff] %v1509
    %2534 = vst [vmem:[#allocation5 + $0x850] sm:$0xff] %v1510
    %2535 = vst [vmem:[#allocation5 + $0x858] sm:$0xff] %v1511
    %2536 = vst [vmem:[#allocation5 + $0x860] sm:$0xff] %v1512
    %2537 = vst [vmem:[#allocation5 + $0x868] sm:$0xff] %v1513
    %2538 = vst [vmem:[#allocation5 + $0x870] sm:$0xff] %v1514
    %2539 = vst [vmem:[#allocation5 + $0x878] sm:$0xff] %v1515
    %2540 = vst [vmem:[#allocation5 + $0x880] sm:$0xff] %v1516
    %2541 = vst [vmem:[#allocation5 + $0x888] sm:$0xff] %v1517
    %2542 = vst [vmem:[#allocation5 + $0x890] sm:$0xff] %v1518
    %2543 = vst [vmem:[#allocation5 + $0x898] sm:$0xff] %v1519
    %2544 = vst [vmem:[#allocation5 + $0x8a0] sm:$0xff] %v1520
    %2545 = vst [vmem:[#allocation5 + $0x8a8] sm:$0xff] %v1521
    %2546 = vst [vmem:[#allocation5 + $0x8b0] sm:$0xff] %v1522
    %2547 = vst [vmem:[#allocation5 + $0x8b8] sm:$0xff] %v1523
    %2548 = vst [vmem:[#allocation5 + $0x8c0] sm:$0xff] %v1524
    %2549 = vst [vmem:[#allocation5 + $0x8c8] sm:$0xff] %v1525
    %2550 = vst [vmem:[#allocation5 + $0x8d0] sm:$0xff] %v1526
    %2551 = vst [vmem:[#allocation5 + $0x8d8] sm:$0xff] %v1527
    %2552 = vst [vmem:[#allocation5 + $0x8e0] sm:$0xff] %v1528
    %2553 = vst [vmem:[#allocation5 + $0x8e8] sm:$0xff] %v1529
    %2554 = vst [vmem:[#allocation5 + $0x8f0] sm:$0xff] %v1530
    %2555 = vst [vmem:[#allocation5 + $0x8f8] sm:$0xff] %v1531
    %2556 = vst [vmem:[#allocation5 + $0x900] sm:$0xff] %v1532
    %2557 = vst [vmem:[#allocation5 + $0x908] sm:$0xff] %v1533
    %2558 = vst [vmem:[#allocation5 + $0x910] sm:$0xff] %v1534
    %2559 = vst [vmem:[#allocation5 + $0x918] sm:$0xff] %v1535
    %2560 = vst [vmem:[#allocation5 + $0x920] sm:$0xff] %v1536
    %2561 = vst [vmem:[#allocation5 + $0x928] sm:$0xff] %v1537
    %2562 = vst [vmem:[#allocation5 + $0x930] sm:$0xff] %v1538
    %2563 = vst [vmem:[#allocation5 + $0x938] sm:$0xff] %v1539
    %2564 = vst [vmem:[#allocation5 + $0x940] sm:$0xff] %v1540
    %2565 = vst [vmem:[#allocation5 + $0x948] sm:$0xff] %v1541
    %2566 = vst [vmem:[#allocation5 + $0x950] sm:$0xff] %v1542
    %2567 = vst [vmem:[#allocation5 + $0x958] sm:$0xff] %v1543
    %2568 = vst [vmem:[#allocation5 + $0x960] sm:$0xff] %v1544
    %2569 = vst [vmem:[#allocation5 + $0x968] sm:$0xff] %v1545
    %2570 = vst [vmem:[#allocation5 + $0x970] sm:$0xff] %v1546
    %2571 = vst [vmem:[#allocation5 + $0x978] sm:$0xff] %v1547
    %2572 = vst [vmem:[#allocation5 + $0x980] sm:$0xff] %v1548
    %2573 = vst [vmem:[#allocation5 + $0x988] sm:$0xff] %v1549
    %2574 = vst [vmem:[#allocation5 + $0x990] sm:$0xff] %v1550
    %2575 = vst [vmem:[#allocation5 + $0x998] sm:$0xff] %v1551
    %2576 = vst [vmem:[#allocation5 + $0x9a0] sm:$0xff] %v1552
    %2577 = vst [vmem:[#allocation5 + $0x9a8] sm:$0xff] %v1553
    %2578 = vst [vmem:[#allocation5 + $0x9b0] sm:$0xff] %v1554
    %2579 = vst [vmem:[#allocation5 + $0x9b8] sm:$0xff] %v1555
    %2580 = vst [vmem:[#allocation5 + $0x9c0] sm:$0xff] %v1556
    %2581 = vst [vmem:[#allocation5 + $0x9c8] sm:$0xff] %v1557
    %2582 = vst [vmem:[#allocation5 + $0x9d0] sm:$0xff] %v1558
    %2583 = vst [vmem:[#allocation5 + $0x9d8] sm:$0xff] %v1559
    %2584 = vst [vmem:[#allocation5 + $0x9e0] sm:$0xff] %v1560
    %2585 = vst [vmem:[#allocation5 + $0x9e8] sm:$0xff] %v1561
    %2586 = vst [vmem:[#allocation5 + $0x9f0] sm:$0xff] %v1562
    %2587 = vst [vmem:[#allocation5 + $0x9f8] sm:$0xff] %v1563
    %2588 = vst [vmem:[#allocation5 + $0xa00] sm:$0xff] %v1564
    %2589 = vst [vmem:[#allocation5 + $0xa08] sm:$0xff] %v1565
    %2590 = vst [vmem:[#allocation5 + $0xa10] sm:$0xff] %v1566
    %2591 = vst [vmem:[#allocation5 + $0xa18] sm:$0xff] %v1567
    %2592 = vst [vmem:[#allocation5 + $0xa20] sm:$0xff] %v1568
    %2593 = vst [vmem:[#allocation5 + $0xa28] sm:$0xff] %v1569
    %2594 = vst [vmem:[#allocation5 + $0xa30] sm:$0xff] %v1570
    %2595 = vst [vmem:[#allocation5 + $0xa38] sm:$0xff] %v1571
    %2596 = vst [vmem:[#allocation5 + $0xa40] sm:$0xff] %v1572
    %2597 = vst [vmem:[#allocation5 + $0xa48] sm:$0xff] %v1573
    %2598 = vst [vmem:[#allocation5 + $0xa50] sm:$0xff] %v1574
    %2599 = vst [vmem:[#allocation5 + $0xa58] sm:$0xff] %v1575
    %2600 = vst [vmem:[#allocation5 + $0xa60] sm:$0xff] %v1576
    %2601 = vst [vmem:[#allocation5 + $0xa68] sm:$0xff] %v1577
    %2602 = vst [vmem:[#allocation5 + $0xa70] sm:$0xff] %v1578
    %2603 = vst [vmem:[#allocation5 + $0xa78] sm:$0xff] %v1579
    %2604 = vst [vmem:[#allocation5 + $0xa80] sm:$0xff] %v1580
    %2605 = vst [vmem:[#allocation5 + $0xa88] sm:$0xff] %v1581
    %2606 = vst [vmem:[#allocation5 + $0xa90] sm:$0xff] %v1582
    %2607 = vst [vmem:[#allocation5 + $0xa98] sm:$0xff] %v1583
    %2608 = vst [vmem:[#allocation5 + $0xaa0] sm:$0xff] %v1584
    %2609 = vst [vmem:[#allocation5 + $0xaa8] sm:$0xff] %v1585
    %2610 = vst [vmem:[#allocation5 + $0xab0] sm:$0xff] %v1586
    %2611 = vst [vmem:[#allocation5 + $0xab8] sm:$0xff] %v1587
    %2612 = vst [vmem:[#allocation5 + $0xac0] sm:$0xff] %v1588
    %2613 = vst [vmem:[#allocation5 + $0xac8] sm:$0xff] %v1589
    %2614 = vst [vmem:[#allocation5 + $0xad0] sm:$0xff] %v1590
    %2615 = vst [vmem:[#allocation5 + $0xad8] sm:$0xff] %v1591
    %2616 = vst [vmem:[#allocation5 + $0xae0] sm:$0xff] %v1592
    %2617 = vst [vmem:[#allocation5 + $0xae8] sm:$0xff] %v1593
    %2618 = vst [vmem:[#allocation5 + $0xaf0] sm:$0xff] %v1594
    %2619 = vst [vmem:[#allocation5 + $0xaf8] sm:$0xff] %v1595
    %2620 = vst [vmem:[#allocation5 + $0xb00] sm:$0xff] %v1596
    %2621 = vst [vmem:[#allocation5 + $0xb08] sm:$0xff] %v1597
    %2622 = vst [vmem:[#allocation5 + $0xb10] sm:$0xff] %v1598
    %2623 = vst [vmem:[#allocation5 + $0xb18] sm:$0xff] %v1599
    %2624 = vst [vmem:[#allocation5 + $0xb20] sm:$0xff] %v1600
    %2625 = vst [vmem:[#allocation5 + $0xb28] sm:$0xff] %v1601
    %2626 = vst [vmem:[#allocation5 + $0xb30] sm:$0xff] %v1602
    %2627 = vst [vmem:[#allocation5 + $0xb38] sm:$0xff] %v1603
    %2628 = vst [vmem:[#allocation5 + $0xb40] sm:$0xff] %v1604
    %2629 = vst [vmem:[#allocation5 + $0xb48] sm:$0xff] %v1605
    %2630 = vst [vmem:[#allocation5 + $0xb50] sm:$0xff] %v1606
    %2631 = vst [vmem:[#allocation5 + $0xb58] sm:$0xff] %v1607
    %2632 = vst [vmem:[#allocation5 + $0xb60] sm:$0xff] %v1608
    %2633 = vst [vmem:[#allocation5 + $0xb68] sm:$0xff] %v1609
    %2634 = vst [vmem:[#allocation5 + $0xb70] sm:$0xff] %v1610
    %2635 = vst [vmem:[#allocation5 + $0xb78] sm:$0xff] %v1611
    %2636 = vst [vmem:[#allocation5 + $0xb80] sm:$0xff] %v1612
    %2637 = vst [vmem:[#allocation5 + $0xb88] sm:$0xff] %v1613
    %2638 = vst [vmem:[#allocation5 + $0xb90] sm:$0xff] %v1614
    %2639 = vst [vmem:[#allocation5 + $0xb98] sm:$0xff] %v1615
    %2640 = vst [vmem:[#allocation5 + $0xba0] sm:$0xff] %v1616
    %2641 = vst [vmem:[#allocation5 + $0xba8] sm:$0xff] %v1617
    %2642 = vst [vmem:[#allocation5 + $0xbb0] sm:$0xff] %v1618
    %2643 = vst [vmem:[#allocation5 + $0xbb8] sm:$0xff] %v1619
    %2644 = vst [vmem:[#allocation5 + $0xbc0] sm:$0xff] %v1620
    %2645 = vst [vmem:[#allocation5 + $0xbc8] sm:$0xff] %v1621
    %2646 = vst [vmem:[#allocation5 + $0xbd0] sm:$0xff] %v1622
    %2647 = vst [vmem:[#allocation5 + $0xbd8] sm:$0xff] %v1623
    %2648 = vst [vmem:[#allocation5 + $0xbe0] sm:$0xff] %v1624
    %2649 = vst [vmem:[#allocation5 + $0xbe8] sm:$0xff] %v1625
    %2650 = vst [vmem:[#allocation5 + $0xbf0] sm:$0xff] %v1626
    %2651 = vst [vmem:[#allocation5 + $0xbf8] sm:$0xff] %v1627
    %2652 = vst [vmem:[#allocation5 + $0xc00] sm:$0xff] %v1628
    %2653 = vst [vmem:[#allocation5 + $0xc08] sm:$0xff] %v1629
    %2654 = vst [vmem:[#allocation5 + $0xc10] sm:$0xff] %v1630
    %2655 = vst [vmem:[#allocation5 + $0xc18] sm:$0xff] %v1631
    %2656 = vst [vmem:[#allocation5 + $0xc20] sm:$0xff] %v1632
    %2657 = vst [vmem:[#allocation5 + $0xc28] sm:$0xff] %v1633
    %2658 = vst [vmem:[#allocation5 + $0xc30] sm:$0xff] %v1634
    %2659 = vst [vmem:[#allocation5 + $0xc38] sm:$0xff] %v1635
    %2660 = vst [vmem:[#allocation5 + $0xc40] sm:$0xff] %v1636
    %2661 = vst [vmem:[#allocation5 + $0xc48] sm:$0xff] %v1637
    %2662 = vst [vmem:[#allocation5 + $0xc50] sm:$0xff] %v1638
    %2663 = vst [vmem:[#allocation5 + $0xc58] sm:$0xff] %v1639
    %2664 = vst [vmem:[#allocation5 + $0xc60] sm:$0xff] %v1640
    %2665 = vst [vmem:[#allocation5 + $0xc68] sm:$0xff] %v1641
    %2666 = vst [vmem:[#allocation5 + $0xc70] sm:$0xff] %v1642
    %2667 = vst [vmem:[#allocation5 + $0xc78] sm:$0xff] %v1643
    %2668 = vst [vmem:[#allocation5 + $0xc80] sm:$0xff] %v1644
    %2669 = vst [vmem:[#allocation5 + $0xc88] sm:$0xff] %v1645
    %2670 = vst [vmem:[#allocation5 + $0xc90] sm:$0xff] %v1646
    %2671 = vst [vmem:[#allocation5 + $0xc98] sm:$0xff] %v1647
    %2672 = vst [vmem:[#allocation5 + $0xca0] sm:$0xff] %v1648
    %2673 = vst [vmem:[#allocation5 + $0xca8] sm:$0xff] %v1649
    %2674 = vst [vmem:[#allocation5 + $0xcb0] sm:$0xff] %v1650
    %2675 = vst [vmem:[#allocation5 + $0xcb8] sm:$0xff] %v1651
    %2676 = vst [vmem:[#allocation5 + $0xcc0] sm:$0xff] %v1652
    %2677 = vst [vmem:[#allocation5 + $0xcc8] sm:$0xff] %v1653
    %2678 = vst [vmem:[#allocation5 + $0xcd0] sm:$0xff] %v1654
    %2679 = vst [vmem:[#allocation5 + $0xcd8] sm:$0xff] %v1655
    %2680 = vst [vmem:[#allocation5 + $0xce0] sm:$0xff] %v1656
    %2681 = vst [vmem:[#allocation5 + $0xce8] sm:$0xff] %v1657
    %2682 = vst [vmem:[#allocation5 + $0xcf0] sm:$0xff] %v1658
    %2683 = vst [vmem:[#allocation5 + $0xcf8] sm:$0xff] %v1659
    %2684 = vst [vmem:[#allocation5 + $0xd00] sm:$0xff] %v1660
    %2685 = vst [vmem:[#allocation5 + $0xd08] sm:$0xff] %v1661
    %2686 = vst [vmem:[#allocation5 + $0xd10] sm:$0xff] %v1662
    %2687 = vst [vmem:[#allocation5 + $0xd18] sm:$0xff] %v1663
    %2688 = vst [vmem:[#allocation5 + $0xd20] sm:$0xff] %v1664
    %2689 = vst [vmem:[#allocation5 + $0xd28] sm:$0xff] %v1665
    %2690 = vst [vmem:[#allocation5 + $0xd30] sm:$0xff] %v1666
    %2691 = vst [vmem:[#allocation5 + $0xd38] sm:$0xff] %v1667
    %2692 = vst [vmem:[#allocation5 + $0xd40] sm:$0xff] %v1668
    %2693 = vst [vmem:[#allocation5 + $0xd48] sm:$0xff] %v1669
    %2694 = vst [vmem:[#allocation5 + $0xd50] sm:$0xff] %v1670
    %2695 = vst [vmem:[#allocation5 + $0xd58] sm:$0xff] %v1671
    %2696 = vst [vmem:[#allocation5 + $0xd60] sm:$0xff] %v1672
    %2697 = vst [vmem:[#allocation5 + $0xd68] sm:$0xff] %v1673
    %2698 = vst [vmem:[#allocation5 + $0xd70] sm:$0xff] %v1674
    %2699 = vst [vmem:[#allocation5 + $0xd78] sm:$0xff] %v1675
    %2700 = vst [vmem:[#allocation5 + $0xd80] sm:$0xff] %v1676
    %2701 = vst [vmem:[#allocation5 + $0xd88] sm:$0xff] %v1677
    %2702 = vst [vmem:[#allocation5 + $0xd90] sm:$0xff] %v1678
    %2703 = vst [vmem:[#allocation5 + $0xd98] sm:$0xff] %v1679
    %2704 = vst [vmem:[#allocation5 + $0xda0] sm:$0xff] %v1680
    %2705 = vst [vmem:[#allocation5 + $0xda8] sm:$0xff] %v1681
    %2706 = vst [vmem:[#allocation5 + $0xdb0] sm:$0xff] %v1682
    %2707 = vst [vmem:[#allocation5 + $0xdb8] sm:$0xff] %v1683
    %2708 = vst [vmem:[#allocation5 + $0xdc0] sm:$0xff] %v1684
    %2709 = vst [vmem:[#allocation5 + $0xdc8] sm:$0xff] %v1685
    %2710 = vst [vmem:[#allocation5 + $0xdd0] sm:$0xff] %v1686
    %2711 = vst [vmem:[#allocation5 + $0xdd8] sm:$0xff] %v1687
    %2712 = vst [vmem:[#allocation5 + $0xde0] sm:$0xff] %v1688
    %2713 = vst [vmem:[#allocation5 + $0xde8] sm:$0xff] %v1689
    %2714 = vst [vmem:[#allocation5 + $0xdf0] sm:$0xff] %v1690
    %2715 = vst [vmem:[#allocation5 + $0xdf8] sm:$0xff] %v1691
    %2716 = vst [vmem:[#allocation5 + $0xe00] sm:$0xff] %v1692
    %2717 = vst [vmem:[#allocation5 + $0xe08] sm:$0xff] %v1693
    %2718 = vst [vmem:[#allocation5 + $0xe10] sm:$0xff] %v1694
    %2719 = vst [vmem:[#allocation5 + $0xe18] sm:$0xff] %v1695
    %2720 = vst [vmem:[#allocation5 + $0xe20] sm:$0xff] %v1696
    %2721 = vst [vmem:[#allocation5 + $0xe28] sm:$0xff] %v1697
    %2722 = vst [vmem:[#allocation5 + $0xe30] sm:$0xff] %v1698
    %2723 = vst [vmem:[#allocation5 + $0xe38] sm:$0xff] %v1699
    %2724 = vst [vmem:[#allocation5 + $0xe40] sm:$0xff] %v1700
    %2725 = vst [vmem:[#allocation5 + $0xe48] sm:$0xff] %v1701
    %2726 = vst [vmem:[#allocation5 + $0xe50] sm:$0xff] %v1702
    %2727 = vst [vmem:[#allocation5 + $0xe58] sm:$0xff] %v1703
    %2728 = vst [vmem:[#allocation5 + $0xe60] sm:$0xff] %v1704
    %2729 = vst [vmem:[#allocation5 + $0xe68] sm:$0xff] %v1705
    %2730 = vst [vmem:[#allocation5 + $0xe70] sm:$0xff] %v1706
    %2731 = vst [vmem:[#allocation5 + $0xe78] sm:$0xff] %v1707
    %2732 = vst [vmem:[#allocation5 + $0xe80] sm:$0xff] %v1708
    %2733 = vst [vmem:[#allocation5 + $0xe88] sm:$0xff] %v1709
    %2734 = vst [vmem:[#allocation5 + $0xe90] sm:$0xff] %v1710
    %2735 = vst [vmem:[#allocation5 + $0xe98] sm:$0xff] %v1711
    %2736 = vst [vmem:[#allocation5 + $0xea0] sm:$0xff] %v1712
    %2737 = vst [vmem:[#allocation5 + $0xea8] sm:$0xff] %v1713
    %2738 = vst [vmem:[#allocation5 + $0xeb0] sm:$0xff] %v1714
    %2739 = vst [vmem:[#allocation5 + $0xeb8] sm:$0xff] %v1715
    %2740 = vst [vmem:[#allocation5 + $0xec0] sm:$0xff] %v1716
    %2741 = vst [vmem:[#allocation5 + $0xec8] sm:$0xff] %v1717
    %2742 = vst [vmem:[#allocation5 + $0xed0] sm:$0xff] %v1718
    %2743 = vst [vmem:[#allocation5 + $0xed8] sm:$0xff] %v1719
    %2744 = vst [vmem:[#allocation5 + $0xee0] sm:$0xff] %v1720
    %2745 = vst [vmem:[#allocation5 + $0xee8] sm:$0xff] %v1721
    %2746 = vst [vmem:[#allocation5 + $0xef0] sm:$0xff] %v1722
    %2747 = vst [vmem:[#allocation5 + $0xef8] sm:$0xff] %v1723
    %2748 = vst [vmem:[#allocation5 + $0xf00] sm:$0xff] %v1724
    %2749 = vst [vmem:[#allocation5 + $0xf08] sm:$0xff] %v1725
    %2750 = vst [vmem:[#allocation5 + $0xf10] sm:$0xff] %v1726
    %2751 = vst [vmem:[#allocation5 + $0xf18] sm:$0xff] %v1727
    %2752 = vst [vmem:[#allocation5 + $0xf20] sm:$0xff] %v1728
    %2753 = vst [vmem:[#allocation5 + $0xf28] sm:$0xff] %v1729
    %2754 = vst [vmem:[#allocation5 + $0xf30] sm:$0xff] %v1730
    %2755 = vst [vmem:[#allocation5 + $0xf38] sm:$0xff] %v1731
    %2756 = vst [vmem:[#allocation5 + $0xf40] sm:$0xff] %v1732
    %2757 = vst [vmem:[#allocation5 + $0xf48] sm:$0xff] %v1733
    %2758 = vst [vmem:[#allocation5 + $0xf50] sm:$0xff] %v1734
    %2759 = vst [vmem:[#allocation5 + $0xf58] sm:$0xff] %v1735
    %2760 = vst [vmem:[#allocation5 + $0xf60] sm:$0xff] %v1736
    %2761 = vst [vmem:[#allocation5 + $0xf68] sm:$0xff] %v1737
    %2762 = vst [vmem:[#allocation5 + $0xf70] sm:$0xff] %v1738
    %2763 = vst [vmem:[#allocation5 + $0xf78] sm:$0xff] %v1739
    %2764 = vst [vmem:[#allocation5 + $0xf80] sm:$0xff] %v1740
    %2765 = vst [vmem:[#allocation5 + $0xf88] sm:$0xff] %v1741
    %2766 = vst [vmem:[#allocation5 + $0xf90] sm:$0xff] %v1742
    %2767 = vst [vmem:[#allocation5 + $0xf98] sm:$0xff] %v1743
    %2768 = vst [vmem:[#allocation5 + $0xfa0] sm:$0xff] %v1744
    %2769 = vst [vmem:[#allocation5 + $0xfa8] sm:$0xff] %v1745
    %2770 = vst [vmem:[#allocation5 + $0xfb0] sm:$0xff] %v1746
    %2771 = vst [vmem:[#allocation5 + $0xfb8] sm:$0xff] %v1747
    %2772 = vst [vmem:[#allocation5 + $0xfc0] sm:$0xff] %v1748
    %2773 = vst [vmem:[#allocation5 + $0xfc8] sm:$0xff] %v1749
    %2774 = vst [vmem:[#allocation5 + $0xfd0] sm:$0xff] %v1750
    %2775 = vst [vmem:[#allocation5 + $0xfd8] sm:$0xff] %v1751
    %2776 = vst [vmem:[#allocation5 + $0xfe0] sm:$0xff] %v1752
    %2777 = vst [vmem:[#allocation5 + $0xfe8] sm:$0xff] %v1753
    %2778 = vst [vmem:[#allocation5 + $0xff0] sm:$0xff] %v1754
    %2779 = vst [vmem:[#allocation5 + $0xff8] sm:$0xff] %v1755
    %2780 = vst [vmem:[#allocation5 + $0x1000] sm:$0xff] %v1756
    %2781 = vst [vmem:[#allocation5 + $0x1008] sm:$0xff] %v1757
    %2782 = vst [vmem:[#allocation5 + $0x1010] sm:$0xff] %v1758
    %2783 = vst [vmem:[#allocation5 + $0x1018] sm:$0xff] %v1759
    %2784 = vst [vmem:[#allocation5 + $0x1020] sm:$0xff] %v1760
    %2785 = vst [vmem:[#allocation5 + $0x1028] sm:$0xff] %v1761
    %2786 = vst [vmem:[#allocation5 + $0x1030] sm:$0xff] %v1762
    %2787 = vst [vmem:[#allocation5 + $0x1038] sm:$0xff] %v1763
    %2788 = vst [vmem:[#allocation5 + $0x1040] sm:$0xff] %v1764
    %2789 = vst [vmem:[#allocation5 + $0x1048] sm:$0xff] %v1765
    %2790 = vst [vmem:[#allocation5 + $0x1050] sm:$0xff] %v1766
    %2791 = vst [vmem:[#allocation5 + $0x1058] sm:$0xff] %v1767
    %2792 = vst [vmem:[#allocation5 + $0x1060] sm:$0xff] %v1768
    %2793 = vst [vmem:[#allocation5 + $0x1068] sm:$0xff] %v1769
    %2794 = vst [vmem:[#allocation5 + $0x1070] sm:$0xff] %v1770
    %2795 = vst [vmem:[#allocation5 + $0x1078] sm:$0xff] %v1771
    %2796 = vst [vmem:[#allocation5 + $0x1080] sm:$0xff] %v1772
    %2797 = vst [vmem:[#allocation5 + $0x1088] sm:$0xff] %v1773
    %2798 = vst [vmem:[#allocation5 + $0x1090] sm:$0xff] %v1774
    %2799 = vst [vmem:[#allocation5 + $0x1098] sm:$0xff] %v1775
    %2800 = vst [vmem:[#allocation5 + $0x10a0] sm:$0xff] %v1776
    %2801 = vst [vmem:[#allocation5 + $0x10a8] sm:$0xff] %v1777
    %2802 = vst [vmem:[#allocation5 + $0x10b0] sm:$0xff] %v1778
    %2803 = vst [vmem:[#allocation5 + $0x10b8] sm:$0xff] %v1779
    %2804 = vst [vmem:[#allocation5 + $0x10c0] sm:$0xff] %v1780
    %2805 = vst [vmem:[#allocation5 + $0x10c8] sm:$0xff] %v1781
    %2806 = vst [vmem:[#allocation5 + $0x10d0] sm:$0xff] %v1782
    %2807 = vst [vmem:[#allocation5 + $0x10d8] sm:$0xff] %v1783
    %2808 = vst [vmem:[#allocation5 + $0x10e0] sm:$0xff] %v1784
    %2809 = vst [vmem:[#allocation5 + $0x10e8] sm:$0xff] %v1785
    %2810 = vst [vmem:[#allocation5 + $0x10f0] sm:$0xff] %v1786
    %2811 = vst [vmem:[#allocation5 + $0x10f8] sm:$0xff] %v1787
    %2812 = vst [vmem:[#allocation5 + $0x1100] sm:$0xff] %v1788
    %2813 = vst [vmem:[#allocation5 + $0x1108] sm:$0xff] %v1789
    %2814 = vst [vmem:[#allocation5 + $0x1110] sm:$0xff] %v1790
    %2815 = vst [vmem:[#allocation5 + $0x1118] sm:$0xff] %v1791
    %2816 = vst [vmem:[#allocation5 + $0x1120] sm:$0xff] %v1792
    %2817 = vst [vmem:[#allocation5 + $0x1128] sm:$0xff] %v1793
    %2818 = vst [vmem:[#allocation5 + $0x1130] sm:$0xff] %v1794
    %2819 = vst [vmem:[#allocation5 + $0x1138] sm:$0xff] %v1795
    %2820 = vst [vmem:[#allocation5 + $0x1140] sm:$0xff] %v1796
    %2821 = vst [vmem:[#allocation5 + $0x1148] sm:$0xff] %v1797
    %2822 = vst [vmem:[#allocation5 + $0x1150] sm:$0xff] %v1798
    %2823 = vst [vmem:[#allocation5 + $0x1158] sm:$0xff] %v1799
    %2824 = vst [vmem:[#allocation5 + $0x1160] sm:$0xff] %v1800
    %2825 = vst [vmem:[#allocation5 + $0x1168] sm:$0xff] %v1801
    %2826 = vst [vmem:[#allocation5 + $0x1170] sm:$0xff] %v1802
    %2827 = vst [vmem:[#allocation5 + $0x1178] sm:$0xff] %v1803
    %2828 = vst [vmem:[#allocation5 + $0x1180] sm:$0xff] %v1804
    %2829 = vst [vmem:[#allocation5 + $0x1188] sm:$0xff] %v1805
    %2830 = vst [vmem:[#allocation5 + $0x1190] sm:$0xff] %v1806
    %2831 = vst [vmem:[#allocation5 + $0x1198] sm:$0xff] %v1807
    %2832 = vst [vmem:[#allocation5 + $0x11a0] sm:$0xff] %v1808
    %2833 = vst [vmem:[#allocation5 + $0x11a8] sm:$0xff] %v1809
    %2834 = vst [vmem:[#allocation5 + $0x11b0] sm:$0xff] %v1810
    %2835 = vst [vmem:[#allocation5 + $0x11b8] sm:$0xff] %v1811
    %2836 = vst [vmem:[#allocation5 + $0x11c0] sm:$0xff] %v1812
    %2837 = vst [vmem:[#allocation5 + $0x11c8] sm:$0xff] %v1813
    %2838 = vst [vmem:[#allocation5 + $0x11d0] sm:$0xff] %v1814
    %2839 = vst [vmem:[#allocation5 + $0x11d8] sm:$0xff] %v1815
    %2840 = vst [vmem:[#allocation5 + $0x11e0] sm:$0xff] %v1816
    %2841 = vst [vmem:[#allocation5 + $0x11e8] sm:$0xff] %v1817
    %2842 = vst [vmem:[#allocation5 + $0x11f0] sm:$0xff] %v1818
    %2843 = vst [vmem:[#allocation5 + $0x11f8] sm:$0xff] %v1819
    %2844 = vst [vmem:[#allocation5 + $0x1200] sm:$0xff] %v1820
    %2845 = vst [vmem:[#allocation5 + $0x1208] sm:$0xff] %v1821
    %2846 = vst [vmem:[#allocation5 + $0x1210] sm:$0xff] %v1822
    %2847 = vst [vmem:[#allocation5 + $0x1218] sm:$0xff] %v1823
    %2848 = vst [vmem:[#allocation5 + $0x1220] sm:$0xff] %v1824
    %2849 = vst [vmem:[#allocation5 + $0x1228] sm:$0xff] %v1825
    %2850 = vst [vmem:[#allocation5 + $0x1230] sm:$0xff] %v1826
    %2851 = vst [vmem:[#allocation5 + $0x1238] sm:$0xff] %v1827
    %2852 = vst [vmem:[#allocation5 + $0x1240] sm:$0xff] %v1828
    %2853 = vst [vmem:[#allocation5 + $0x1248] sm:$0xff] %v1829
    %2854 = vst [vmem:[#allocation5 + $0x1250] sm:$0xff] %v1830
    %2855 = vst [vmem:[#allocation5 + $0x1258] sm:$0xff] %v1831
    %2856 = vst [vmem:[#allocation5 + $0x1260] sm:$0xff] %v1832
    %2857 = vst [vmem:[#allocation5 + $0x1268] sm:$0xff] %v1833
    %2858 = vst [vmem:[#allocation5 + $0x1270] sm:$0xff] %v1834
    %2859 = vst [vmem:[#allocation5 + $0x1278] sm:$0xff] %v1835
    %2860 = vst [vmem:[#allocation5 + $0x1280] sm:$0xff] %v1836
    %2861 = vst [vmem:[#allocation5 + $0x1288] sm:$0xff] %v1837
    %2862 = vst [vmem:[#allocation5 + $0x1290] sm:$0xff] %v1838
    %2863 = vst [vmem:[#allocation5 + $0x1298] sm:$0xff] %v1839
    %2864 = vst [vmem:[#allocation5 + $0x12a0] sm:$0xff] %v1840
    %2865 = vst [vmem:[#allocation5 + $0x12a8] sm:$0xff] %v1841
    %2866 = vst [vmem:[#allocation5 + $0x12b0] sm:$0xff] %v1842
    %2867 = vst [vmem:[#allocation5 + $0x12b8] sm:$0xff] %v1843
    %2868 = vst [vmem:[#allocation5 + $0x12c0] sm:$0xff] %v1844
    %2869 = vst [vmem:[#allocation5 + $0x12c8] sm:$0xff] %v1845
    %2870 = vst [vmem:[#allocation5 + $0x12d0] sm:$0xff] %v1846
    %2871 = vst [vmem:[#allocation5 + $0x12d8] sm:$0xff] %v1847
    %2872 = vst [vmem:[#allocation5 + $0x12e0] sm:$0xff] %v1848
    %2873 = vst [vmem:[#allocation5 + $0x12e8] sm:$0xff] %v1849
    %2874 = vst [vmem:[#allocation5 + $0x12f0] sm:$0xff] %v1850
    %2875 = vst [vmem:[#allocation5 + $0x12f8] sm:$0xff] %v1851
    %2876 = vst [vmem:[#allocation5 + $0x1300] sm:$0xff] %v1852
    %2877 = vst [vmem:[#allocation5 + $0x1308] sm:$0xff] %v1853
    %2878 = vst [vmem:[#allocation5 + $0x1310] sm:$0xff] %v1854
    %2879 = vst [vmem:[#allocation5 + $0x1318] sm:$0xff] %v1855
    %2880 = vst [vmem:[#allocation5 + $0x1320] sm:$0xff] %v1856
    %2881 = vst [vmem:[#allocation5 + $0x1328] sm:$0xff] %v1857
    %2882 = vst [vmem:[#allocation5 + $0x1330] sm:$0xff] %v1858
    %2883 = vst [vmem:[#allocation5 + $0x1338] sm:$0xff] %v1859
    %2884 = vst [vmem:[#allocation5 + $0x1340] sm:$0xff] %v1860
    %2885 = vst [vmem:[#allocation5 + $0x1348] sm:$0xff] %v1861
    %2886 = vst [vmem:[#allocation5 + $0x1350] sm:$0xff] %v1862
    %2887 = vst [vmem:[#allocation5 + $0x1358] sm:$0xff] %v1863
    %2888 = vst [vmem:[#allocation5 + $0x1360] sm:$0xff] %v1864
    %2889 = vst [vmem:[#allocation5 + $0x1368] sm:$0xff] %v1865
    %2890 = vst [vmem:[#allocation5 + $0x1370] sm:$0xff] %v1866
    %2891 = vst [vmem:[#allocation5 + $0x1378] sm:$0xff] %v1867
    %2892 = vst [vmem:[#allocation5 + $0x1380] sm:$0xff] %v1868
    %2893 = vst [vmem:[#allocation5 + $0x1388] sm:$0xff] %v1869
    %2894 = vst [vmem:[#allocation5 + $0x1390] sm:$0xff] %v1870
    %2895 = vst [vmem:[#allocation5 + $0x1398] sm:$0xff] %v1871
    %2896 = vst [vmem:[#allocation5 + $0x13a0] sm:$0xff] %v1872
    %2897 = vst [vmem:[#allocation5 + $0x13a8] sm:$0xff] %v1873
    %2898 = vst [vmem:[#allocation5 + $0x13b0] sm:$0xff] %v1874
    %2899 = vst [vmem:[#allocation5 + $0x13b8] sm:$0xff] %v1875
    %2900 = vst [vmem:[#allocation5 + $0x13c0] sm:$0xff] %v1876
    %2901 = vst [vmem:[#allocation5 + $0x13c8] sm:$0xff] %v1877
    %2902 = vst [vmem:[#allocation5 + $0x13d0] sm:$0xff] %v1878
    %2903 = vst [vmem:[#allocation5 + $0x13d8] sm:$0xff] %v1879
    %2904 = vst [vmem:[#allocation5 + $0x13e0] sm:$0xff] %v1880
    %2905 = vst [vmem:[#allocation5 + $0x13e8] sm:$0xff] %v1881
    %2906 = vst [vmem:[#allocation5 + $0x13f0] sm:$0xff] %v1882
    %2907 = vst [vmem:[#allocation5 + $0x13f8] sm:$0xff] %v1883
    %2908 = vst [vmem:[#allocation5 + $0x1400] sm:$0xff] %v1884
    %2909 = vst [vmem:[#allocation5 + $0x1408] sm:$0xff] %v1885
    %2910 = vst [vmem:[#allocation5 + $0x1410] sm:$0xff] %v1886
    %2911 = vst [vmem:[#allocation5 + $0x1418] sm:$0xff] %v1887
    %2912 = vst [vmem:[#allocation5 + $0x1420] sm:$0xff] %v1888
    %2913 = vst [vmem:[#allocation5 + $0x1428] sm:$0xff] %v1889
    %2914 = vst [vmem:[#allocation5 + $0x1430] sm:$0xff] %v1890
    %2915 = vst [vmem:[#allocation5 + $0x1438] sm:$0xff] %v1891
    %2916 = vst [vmem:[#allocation5 + $0x1440] sm:$0xff] %v1892
    %2917 = vst [vmem:[#allocation5 + $0x1448] sm:$0xff] %v1893
    %2918 = vst [vmem:[#allocation5 + $0x1450] sm:$0xff] %v1894
    %2919 = vst [vmem:[#allocation5 + $0x1458] sm:$0xff] %v1895
    %2920 = vst [vmem:[#allocation5 + $0x1460] sm:$0xff] %v1896
    %2921 = vst [vmem:[#allocation5 + $0x1468] sm:$0xff] %v1897
    %2922 = vst [vmem:[#allocation5 + $0x1470] sm:$0xff] %v1898
    %2923 = vst [vmem:[#allocation5 + $0x1478] sm:$0xff] %v1899
    %2924 = vst [vmem:[#allocation5 + $0x1480] sm:$0xff] %v1900
    %2925 = vst [vmem:[#allocation5 + $0x1488] sm:$0xff] %v1901
    %2926 = vst [vmem:[#allocation5 + $0x1490] sm:$0xff] %v1902
    %2927 = vst [vmem:[#allocation5 + $0x1498] sm:$0xff] %v1903
    %2928 = vst [vmem:[#allocation5 + $0x14a0] sm:$0xff] %v1904
    %2929 = vst [vmem:[#allocation5 + $0x14a8] sm:$0xff] %v1905
    %2930 = vst [vmem:[#allocation5 + $0x14b0] sm:$0xff] %v1906
    %2931 = vst [vmem:[#allocation5 + $0x14b8] sm:$0xff] %v1907
    %2932 = vst [vmem:[#allocation5 + $0x14c0] sm:$0xff] %v1908
    %2933 = vst [vmem:[#allocation5 + $0x14c8] sm:$0xff] %v1909
    %2934 = vst [vmem:[#allocation5 + $0x14d0] sm:$0xff] %v1910
    %2935 = vst [vmem:[#allocation5 + $0x14d8] sm:$0xff] %v1911
    %2936 = vst [vmem:[#allocation5 + $0x14e0] sm:$0xff] %v1912
    %2937 = vst [vmem:[#allocation5 + $0x14e8] sm:$0xff] %v1913
    %2938 = vst [vmem:[#allocation5 + $0x14f0] sm:$0xff] %v1914
    %2939 = vst [vmem:[#allocation5 + $0x14f8] sm:$0xff] %v1915
    %2940 = vst [vmem:[#allocation5 + $0x1500] sm:$0xff] %v1916
    %2941 = vst [vmem:[#allocation5 + $0x1508] sm:$0xff] %v1917
    %2942 = vst [vmem:[#allocation5 + $0x1510] sm:$0xff] %v1918
    %2943 = vst [vmem:[#allocation5 + $0x1518] sm:$0xff] %v1919
    %2944 = vst [vmem:[#allocation5 + $0x1520] sm:$0xff] %v1920
    %2945 = vst [vmem:[#allocation5 + $0x1528] sm:$0xff] %v1921
    %2946 = vst [vmem:[#allocation5 + $0x1530] sm:$0xff] %v1922
    %2947 = vst [vmem:[#allocation5 + $0x1538] sm:$0xff] %v1923
    %2948 = vst [vmem:[#allocation5 + $0x1540] sm:$0xff] %v1924
    %2949 = vst [vmem:[#allocation5 + $0x1548] sm:$0xff] %v1925
    %2950 = vst [vmem:[#allocation5 + $0x1550] sm:$0xff] %v1926
    %2951 = vst [vmem:[#allocation5 + $0x1558] sm:$0xff] %v1927
    %2952 = vst [vmem:[#allocation5 + $0x1560] sm:$0xff] %v1928
    %2953 = vst [vmem:[#allocation5 + $0x1568] sm:$0xff] %v1929
    %2954 = vst [vmem:[#allocation5 + $0x1570] sm:$0xff] %v1930
    %2955 = vst [vmem:[#allocation5 + $0x1578] sm:$0xff] %v1931
    %2956 = vst [vmem:[#allocation5 + $0x1580] sm:$0xff] %v1932
    %2957 = vst [vmem:[#allocation5 + $0x1588] sm:$0xff] %v1933
    %2958 = vst [vmem:[#allocation5 + $0x1590] sm:$0xff] %v1934
    %2959 = vst [vmem:[#allocation5 + $0x1598] sm:$0xff] %v1935
    %2960 = vst [vmem:[#allocation5 + $0x15a0] sm:$0xff] %v1936
    %2961 = vst [vmem:[#allocation5 + $0x15a8] sm:$0xff] %v1937
    %2962 = vst [vmem:[#allocation5 + $0x15b0] sm:$0xff] %v1938
    %2963 = vst [vmem:[#allocation5 + $0x15b8] sm:$0xff] %v1939
    %2964 = vst [vmem:[#allocation5 + $0x15c0] sm:$0xff] %v1940
    %2965 = vst [vmem:[#allocation5 + $0x15c8] sm:$0xff] %v1941
    %2966 = vst [vmem:[#allocation5 + $0x15d0] sm:$0xff] %v1942
    %2967 = vst [vmem:[#allocation5 + $0x15d8] sm:$0xff] %v1943
    %2968 = vst [vmem:[#allocation5 + $0x15e0] sm:$0xff] %v1944
    %2969 = vst [vmem:[#allocation5 + $0x15e8] sm:$0xff] %v1945
    %2970 = vst [vmem:[#allocation5 + $0x15f0] sm:$0xff] %v1946
    %2971 = vst [vmem:[#allocation5 + $0x15f8] sm:$0xff] %v1947
    %2972 = vst [vmem:[#allocation5 + $0x1600] sm:$0xff] %v1948
    %2973 = vst [vmem:[#allocation5 + $0x1608] sm:$0xff] %v1949
    %2974 = vst [vmem:[#allocation5 + $0x1610] sm:$0xff] %v1950
    %2975 = vst [vmem:[#allocation5 + $0x1618] sm:$0xff] %v1951
    %2976 = vst [vmem:[#allocation5 + $0x1620] sm:$0xff] %v1952
    %2977 = vst [vmem:[#allocation5 + $0x1628] sm:$0xff] %v1953
    %2978 = vst [vmem:[#allocation5 + $0x1630] sm:$0xff] %v1954
    %2979 = vst [vmem:[#allocation5 + $0x1638] sm:$0xff] %v1955
    %2980 = vst [vmem:[#allocation5 + $0x1640] sm:$0xff] %v1956
    %2981 = vst [vmem:[#allocation5 + $0x1648] sm:$0xff] %v1957
    %2982 = vst [vmem:[#allocation5 + $0x1650] sm:$0xff] %v1958
    %2983 = vst [vmem:[#allocation5 + $0x1658] sm:$0xff] %v1959
    %2984 = vst [vmem:[#allocation5 + $0x1660] sm:$0xff] %v1960
    %2985 = vst [vmem:[#allocation5 + $0x1668] sm:$0xff] %v1961
    %2986 = vst [vmem:[#allocation5 + $0x1670] sm:$0xff] %v1962
    %2987 = vst [vmem:[#allocation5 + $0x1678] sm:$0xff] %v1963
    %2988 = vst [vmem:[#allocation5 + $0x1680] sm:$0xff] %v1964
    %2989 = vst [vmem:[#allocation5 + $0x1688] sm:$0xff] %v1965
    %2990 = vst [vmem:[#allocation5 + $0x1690] sm:$0xff] %v1966
    %2991 = vst [vmem:[#allocation5 + $0x1698] sm:$0xff] %v1967
    %2992 = vst [vmem:[#allocation5 + $0x16a0] sm:$0xff] %v1968
    %2993 = vst [vmem:[#allocation5 + $0x16a8] sm:$0xff] %v1969
    %2994 = vst [vmem:[#allocation5 + $0x16b0] sm:$0xff] %v1970
    %2995 = vst [vmem:[#allocation5 + $0x16b8] sm:$0xff] %v1971
    %2996 = vst [vmem:[#allocation5 + $0x16c0] sm:$0xff] %v1972
    %2997 = vst [vmem:[#allocation5 + $0x16c8] sm:$0xff] %v1973
    %2998 = vst [vmem:[#allocation5 + $0x16d0] sm:$0xff] %v1974
    %2999 = vst [vmem:[#allocation5 + $0x16d8] sm:$0xff] %v1975
    %3000 = vst [vmem:[#allocation5 + $0x16e0] sm:$0xff] %v1976
    %3001 = vst [vmem:[#allocation5 + $0x16e8] sm:$0xff] %v1977
    %3002 = vst [vmem:[#allocation5 + $0x16f0] sm:$0xff] %v1978
    %3003 = vst [vmem:[#allocation5 + $0x16f8] sm:$0xff] %v1979
    %3004 = vst [vmem:[#allocation5 + $0x1700] sm:$0xff] %v1980
    %3005 = vst [vmem:[#allocation5 + $0x1708] sm:$0xff] %v1981
    %3006 = vst [vmem:[#allocation5 + $0x1710] sm:$0xff] %v1982
    %3007 = vst [vmem:[#allocation5 + $0x1718] sm:$0xff] %v1983
    %3008 = vst [vmem:[#allocation5 + $0x1720] sm:$0xff] %v1984
    %3009 = vst [vmem:[#allocation5 + $0x1728] sm:$0xff] %v1985
    %3010 = vst [vmem:[#allocation5 + $0x1730] sm:$0xff] %v1986
    %3011 = vst [vmem:[#allocation5 + $0x1738] sm:$0xff] %v1987
    %3012 = vst [vmem:[#allocation5 + $0x1740] sm:$0xff] %v1988
    %3013 = vst [vmem:[#allocation5 + $0x1748] sm:$0xff] %v1989
    %3014 = vst [vmem:[#allocation5 + $0x1750] sm:$0xff] %v1990
    %3015 = vst [vmem:[#allocation5 + $0x1758] sm:$0xff] %v1991
    %3016 = vst [vmem:[#allocation5 + $0x1760] sm:$0xff] %v1992
    %3017 = vst [vmem:[#allocation5 + $0x1768] sm:$0xff] %v1993
    %3018 = vst [vmem:[#allocation5 + $0x1770] sm:$0xff] %v1994
    %3019 = vst [vmem:[#allocation5 + $0x1778] sm:$0xff] %v1995
    %3020 = vst [vmem:[#allocation5 + $0x1780] sm:$0xff] %v1996
    %3021 = vst [vmem:[#allocation5 + $0x1788] sm:$0xff] %v1997
    %3022 = vst [vmem:[#allocation5 + $0x1790] sm:$0xff] %v1998
    %3023 = vst [vmem:[#allocation5 + $0x1798] sm:$0xff] %v1999
    %3024 = vst [vmem:[#allocation5 + $0x17a0] sm:$0xff] %v2000
    %3025 = vst [vmem:[#allocation5 + $0x17a8] sm:$0xff] %v2001
    %3026 = vst [vmem:[#allocation5 + $0x17b0] sm:$0xff] %v2002
    %3027 = vst [vmem:[#allocation5 + $0x17b8] sm:$0xff] %v2003
    %3028 = vst [vmem:[#allocation5 + $0x17c0] sm:$0xff] %v2004
    %3029 = vst [vmem:[#allocation5 + $0x17c8] sm:$0xff] %v2005
    %3030 = vst [vmem:[#allocation5 + $0x17d0] sm:$0xff] %v2006
    %3031 = vst [vmem:[#allocation5 + $0x17d8] sm:$0xff] %v2007
    %3032 = vst [vmem:[#allocation5 + $0x17e0] sm:$0xff] %v2008
    %3033 = vst [vmem:[#allocation5 + $0x17e8] sm:$0xff] %v2009
    %3034 = vst [vmem:[#allocation5 + $0x17f0] sm:$0xff] %v2010
    %3035 = vst [vmem:[#allocation5 + $0x17f8] sm:$0xff] %v2011
    %3036 = vst [vmem:[#allocation5 + $0x1800] sm:$0xff] %v2012
    %3037 = vst [vmem:[#allocation5 + $0x1808] sm:$0xff] %v2013
    %3038 = vst [vmem:[#allocation5 + $0x1810] sm:$0xff] %v2014
    %3039 = vst [vmem:[#allocation5 + $0x1818] sm:$0xff] %v2015
    %3040 = vst [vmem:[#allocation5 + $0x1820] sm:$0xff] %v2016
    %3041 = vst [vmem:[#allocation5 + $0x1828] sm:$0xff] %v2017
    %3042 = vst [vmem:[#allocation5 + $0x1830] sm:$0xff] %v2018
    %3043 = vst [vmem:[#allocation5 + $0x1838] sm:$0xff] %v2019
    %3044 = vst [vmem:[#allocation5 + $0x1840] sm:$0xff] %v2020
    %3045 = vst [vmem:[#allocation5 + $0x1848] sm:$0xff] %v2021
    %3046 = vst [vmem:[#allocation5 + $0x1850] sm:$0xff] %v2022
    %3047 = vst [vmem:[#allocation5 + $0x1858] sm:$0xff] %v2023
    %3048 = vst [vmem:[#allocation5 + $0x1860] sm:$0xff] %v2024
    %3049 = vst [vmem:[#allocation5 + $0x1868] sm:$0xff] %v2025
    %3050 = vst [vmem:[#allocation5 + $0x1870] sm:$0xff] %v2026
    %3051 = vst [vmem:[#allocation5 + $0x1878] sm:$0xff] %v2027
    %3052 = vst [vmem:[#allocation5 + $0x1880] sm:$0xff] %v2028
    %3053 = vst [vmem:[#allocation5 + $0x1888] sm:$0xff] %v2029
    %3054 = vst [vmem:[#allocation5 + $0x1890] sm:$0xff] %v2030
    %3055 = vst [vmem:[#allocation5 + $0x1898] sm:$0xff] %v2031
    %3056 = vst [vmem:[#allocation5 + $0x18a0] sm:$0xff] %v2032
    %3057 = vst [vmem:[#allocation5 + $0x18a8] sm:$0xff] %v2033
    %3058 = vst [vmem:[#allocation5 + $0x18b0] sm:$0xff] %v2034
    %3059 = vst [vmem:[#allocation5 + $0x18b8] sm:$0xff] %v2035
    %3060 = vst [vmem:[#allocation5 + $0x18c0] sm:$0xff] %v2036
    %3061 = vst [vmem:[#allocation5 + $0x18c8] sm:$0xff] %v2037
    %3062 = vst [vmem:[#allocation5 + $0x18d0] sm:$0xff] %v2038
    %3063 = vst [vmem:[#allocation5 + $0x18d8] sm:$0xff] %v2039
    %3064 = vst [vmem:[#allocation5 + $0x18e0] sm:$0xff] %v2040
    %3065 = vst [vmem:[#allocation5 + $0x18e8] sm:$0xff] %v2041
    %3066 = vst [vmem:[#allocation5 + $0x18f0] sm:$0xff] %v2042
    %3067 = vst [vmem:[#allocation5 + $0x18f8] sm:$0xff] %v2043
    %3068 = vst [vmem:[#allocation5 + $0x1900] sm:$0xff] %v2044
    %3069 = vst [vmem:[#allocation5 + $0x1908] sm:$0xff] %v2045
    %3070 = vst [vmem:[#allocation5 + $0x1910] sm:$0xff] %v2046
    %3071 = vst [vmem:[#allocation5 + $0x1918] sm:$0xff] %v2047
    %3072 = vst [vmem:[#allocation5 + $0x1920] sm:$0xff] %v2048
    %3073 = vst [vmem:[#allocation5 + $0x1928] sm:$0xff] %v2049
    %3074 = vst [vmem:[#allocation5 + $0x1930] sm:$0xff] %v2050
    %3075 = vst [vmem:[#allocation5 + $0x1938] sm:$0xff] %v2051
    %3076 = vst [vmem:[#allocation5 + $0x1940] sm:$0xff] %v2052
    %3077 = vst [vmem:[#allocation5 + $0x1948] sm:$0xff] %v2053
    %3078 = vst [vmem:[#allocation5 + $0x1950] sm:$0xff] %v2054
    %3079 = vst [vmem:[#allocation5 + $0x1958] sm:$0xff] %v2055
    %3080 = vst [vmem:[#allocation5 + $0x1960] sm:$0xff] %v2056
    %3081 = vst [vmem:[#allocation5 + $0x1968] sm:$0xff] %v2057
    %3082 = vst [vmem:[#allocation5 + $0x1970] sm:$0xff] %v2058
    %3083 = vst [vmem:[#allocation5 + $0x1978] sm:$0xff] %v2059
    %3084 = vst [vmem:[#allocation5 + $0x1980] sm:$0xff] %v2060
    %3085 = vst [vmem:[#allocation5 + $0x1988] sm:$0xff] %v2061
    %3086 = vst [vmem:[#allocation5 + $0x1990] sm:$0xff] %v2062
    %3087 = vst [vmem:[#allocation5 + $0x1998] sm:$0xff] %v2063
    %3088 = vst [vmem:[#allocation5 + $0x19a0] sm:$0xff] %v2064
    %3089 = vst [vmem:[#allocation5 + $0x19a8] sm:$0xff] %v2065
    %3090 = vst [vmem:[#allocation5 + $0x19b0] sm:$0xff] %v2066
    %3091 = vst [vmem:[#allocation5 + $0x19b8] sm:$0xff] %v2067
    %3092 = vst [vmem:[#allocation5 + $0x19c0] sm:$0xff] %v2068
    %3093 = vst [vmem:[#allocation5 + $0x19c8] sm:$0xff] %v2069
    %3094 = vst [vmem:[#allocation5 + $0x19d0] sm:$0xff] %v2070
    %3095 = vst [vmem:[#allocation5 + $0x19d8] sm:$0xff] %v2071
    %3096 = vst [vmem:[#allocation5 + $0x19e0] sm:$0xff] %v2072
    %3097 = vst [vmem:[#allocation5 + $0x19e8] sm:$0xff] %v2073
    %3098 = vst [vmem:[#allocation5 + $0x19f0] sm:$0xff] %v2074
    %3099 = vst [vmem:[#allocation5 + $0x19f8] sm:$0xff] %v2075
    %3100 = vst [vmem:[#allocation5 + $0x1a00] sm:$0xff] %v2076
    %3101 = vst [vmem:[#allocation5 + $0x1a08] sm:$0xff] %v2077
    %3102 = vst [vmem:[#allocation5 + $0x1a10] sm:$0xff] %v2078
    %3103 = vst [vmem:[#allocation5 + $0x1a18] sm:$0xff] %v2079
    %3104 = vst [vmem:[#allocation5 + $0x1a20] sm:$0xff] %v2080
    %3105 = vst [vmem:[#allocation5 + $0x1a28] sm:$0xff] %v2081
    %3106 = vst [vmem:[#allocation5 + $0x1a30] sm:$0xff] %v2082
    %3107 = vst [vmem:[#allocation5 + $0x1a38] sm:$0xff] %v2083
    %3108 = vst [vmem:[#allocation5 + $0x1a40] sm:$0xff] %v2084
    %3109 = vst [vmem:[#allocation5 + $0x1a48] sm:$0xff] %v2085
    %3110 = vst [vmem:[#allocation5 + $0x1a50] sm:$0xff] %v2086
    %3111 = vst [vmem:[#allocation5 + $0x1a58] sm:$0xff] %v2087
    %3112 = vst [vmem:[#allocation5 + $0x1a60] sm:$0xff] %v2088
    %3113 = vst [vmem:[#allocation5 + $0x1a68] sm:$0xff] %v2089
    %3114 = vst [vmem:[#allocation5 + $0x1a70] sm:$0xff] %v2090
    %3115 = vst [vmem:[#allocation5 + $0x1a78] sm:$0xff] %v2091
    %3116 = vst [vmem:[#allocation5 + $0x1a80] sm:$0xff] %v2092
    %3117 = vst [vmem:[#allocation5 + $0x1a88] sm:$0xff] %v2093
    %3118 = vst [vmem:[#allocation5 + $0x1a90] sm:$0xff] %v2094
    %3119 = vst [vmem:[#allocation5 + $0x1a98] sm:$0xff] %v2095
    %3120 = vst [vmem:[#allocation5 + $0x1aa0] sm:$0xff] %v2096
    %3121 = vst [vmem:[#allocation5 + $0x1aa8] sm:$0xff] %v2097
    %3122 = vst [vmem:[#allocation5 + $0x1ab0] sm:$0xff] %v2098
    %3123 = vst [vmem:[#allocation5 + $0x1ab8] sm:$0xff] %v2099
    %3124 = vst [vmem:[#allocation5 + $0x1ac0] sm:$0xff] %v2100
    %3125 = vst [vmem:[#allocation5 + $0x1ac8] sm:$0xff] %v2101
    %3126 = vst [vmem:[#allocation5 + $0x1ad0] sm:$0xff] %v2102
    %3127 = vst [vmem:[#allocation5 + $0x1ad8] sm:$0xff] %v2103
    %3128 = vst [vmem:[#allocation5 + $0x1ae0] sm:$0xff] %v2104
    %3129 = vst [vmem:[#allocation5 + $0x1ae8] sm:$0xff] %v2105
    %3130 = vst [vmem:[#allocation5 + $0x1af0] sm:$0xff] %v2106
    %3131 = vst [vmem:[#allocation5 + $0x1af8] sm:$0xff] %v2107
    %3132 = vst [vmem:[#allocation5 + $0x1b00] sm:$0xff] %v2108
    %3133 = vst [vmem:[#allocation5 + $0x1b08] sm:$0xff] %v2109
    %3134 = vst [vmem:[#allocation5 + $0x1b10] sm:$0xff] %v2110
    %3135 = vst [vmem:[#allocation5 + $0x1b18] sm:$0xff] %v2111
    %3136 = vst [vmem:[#allocation5 + $0x1b20] sm:$0xff] %v2112
    %3137 = vst [vmem:[#allocation5 + $0x1b28] sm:$0xff] %v2113
    %3138 = vst [vmem:[#allocation5 + $0x1b30] sm:$0xff] %v2114
    %3139 = vst [vmem:[#allocation5 + $0x1b38] sm:$0xff] %v2115
    %3140 = vst [vmem:[#allocation5 + $0x1b40] sm:$0xff] %v2116
    %3141 = vst [vmem:[#allocation5 + $0x1b48] sm:$0xff] %v2117
    %3142 = vst [vmem:[#allocation5 + $0x1b50] sm:$0xff] %v2118
    %3143 = vst [vmem:[#allocation5 + $0x1b58] sm:$0xff] %v2119
    %3144 = vst [vmem:[#allocation5 + $0x1b60] sm:$0xff] %v2120
    %3145 = vst [vmem:[#allocation5 + $0x1b68] sm:$0xff] %v2121
    %3146 = vst [vmem:[#allocation5 + $0x1b70] sm:$0xff] %v2122
    %3147 = vst [vmem:[#allocation5 + $0x1b78] sm:$0xff] %v2123
    %3148 = vst [vmem:[#allocation5 + $0x1b80] sm:$0xff] %v2124
    %3149 = vst [vmem:[#allocation5 + $0x1b88] sm:$0xff] %v2125
    %3150 = vst [vmem:[#allocation5 + $0x1b90] sm:$0xff] %v2126
    %3151 = vst [vmem:[#allocation5 + $0x1b98] sm:$0xff] %v2127
    %3152 = vst [vmem:[#allocation5 + $0x1ba0] sm:$0xff] %v2128
    %3153 = vst [vmem:[#allocation5 + $0x1ba8] sm:$0xff] %v2129
    %3154 = vst [vmem:[#allocation5 + $0x1bb0] sm:$0xff] %v2130
    %3155 = vst [vmem:[#allocation5 + $0x1bb8] sm:$0xff] %v2131
    %3156 = vst [vmem:[#allocation5 + $0x1bc0] sm:$0xff] %v2132
    %3157 = vst [vmem:[#allocation5 + $0x1bc8] sm:$0xff] %v2133
    %3158 = vst [vmem:[#allocation5 + $0x1bd0] sm:$0xff] %v2134
    %3159 = vst [vmem:[#allocation5 + $0x1bd8] sm:$0xff] %v2135
    %3160 = vst [vmem:[#allocation5 + $0x1be0] sm:$0xff] %v2136
    %3161 = vst [vmem:[#allocation5 + $0x1be8] sm:$0xff] %v2137
    %3162 = vst [vmem:[#allocation5 + $0x1bf0] sm:$0xff] %v2138
    %3163 = vst [vmem:[#allocation5 + $0x1bf8] sm:$0xff] %v2139
    %3164 = vst [vmem:[#allocation5 + $0x1c00] sm:$0xff] %v2140
    %3165 = vst [vmem:[#allocation5 + $0x1c08] sm:$0xff] %v2141
    %3166 = vst [vmem:[#allocation5 + $0x1c10] sm:$0xff] %v2142
    %3167 = vst [vmem:[#allocation5 + $0x1c18] sm:$0xff] %v2143
    %3168 = vst [vmem:[#allocation5 + $0x1c20] sm:$0xff] %v2144
    %3169 = vst [vmem:[#allocation5 + $0x1c28] sm:$0xff] %v2145
    %3170 = vst [vmem:[#allocation5 + $0x1c30] sm:$0xff] %v2146
    %3171 = vst [vmem:[#allocation5 + $0x1c38] sm:$0xff] %v2147
    %3172 = vst [vmem:[#allocation5 + $0x1c40] sm:$0xff] %v2148
    %3173 = vst [vmem:[#allocation5 + $0x1c48] sm:$0xff] %v2149
    %3174 = vst [vmem:[#allocation5 + $0x1c50] sm:$0xff] %v2150
    %3175 = vst [vmem:[#allocation5 + $0x1c58] sm:$0xff] %v2151
    %3176 = vst [vmem:[#allocation5 + $0x1c60] sm:$0xff] %v2152
    %3177 = vst [vmem:[#allocation5 + $0x1c68] sm:$0xff] %v2153
    %3178 = vst [vmem:[#allocation5 + $0x1c70] sm:$0xff] %v2154
    %3179 = vst [vmem:[#allocation5 + $0x1c78] sm:$0xff] %v2155
    %3180 = vst [vmem:[#allocation5 + $0x1c80] sm:$0xff] %v2156
    %3181 = vst [vmem:[#allocation5 + $0x1c88] sm:$0xff] %v2157
    %3182 = vst [vmem:[#allocation5 + $0x1c90] sm:$0xff] %v2158
    %3183 = vst [vmem:[#allocation5 + $0x1c98] sm:$0xff] %v2159
    %3184 = vst [vmem:[#allocation5 + $0x1ca0] sm:$0xff] %v2160
    %3185 = vst [vmem:[#allocation5 + $0x1ca8] sm:$0xff] %v2161
    %3186 = vst [vmem:[#allocation5 + $0x1cb0] sm:$0xff] %v2162
    %3187 = vst [vmem:[#allocation5 + $0x1cb8] sm:$0xff] %v2163
    %3188 = vst [vmem:[#allocation5 + $0x1cc0] sm:$0xff] %v2164
    %3189 = vst [vmem:[#allocation5 + $0x1cc8] sm:$0xff] %v2165
    %3190 = vst [vmem:[#allocation5 + $0x1cd0] sm:$0xff] %v2166
    %3191 = vst [vmem:[#allocation5 + $0x1cd8] sm:$0xff] %v2167
    %3192 = vst [vmem:[#allocation5 + $0x1ce0] sm:$0xff] %v2168
    %3193 = vst [vmem:[#allocation5 + $0x1ce8] sm:$0xff] %v2169
    %3194 = vst [vmem:[#allocation5 + $0x1cf0] sm:$0xff] %v2170
    %3195 = vst [vmem:[#allocation5 + $0x1cf8] sm:$0xff] %v2171
    %3196 = vst [vmem:[#allocation5 + $0x1d00] sm:$0xff] %v2172
    %3197 = vst [vmem:[#allocation5 + $0x1d08] sm:$0xff] %v2173
    %3198 = vst [vmem:[#allocation5 + $0x1d10] sm:$0xff] %v2174
    %3199 = vst [vmem:[#allocation5 + $0x1d18] sm:$0xff] %v2175
    %3200 = vst [vmem:[#allocation5 + $0x1d20] sm:$0xff] %v2176
    %3201 = vst [vmem:[#allocation5 + $0x1d28] sm:$0xff] %v2177
    %3202 = vst [vmem:[#allocation5 + $0x1d30] sm:$0xff] %v2178
    %3203 = vst [vmem:[#allocation5 + $0x1d38] sm:$0xff] %v2179
    %3204 = vst [vmem:[#allocation5 + $0x1d40] sm:$0xff] %v2180
    %3205 = vst [vmem:[#allocation5 + $0x1d48] sm:$0xff] %v2181
    %3206 = vst [vmem:[#allocation5 + $0x1d50] sm:$0xff] %v2182
    %3207 = vst [vmem:[#allocation5 + $0x1d58] sm:$0xff] %v2183
    %3208 = vst [vmem:[#allocation5 + $0x1d60] sm:$0xff] %v2184
    %3209 = vst [vmem:[#allocation5 + $0x1d68] sm:$0xff] %v2185
    %3210 = vst [vmem:[#allocation5 + $0x1d70] sm:$0xff] %v2186
    %3211 = vst [vmem:[#allocation5 + $0x1d78] sm:$0xff] %v2187
    %3212 = vst [vmem:[#allocation5 + $0x1d80] sm:$0xff] %v2188
    %3213 = vst [vmem:[#allocation5 + $0x1d88] sm:$0xff] %v2189
    %3214 = vst [vmem:[#allocation5 + $0x1d90] sm:$0xff] %v2190
    %3215 = vst [vmem:[#allocation5 + $0x1d98] sm:$0xff] %v2191
    %3216 = vst [vmem:[#allocation5 + $0x1da0] sm:$0xff] %v2192
    %3217 = vst [vmem:[#allocation5 + $0x1da8] sm:$0xff] %v2193
    %3218 = vst [vmem:[#allocation5 + $0x1db0] sm:$0xff] %v2194
    %3219 = vst [vmem:[#allocation5 + $0x1db8] sm:$0xff] %v2195
    %3220 = vst [vmem:[#allocation5 + $0x1dc0] sm:$0xff] %v2196
    %3221 = vst [vmem:[#allocation5 + $0x1dc8] sm:$0xff] %v2197
    %3222 = vst [vmem:[#allocation5 + $0x1dd0] sm:$0xff] %v2198
    %3223 = vst [vmem:[#allocation5 + $0x1dd8] sm:$0xff] %v2199
    %3224 = vst [vmem:[#allocation5 + $0x1de0] sm:$0xff] %v2200
    %3225 = vst [vmem:[#allocation5 + $0x1de8] sm:$0xff] %v2201
    %3226 = vst [vmem:[#allocation5 + $0x1df0] sm:$0xff] %v2202
    %3227 = vst [vmem:[#allocation5 + $0x1df8] sm:$0xff] %v2203
    %3228 = vst [vmem:[#allocation5 + $0x1e00] sm:$0xff] %v2204
    %3229 = vst [vmem:[#allocation5 + $0x1e08] sm:$0xff] %v2205
    %3230 = vst [vmem:[#allocation5 + $0x1e10] sm:$0xff] %v2206
    %3231 = vst [vmem:[#allocation5 + $0x1e18] sm:$0xff] %v2207
    %3232 = vst [vmem:[#allocation5 + $0x1e20] sm:$0xff] %v2208
    %3233 = vst [vmem:[#allocation5 + $0x1e28] sm:$0xff] %v2209
    %3234 = vst [vmem:[#allocation5 + $0x1e30] sm:$0xff] %v2210
    %3235 = vst [vmem:[#allocation5 + $0x1e38] sm:$0xff] %v2211
    %3236 = vst [vmem:[#allocation5 + $0x1e40] sm:$0xff] %v2212
    %3237 = vst [vmem:[#allocation5 + $0x1e48] sm:$0xff] %v2213
    %3238 = vst [vmem:[#allocation5 + $0x1e50] sm:$0xff] %v2214
    %3239 = vst [vmem:[#allocation5 + $0x1e58] sm:$0xff] %v2215
    %3240 = vst [vmem:[#allocation5 + $0x1e60] sm:$0xff] %v2216
    %3241 = vst [vmem:[#allocation5 + $0x1e68] sm:$0xff] %v2217
    %3242 = vst [vmem:[#allocation5 + $0x1e70] sm:$0xff] %v2218
    %3243 = vst [vmem:[#allocation5 + $0x1e78] sm:$0xff] %v2219
    %3244 = vst [vmem:[#allocation5 + $0x1e80] sm:$0xff] %v2220
    %3245 = vst [vmem:[#allocation5 + $0x1e88] sm:$0xff] %v2221
    %3246 = vst [vmem:[#allocation5 + $0x1e90] sm:$0xff] %v2222
    %3247 = vst [vmem:[#allocation5 + $0x1e98] sm:$0xff] %v2223
    %3248 = vst [vmem:[#allocation5 + $0x1ea0] sm:$0xff] %v2224
    %3249 = vst [vmem:[#allocation5 + $0x1ea8] sm:$0xff] %v2225
    %3250 = vst [vmem:[#allocation5 + $0x1eb0] sm:$0xff] %v2226
    %3251 = vst [vmem:[#allocation5 + $0x1eb8] sm:$0xff] %v2227
    %3252 = vst [vmem:[#allocation5 + $0x1ec0] sm:$0xff] %v2228
    %3253 = vst [vmem:[#allocation5 + $0x1ec8] sm:$0xff] %v2229
    %3254 = vst [vmem:[#allocation5 + $0x1ed0] sm:$0xff] %v2230
    %3255 = vst [vmem:[#allocation5 + $0x1ed8] sm:$0xff] %v2231
    %3256 = vst [vmem:[#allocation5 + $0x1ee0] sm:$0xff] %v2232
    %3257 = vst [vmem:[#allocation5 + $0x1ee8] sm:$0xff] %v2233
    %3258 = vst [vmem:[#allocation5 + $0x1ef0] sm:$0xff] %v2234
    %3259 = vst [vmem:[#allocation5 + $0x1ef8] sm:$0xff] %v2235
    %3260 = vst [vmem:[#allocation5 + $0x1f00] sm:$0xff] %v2236
    %3261 = vst [vmem:[#allocation5 + $0x1f08] sm:$0xff] %v2237
    %3262 = vst [vmem:[#allocation5 + $0x1f10] sm:$0xff] %v2238
    %3263 = vst [vmem:[#allocation5 + $0x1f18] sm:$0xff] %v2239
    %3264 = vst [vmem:[#allocation5 + $0x1f20] sm:$0xff] %v2240
    %3265 = vst [vmem:[#allocation5 + $0x1f28] sm:$0xff] %v2241
    %3266 = vst [vmem:[#allocation5 + $0x1f30] sm:$0xff] %v2242
    %3267 = vst [vmem:[#allocation5 + $0x1f38] sm:$0xff] %v2243
    %3268 = vst [vmem:[#allocation5 + $0x1f40] sm:$0xff] %v2244
    %3269 = vst [vmem:[#allocation5 + $0x1f48] sm:$0xff] %v2245
    %3270 = vst [vmem:[#allocation5 + $0x1f50] sm:$0xff] %v2246
    %3271 = vst [vmem:[#allocation5 + $0x1f58] sm:$0xff] %v2247
    %3272 = vst [vmem:[#allocation5 + $0x1f60] sm:$0xff] %v2248
    %3273 = vst [vmem:[#allocation5 + $0x1f68] sm:$0xff] %v2249
    %3274 = vst [vmem:[#allocation5 + $0x1f70] sm:$0xff] %v2250
    %3275 = vst [vmem:[#allocation5 + $0x1f78] sm:$0xff] %v2251
    %3276 = vst [vmem:[#allocation5 + $0x1f80] sm:$0xff] %v2252
    %3277 = vst [vmem:[#allocation5 + $0x1f88] sm:$0xff] %v2253
    %3278 = vst [vmem:[#allocation5 + $0x1f90] sm:$0xff] %v2254
    %3279 = vst [vmem:[#allocation5 + $0x1f98] sm:$0xff] %v2255
    %3280 = vst [vmem:[#allocation5 + $0x1fa0] sm:$0xff] %v2256
    %3281 = vst [vmem:[#allocation5 + $0x1fa8] sm:$0xff] %v2257
    %3282 = vst [vmem:[#allocation5 + $0x1fb0] sm:$0xff] %v2258
    %3283 = vst [vmem:[#allocation5 + $0x1fb8] sm:$0xff] %v2259
    %3284 = vst [vmem:[#allocation5 + $0x1fc0] sm:$0xff] %v2260
    %3285 = vst [vmem:[#allocation5 + $0x1fc8] sm:$0xff] %v2261
    %3286 = vst [vmem:[#allocation5 + $0x1fd0] sm:$0xff] %v2262
    %3287 = vst [vmem:[#allocation5 + $0x1fd8] sm:$0xff] %v2263
    %3288 = vst [vmem:[#allocation5 + $0x1fe0] sm:$0xff] %v2264
    %3289 = vst [vmem:[#allocation5 + $0x1fe8] sm:$0xff] %v2265
    %3290 = vst [vmem:[#allocation5 + $0x1ff0] sm:$0xff] %v2266
    %3291 = vst [vmem:[#allocation5 + $0x1ff8] sm:$0xff] %v2267
    // Predicated region
    $region14: #{tpu_custom_call.1} parent=1 // pred_check
      _
    $region15: #{tpu_custom_call.1} parent=1 // pred_check_branch
      %3293 = sbr.rel (0) target = $region17
    $region16: #{tpu_custom_call.1} parent=1 // pred_region
      %3295 = vsyncadd [#allocation4], 0
      %s3296 = sshll.u32 [#allocation5], 4
      %s3297 = int_to_ptr.vmem [resolvable:$true] %s3296
      %s3298 = sshll.u32 %s2, 4
      %s3299 = int_to_ptr.hbm [resolvable:$true] %s3298
      %3304 = dma.vmem_to_hbm [thread:$0]  %s3297, 131072, %s3299, [#allocation4], 4096, 4096, 256
    $region17: #{tpu_custom_call.1} parent=1 // pred_fallthru
      _
    // Predicated region
    $region18: #{tpu_custom_call.1} parent=1 // pred_check
      _
    $region19: #{tpu_custom_call.1} parent=1 // pred_check_branch
      %3306 = sbr.rel (0) target = $region21
    $region20: #{tpu_custom_call.1} parent=1 // pred_region
      %3308 = dma.done [#allocation4], 131072
    $region21: #{tpu_custom_call.1} parent=1 // pred_fallthru
      _
    %3309 = vsyncpa [#allocation3], 1
    %3310 = vsyncpa [#allocation4], 1

</llo_original>
